<compile_context>
chip_gen: v7x
topology: tpu7x:2x2x1
jax: 0.10.0
libtpu: 0.0.40
codegen_flags: <defaults>
</compile_context>

<pallas_src>
import jax
import jax.numpy as jnp
from jax.experimental import pallas as pl
from jax.experimental.pallas import tpu as pltpu


# ----------------------------------------------------------------------------
# Fused Pallas kernel: n_layers LSTM (wavefront) -> fc1 -> ReLU -> fc2
# ----------------------------------------------------------------------------
def _make_fused_kernel(n_layers, T, Bp, H):
    """Build the fused kernel for static (n_layers, T, Bp, H)."""

    def kernel(*refs):
        idx = 0
        x_ref = refs[idx]; idx += 1                           # (T*Bp, D0) flattened seq
        wih0_ref, whh0_ref, b0_ref = refs[idx:idx + 3]; idx += 3
        wcat_refs, bl_refs = [], []
        for _ in range(1, n_layers):
            wcat_refs.append(refs[idx]); bl_refs.append(refs[idx + 1]); idx += 2
        w1_ref, b1_ref, w2_ref, b2_ref = refs[idx:idx + 4]; idx += 4
        o_ref = refs[idx]                                     # (Bp, C) logits

        # Hoisted layer-0 input projection (combined bias folded in).  The i/f/o
        # gate columns of every weight/bias were pre-scaled by 0.5 in the
        # wrapper, so one tanh over the full 4H slab recovers all gates.
        gates0 = (
            jnp.dot(x_ref[...], wih0_ref[...], preferred_element_type=jnp.float32)
            + b0_ref[...]
        )                                                     # (T*Bp, 4H) in vregs

        whh0 = whh0_ref[...]                                  # (H, 4H)
        wcat = [r[...] for r in wcat_refs]                    # (2H, 4H) each
        bls = [r[...] for r in bl_refs]                       # (1, 4H) each

        zeros = jnp.zeros((Bp, H), jnp.float32)
        h = [zeros] * n_layers
        c = [zeros] * n_layers

        def lstm_cell(pre, c_prev):
            tg = jnp.tanh(pre)                                # one EUP pass over 4H lanes
            i_g = 0.5 * tg[:, 0 * H:1 * H] + 0.5              # sigmoid via tanh identity
            f_g = 0.5 * tg[:, 1 * H:2 * H] + 0.5
            g_g = tg[:, 2 * H:3 * H]
            o_g = 0.5 * tg[:, 3 * H:4 * H] + 0.5
            c_new = f_g * c_prev + i_g * g_g
            h_new = o_g * jnp.tanh(c_new)
            return h_new, c_new

        # Wavefront over (layer, time): wave w runs layer l's step t = w - l.
        # Every active layer reads ONLY previous-wave state (h_{l-1,t} and
        # h_{l,t-1} were both produced at wave w-1), so the per-wave chains are
        # mutually independent and can be interleaved by the scheduler.
        for w in range(T + n_layers - 1):
            new_h = list(h)
            new_c = list(c)
            for l in range(n_layers):
                t = w - l
                if not (0 <= t < T):
                    continue
                if l == 0:
                    pre = gates0[t * Bp:(t + 1) * Bp, :] + jnp.dot(
                        h[0], whh0, preferred_element_type=jnp.float32)
                else:
                    xin = jnp.concatenate([h[l - 1], h[l]], axis=-1)   # (Bp, 2H)
                    pre = jnp.dot(xin, wcat[l - 1],
                                  preferred_element_type=jnp.float32) + bls[l - 1]
                new_h[l], new_c[l] = lstm_cell(pre, c[l])
            h = new_h
            c = new_c

        # Head on the final-timestep hidden state of the top layer only.
        z = jnp.dot(h[n_layers - 1], w1_ref[...],
                    preferred_element_type=jnp.float32) + b1_ref[...]
        z = jnp.maximum(z, 0.0)
        # TODO(synk): dropout is identity here (module evaluated with training=False).
        o_ref[...] = (
            jnp.dot(z, w2_ref[...], preferred_element_type=jnp.float32) + b2_ref[...]
        )

    return kernel


# ----------------------------------------------------------------------------
# Wrapper
# ----------------------------------------------------------------------------
_VMEM = pl.BlockSpec(memory_space=pltpu.MemorySpace.VMEM)


@jax.jit
def lstm_model_forward(x_btd, params):
    """x_btd: (B, T, D) batch_first like the PyTorch module; returns (B, C) logits."""
    B, T, D = x_btd.shape
    lstm = params["lstm"]
    n_layers = len(lstm)
    H = lstm[0][1].shape[0]
    F = params["w1_t"].shape[1]
    C = params["w2_t"].shape[1]

    # Pad batch to a full f32 sublane multiple so matmuls/stores are unmasked.
    Bp = max(8, -(-B // 8) * 8)
    x = jnp.transpose(x_btd, (1, 0, 2)).astype(jnp.float32)     # (T, B, D) time-major
    x = jnp.pad(x, ((0, 0), (0, Bp - B), (0, 0)))               # (T, Bp, D)
    x = x.reshape(T * Bp, D)                                    # flat rows, lane dim last

    # sigmoid -> tanh folding: sigmoid(z) = 0.5*tanh(z/2) + 0.5, so pre-scale the
    # i/f/o gate columns of W_ih, W_hh and b by 0.5 (exact power-of-2 scale);
    # the g columns are left untouched (they need tanh(z) anyway).
    col_scale = jnp.concatenate([
        jnp.full((H,), 0.5, jnp.float32),
        jnp.full((H,), 0.5, jnp.float32),
        jnp.ones((H,), jnp.float32),
        jnp.full((H,), 0.5, jnp.float32)])

    flat_w = []
    for layer, (wih_t, whh_t, b) in enumerate(lstm):
        wih_s = wih_t.astype(jnp.float32) * col_scale[None, :]
        whh_s = whh_t.astype(jnp.float32) * col_scale[None, :]
        b_s = b.astype(jnp.float32) * col_scale[None, :]
        if layer == 0:
            flat_w += [wih_s, whh_s, b_s]
        else:
            # Fused [W_ih; W_hh] so the in-recurrence projection is ONE matmul.
            flat_w += [jnp.concatenate([wih_s, whh_s], axis=0), b_s]
    flat_w += [params["w1_t"], params["b1"], params["w2_t"], params["b2"]]

    # Advisory cost estimate for XLA scheduling around the custom call.
    flops = 2 * T * Bp * D * 4 * H                            # layer-0 hoisted input proj
    flops += T * 2 * Bp * H * 4 * H                           # layer-0 recurrent matmuls
    flops += (n_layers - 1) * T * 2 * Bp * (2 * H) * 4 * H    # fused deeper-layer matmuls
    flops += 2 * Bp * H * F + 2 * Bp * F * C                  # fc head
    transcendentals = n_layers * T * Bp * 5 * H               # tanh(4H) + tanh(H) per step
    bytes_accessed = 4 * (x.size + sum(int(w.size) for w in flat_w) + Bp * C)

    # Clamp the scoped-VMEM request to the chip's real capacity (v7x: 64 MiB/TC).
    try:
        info = pltpu.get_tpu_info()
        vmem_cap = int(getattr(info, "vmem_capacity_bytes", 64 * 1024 * 1024))
    except Exception:
        vmem_cap = 64 * 1024 * 1024
    vmem_limit = int(min(vmem_cap, max(4 * 1024 * 1024, 4 * bytes_accessed)))

    kernel = _make_fused_kernel(n_layers, T, Bp, H)
    out = pl.pallas_call(
        kernel,
        out_shape=jax.ShapeDtypeStruct((Bp, C), jnp.float32),
        in_specs=[_VMEM] * (1 + len(flat_w)),
        out_specs=_VMEM,
        compiler_params=pltpu.CompilerParams(vmem_limit_bytes=vmem_limit),
        cost_estimate=pl.CostEstimate(
            flops=int(flops),
            transcendentals=int(transcendentals),
            bytes_accessed=int(bytes_accessed),
        ),
    )(x, *flat_w)
    return out[:B]


# ----------------------------------------------------------------------------
# Deterministic parameter construction (PyTorch-style uniform init)
# ----------------------------------------------------------------------------
def make_params(key, input_size, hidden, n_layers, fc_dim, num_classes):
    k_lstm = 1.0 / jnp.sqrt(hidden)
    params = {"lstm": []}
    for layer in range(n_layers):
        d_in = input_size if layer == 0 else hidden
        key, k1, k2, k3, k4 = jax.random.split(key, 5)
        w_ih = jax.random.uniform(k1, (4 * hidden, d_in), jnp.float32, -k_lstm, k_lstm)
        w_hh = jax.random.uniform(k2, (4 * hidden, hidden), jnp.float32, -k_lstm, k_lstm)
        b_ih = jax.random.uniform(k3, (4 * hidden,), jnp.float32, -k_lstm, k_lstm)
        b_hh = jax.random.uniform(k4, (4 * hidden,), jnp.float32, -k_lstm, k_lstm)
        params["lstm"].append((w_ih.T, w_hh.T, (b_ih + b_hh)[None, :]))

    key, k1, k2, k3, k4 = jax.random.split(key, 5)
    k_fc1 = 1.0 / jnp.sqrt(hidden)
    k_fc2 = 1.0 / jnp.sqrt(fc_dim)
    w1 = jax.random.uniform(k1, (fc_dim, hidden), jnp.float32, -k_fc1, k_fc1)
    b1 = jax.random.uniform(k2, (fc_dim,), jnp.float32, -k_fc1, k_fc1)
    w2 = jax.random.uniform(k3, (num_classes, fc_dim), jnp.float32, -k_fc2, k_fc2)
    b2 = jax.random.uniform(k4, (num_classes,), jnp.float32, -k_fc2, k_fc2)
    params["w1_t"] = w1.T
    params["b1"] = b1[None, :]
    params["w2_t"] = w2.T
    params["b2"] = b2[None, :]
    return params


# ----------------------------------------------------------------------------
# Pure-JAX reference (silent correctness check)
# ----------------------------------------------------------------------------
def reference_forward(x_btd, params):
    x = jnp.transpose(x_btd, (1, 0, 2)).astype(jnp.float32)
    for (w_ih_t, w_hh_t, b) in params["lstm"]:
        H = w_hh_t.shape[0]
        T, B, _ = x.shape
        h = jnp.zeros((B, H), jnp.float32)
        c = jnp.zeros((B, H), jnp.float32)
        ys = []
        for t in range(T):
            gates = x[t] @ w_ih_t + h @ w_hh_t + b
            i_g = jax.nn.sigmoid(gates[:, 0 * H:1 * H])
            f_g = jax.nn.sigmoid(gates[:, 1 * H:2 * H])
            g_g = jnp.tanh(gates[:, 2 * H:3 * H])
            o_g = jax.nn.sigmoid(gates[:, 3 * H:4 * H])
            c = f_g * c + i_g * g_g
            h = o_g * jnp.tanh(c)
            ys.append(h)
        x = jnp.stack(ys, axis=0)
    z = jnp.maximum(x[-1] @ params["w1_t"] + params["b1"], 0.0)
    return z @ params["w2_t"] + params["b2"]


if __name__ == "__main__":
    # Small shapes consistent with the module's forward: x_RNN (batch, time, input).
    B, T, D = 2, 8, 16
    H, FC, C, L = 32, 16, 5, 3

    key = jax.random.PRNGKey(0)
    key, kx, kp = jax.random.split(key, 3)
    x = jax.random.normal(kx, (B, T, D), jnp.float32)
    params = make_params(kp, D, H, L, FC, C)

    logits = lstm_model_forward(x, params)
    jax.block_until_ready(logits)

    ref = reference_forward(x, params)
    assert logits.shape == (B, C)
    assert jnp.allclose(logits, ref, atol=1e-4, rtol=1e-4)

    print("KERNEL_OK")
</pallas_src>

<mosaic_0001>
module attributes {stable_mosaic.version = 11 : i64} {
  func.func @kernel(%arg0: memref<64x16xf32, #tpu.memory_space<vmem>>, %arg1: memref<16x128xf32, #tpu.memory_space<vmem>>, %arg2: memref<32x128xf32, #tpu.memory_space<vmem>>, %arg3: memref<1x128xf32, #tpu.memory_space<vmem>>, %arg4: memref<64x128xf32, #tpu.memory_space<vmem>>, %arg5: memref<1x128xf32, #tpu.memory_space<vmem>>, %arg6: memref<64x128xf32, #tpu.memory_space<vmem>>, %arg7: memref<1x128xf32, #tpu.memory_space<vmem>>, %arg8: memref<32x16xf32, #tpu.memory_space<vmem>>, %arg9: memref<1x16xf32, #tpu.memory_space<vmem>>, %arg10: memref<16x5xf32, #tpu.memory_space<vmem>>, %arg11: memref<1x5xf32, #tpu.memory_space<vmem>>, %arg12: memref<8x5xf32, #tpu.memory_space<vmem>>) attributes {dimension_semantics = [], scalar_prefetch = 0 : i64, scratch_operands = 0 : i64, tpu.core_type = #tpu.core_type<tc>} {
    %c0 = arith.constant 0 : index
    %c0_0 = arith.constant 0 : index
    %0 = vector.load %arg0[%c0, %c0_0] : memref<64x16xf32, #tpu.memory_space<vmem>>, vector<64x16xf32>
    %c0_1 = arith.constant 0 : index
    %c0_2 = arith.constant 0 : index
    %1 = vector.load %arg1[%c0_1, %c0_2] : memref<16x128xf32, #tpu.memory_space<vmem>>, vector<16x128xf32>
    %cst = arith.constant dense<0.000000e+00> : vector<64x128xf32>
    %2 = tpu.matmul %0, %1, %cst {dimension_numbers = #tpu.dot_dimension_numbers<[1], [0], [0], [1], [0, 0, 1, 1], [], []>} : vector<64x16xf32>, vector<16x128xf32>, vector<64x128xf32> -> vector<64x128xf32>
    %c0_3 = arith.constant 0 : index
    %c0_4 = arith.constant 0 : index
    %3 = vector.load %arg3[%c0_3, %c0_4] : memref<1x128xf32, #tpu.memory_space<vmem>>, vector<1x128xf32>
    %4 = vector.broadcast %3 : vector<1x128xf32> to vector<64x128xf32>
    %5 = arith.addf %2, %4 : vector<64x128xf32>
    %c0_5 = arith.constant 0 : index
    %c0_6 = arith.constant 0 : index
    %6 = vector.load %arg2[%c0_5, %c0_6] : memref<32x128xf32, #tpu.memory_space<vmem>>, vector<32x128xf32>
    %c0_7 = arith.constant 0 : index
    %c0_8 = arith.constant 0 : index
    %7 = vector.load %arg4[%c0_7, %c0_8] : memref<64x128xf32, #tpu.memory_space<vmem>>, vector<64x128xf32>
    %c0_9 = arith.constant 0 : index
    %c0_10 = arith.constant 0 : index
    %8 = vector.load %arg6[%c0_9, %c0_10] : memref<64x128xf32, #tpu.memory_space<vmem>>, vector<64x128xf32>
    %c0_11 = arith.constant 0 : index
    %c0_12 = arith.constant 0 : index
    %9 = vector.load %arg5[%c0_11, %c0_12] : memref<1x128xf32, #tpu.memory_space<vmem>>, vector<1x128xf32>
    %c0_13 = arith.constant 0 : index
    %c0_14 = arith.constant 0 : index
    %10 = vector.load %arg7[%c0_13, %c0_14] : memref<1x128xf32, #tpu.memory_space<vmem>>, vector<1x128xf32>
    %cst_15 = arith.constant 0.000000e+00 : f32
    %11 = vector.broadcast %cst_15 : f32 to vector<8x32xf32>
    %12 = vector.extract_strided_slice %5 {offsets = [0, 0], sizes = [8, 128], strides = [1, 1]} : vector<64x128xf32> to vector<8x128xf32>
    %cst_16 = arith.constant dense<0.000000e+00> : vector<8x128xf32>
    %13 = tpu.matmul %11, %6, %cst_16 {dimension_numbers = #tpu.dot_dimension_numbers<[1], [0], [0], [1], [0, 0, 1, 1], [], []>} : vector<8x32xf32>, vector<32x128xf32>, vector<8x128xf32> -> vector<8x128xf32>
    %14 = arith.addf %12, %13 : vector<8x128xf32>
    %15 = math.tanh %14 : vector<8x128xf32>
    %16 = vector.extract_strided_slice %15 {offsets = [0, 0], sizes = [8, 32], strides = [1, 1]} : vector<8x128xf32> to vector<8x32xf32>
    %cst_17 = arith.constant 5.000000e-01 : f32
    %17 = vector.broadcast %cst_17 : f32 to vector<8x32xf32>
    %18 = arith.mulf %17, %16 : vector<8x32xf32>
    %cst_18 = arith.constant 5.000000e-01 : f32
    %19 = vector.broadcast %cst_18 : f32 to vector<8x32xf32>
    %20 = arith.addf %18, %19 : vector<8x32xf32>
    %21 = vector.extract_strided_slice %15 {offsets = [0, 32], sizes = [8, 32], strides = [1, 1]} : vector<8x128xf32> to vector<8x32xf32>
    %cst_19 = arith.constant 5.000000e-01 : f32
    %22 = vector.broadcast %cst_19 : f32 to vector<8x32xf32>
    %23 = arith.mulf %22, %21 : vector<8x32xf32>
    %cst_20 = arith.constant 5.000000e-01 : f32
    %24 = vector.broadcast %cst_20 : f32 to vector<8x32xf32>
    %25 = arith.addf %23, %24 : vector<8x32xf32>
    %26 = vector.extract_strided_slice %15 {offsets = [0, 64], sizes = [8, 32], strides = [1, 1]} : vector<8x128xf32> to vector<8x32xf32>
    %27 = vector.extract_strided_slice %15 {offsets = [0, 96], sizes = [8, 32], strides = [1, 1]} : vector<8x128xf32> to vector<8x32xf32>
    %cst_21 = arith.constant 5.000000e-01 : f32
    %28 = vector.broadcast %cst_21 : f32 to vector<8x32xf32>
    %29 = arith.mulf %28, %27 : vector<8x32xf32>
    %cst_22 = arith.constant 5.000000e-01 : f32
    %30 = vector.broadcast %cst_22 : f32 to vector<8x32xf32>
    %31 = arith.addf %29, %30 : vector<8x32xf32>
    %32 = arith.mulf %25, %11 : vector<8x32xf32>
    %33 = arith.mulf %20, %26 : vector<8x32xf32>
    %34 = arith.addf %32, %33 : vector<8x32xf32>
    %35 = math.tanh %34 : vector<8x32xf32>
    %36 = arith.mulf %31, %35 : vector<8x32xf32>
    %37 = vector.extract_strided_slice %5 {offsets = [8, 0], sizes = [8, 128], strides = [1, 1]} : vector<64x128xf32> to vector<8x128xf32>
    %cst_23 = arith.constant dense<0.000000e+00> : vector<8x128xf32>
    %38 = tpu.matmul %36, %6, %cst_23 {dimension_numbers = #tpu.dot_dimension_numbers<[1], [0], [0], [1], [0, 0, 1, 1], [], []>} : vector<8x32xf32>, vector<32x128xf32>, vector<8x128xf32> -> vector<8x128xf32>
    %39 = arith.addf %37, %38 : vector<8x128xf32>
    %40 = math.tanh %39 : vector<8x128xf32>
    %41 = vector.extract_strided_slice %40 {offsets = [0, 0], sizes = [8, 32], strides = [1, 1]} : vector<8x128xf32> to vector<8x32xf32>
    %cst_24 = arith.constant 5.000000e-01 : f32
    %42 = vector.broadcast %cst_24 : f32 to vector<8x32xf32>
    %43 = arith.mulf %42, %41 : vector<8x32xf32>
    %cst_25 = arith.constant 5.000000e-01 : f32
    %44 = vector.broadcast %cst_25 : f32 to vector<8x32xf32>
    %45 = arith.addf %43, %44 : vector<8x32xf32>
    %46 = vector.extract_strided_slice %40 {offsets = [0, 32], sizes = [8, 32], strides = [1, 1]} : vector<8x128xf32> to vector<8x32xf32>
    %cst_26 = arith.constant 5.000000e-01 : f32
    %47 = vector.broadcast %cst_26 : f32 to vector<8x32xf32>
    %48 = arith.mulf %47, %46 : vector<8x32xf32>
    %cst_27 = arith.constant 5.000000e-01 : f32
    %49 = vector.broadcast %cst_27 : f32 to vector<8x32xf32>
    %50 = arith.addf %48, %49 : vector<8x32xf32>
    %51 = vector.extract_strided_slice %40 {offsets = [0, 64], sizes = [8, 32], strides = [1, 1]} : vector<8x128xf32> to vector<8x32xf32>
    %52 = vector.extract_strided_slice %40 {offsets = [0, 96], sizes = [8, 32], strides = [1, 1]} : vector<8x128xf32> to vector<8x32xf32>
    %cst_28 = arith.constant 5.000000e-01 : f32
    %53 = vector.broadcast %cst_28 : f32 to vector<8x32xf32>
    %54 = arith.mulf %53, %52 : vector<8x32xf32>
    %cst_29 = arith.constant 5.000000e-01 : f32
    %55 = vector.broadcast %cst_29 : f32 to vector<8x32xf32>
    %56 = arith.addf %54, %55 : vector<8x32xf32>
    %57 = arith.mulf %50, %34 : vector<8x32xf32>
    %58 = arith.mulf %45, %51 : vector<8x32xf32>
    %59 = arith.addf %57, %58 : vector<8x32xf32>
    %60 = math.tanh %59 : vector<8x32xf32>
    %61 = arith.mulf %56, %60 : vector<8x32xf32>
    %62 = tpu.concatenate %36, %11 in 1 : vector<8x32xf32>, vector<8x32xf32> -> vector<8x64xf32>
    %cst_30 = arith.constant dense<0.000000e+00> : vector<8x128xf32>
    %63 = tpu.matmul %62, %7, %cst_30 {dimension_numbers = #tpu.dot_dimension_numbers<[1], [0], [0], [1], [0, 0, 1, 1], [], []>} : vector<8x64xf32>, vector<64x128xf32>, vector<8x128xf32> -> vector<8x128xf32>
    %64 = vector.broadcast %9 : vector<1x128xf32> to vector<8x128xf32>
    %65 = arith.addf %63, %64 : vector<8x128xf32>
    %66 = math.tanh %65 : vector<8x128xf32>
    %67 = vector.extract_strided_slice %66 {offsets = [0, 0], sizes = [8, 32], strides = [1, 1]} : vector<8x128xf32> to vector<8x32xf32>
    %cst_31 = arith.constant 5.000000e-01 : f32
    %68 = vector.broadcast %cst_31 : f32 to vector<8x32xf32>
    %69 = arith.mulf %68, %67 : vector<8x32xf32>
    %cst_32 = arith.constant 5.000000e-01 : f32
    %70 = vector.broadcast %cst_32 : f32 to vector<8x32xf32>
    %71 = arith.addf %69, %70 : vector<8x32xf32>
    %72 = vector.extract_strided_slice %66 {offsets = [0, 32], sizes = [8, 32], strides = [1, 1]} : vector<8x128xf32> to vector<8x32xf32>
    %cst_33 = arith.constant 5.000000e-01 : f32
    %73 = vector.broadcast %cst_33 : f32 to vector<8x32xf32>
    %74 = arith.mulf %73, %72 : vector<8x32xf32>
    %cst_34 = arith.constant 5.000000e-01 : f32
    %75 = vector.broadcast %cst_34 : f32 to vector<8x32xf32>
    %76 = arith.addf %74, %75 : vector<8x32xf32>
    %77 = vector.extract_strided_slice %66 {offsets = [0, 64], sizes = [8, 32], strides = [1, 1]} : vector<8x128xf32> to vector<8x32xf32>
    %78 = vector.extract_strided_slice %66 {offsets = [0, 96], sizes = [8, 32], strides = [1, 1]} : vector<8x128xf32> to vector<8x32xf32>
    %cst_35 = arith.constant 5.000000e-01 : f32
    %79 = vector.broadcast %cst_35 : f32 to vector<8x32xf32>
    %80 = arith.mulf %79, %78 : vector<8x32xf32>
    %cst_36 = arith.constant 5.000000e-01 : f32
    %81 = vector.broadcast %cst_36 : f32 to vector<8x32xf32>
    %82 = arith.addf %80, %81 : vector<8x32xf32>
    %83 = arith.mulf %76, %11 : vector<8x32xf32>
    %84 = arith.mulf %71, %77 : vector<8x32xf32>
    %85 = arith.addf %83, %84 : vector<8x32xf32>
    %86 = math.tanh %85 : vector<8x32xf32>
    %87 = arith.mulf %82, %86 : vector<8x32xf32>
    %88 = vector.extract_strided_slice %5 {offsets = [16, 0], sizes = [8, 128], strides = [1, 1]} : vector<64x128xf32> to vector<8x128xf32>
    %cst_37 = arith.constant dense<0.000000e+00> : vector<8x128xf32>
    %89 = tpu.matmul %61, %6, %cst_37 {dimension_numbers = #tpu.dot_dimension_numbers<[1], [0], [0], [1], [0, 0, 1, 1], [], []>} : vector<8x32xf32>, vector<32x128xf32>, vector<8x128xf32> -> vector<8x128xf32>
    %90 = arith.addf %88, %89 : vector<8x128xf32>
    %91 = math.tanh %90 : vector<8x128xf32>
    %92 = vector.extract_strided_slice %91 {offsets = [0, 0], sizes = [8, 32], strides = [1, 1]} : vector<8x128xf32> to vector<8x32xf32>
    %cst_38 = arith.constant 5.000000e-01 : f32
    %93 = vector.broadcast %cst_38 : f32 to vector<8x32xf32>
    %94 = arith.mulf %93, %92 : vector<8x32xf32>
    %cst_39 = arith.constant 5.000000e-01 : f32
    %95 = vector.broadcast %cst_39 : f32 to vector<8x32xf32>
    %96 = arith.addf %94, %95 : vector<8x32xf32>
    %97 = vector.extract_strided_slice %91 {offsets = [0, 32], sizes = [8, 32], strides = [1, 1]} : vector<8x128xf32> to vector<8x32xf32>
    %cst_40 = arith.constant 5.000000e-01 : f32
    %98 = vector.broadcast %cst_40 : f32 to vector<8x32xf32>
    %99 = arith.mulf %98, %97 : vector<8x32xf32>
    %cst_41 = arith.constant 5.000000e-01 : f32
    %100 = vector.broadcast %cst_41 : f32 to vector<8x32xf32>
    %101 = arith.addf %99, %100 : vector<8x32xf32>
    %102 = vector.extract_strided_slice %91 {offsets = [0, 64], sizes = [8, 32], strides = [1, 1]} : vector<8x128xf32> to vector<8x32xf32>
    %103 = vector.extract_strided_slice %91 {offsets = [0, 96], sizes = [8, 32], strides = [1, 1]} : vector<8x128xf32> to vector<8x32xf32>
    %cst_42 = arith.constant 5.000000e-01 : f32
    %104 = vector.broadcast %cst_42 : f32 to vector<8x32xf32>
    %105 = arith.mulf %104, %103 : vector<8x32xf32>
    %cst_43 = arith.constant 5.000000e-01 : f32
    %106 = vector.broadcast %cst_43 : f32 to vector<8x32xf32>
    %107 = arith.addf %105, %106 : vector<8x32xf32>
    %108 = arith.mulf %101, %59 : vector<8x32xf32>
    %109 = arith.mulf %96, %102 : vector<8x32xf32>
    %110 = arith.addf %108, %109 : vector<8x32xf32>
    %111 = math.tanh %110 : vector<8x32xf32>
    %112 = arith.mulf %107, %111 : vector<8x32xf32>
    %113 = tpu.concatenate %61, %87 in 1 : vector<8x32xf32>, vector<8x32xf32> -> vector<8x64xf32>
    %cst_44 = arith.constant dense<0.000000e+00> : vector<8x128xf32>
    %114 = tpu.matmul %113, %7, %cst_44 {dimension_numbers = #tpu.dot_dimension_numbers<[1], [0], [0], [1], [0, 0, 1, 1], [], []>} : vector<8x64xf32>, vector<64x128xf32>, vector<8x128xf32> -> vector<8x128xf32>
    %115 = vector.broadcast %9 : vector<1x128xf32> to vector<8x128xf32>
    %116 = arith.addf %114, %115 : vector<8x128xf32>
    %117 = math.tanh %116 : vector<8x128xf32>
    %118 = vector.extract_strided_slice %117 {offsets = [0, 0], sizes = [8, 32], strides = [1, 1]} : vector<8x128xf32> to vector<8x32xf32>
    %cst_45 = arith.constant 5.000000e-01 : f32
    %119 = vector.broadcast %cst_45 : f32 to vector<8x32xf32>
    %120 = arith.mulf %119, %118 : vector<8x32xf32>
    %cst_46 = arith.constant 5.000000e-01 : f32
    %121 = vector.broadcast %cst_46 : f32 to vector<8x32xf32>
    %122 = arith.addf %120, %121 : vector<8x32xf32>
    %123 = vector.extract_strided_slice %117 {offsets = [0, 32], sizes = [8, 32], strides = [1, 1]} : vector<8x128xf32> to vector<8x32xf32>
    %cst_47 = arith.constant 5.000000e-01 : f32
    %124 = vector.broadcast %cst_47 : f32 to vector<8x32xf32>
    %125 = arith.mulf %124, %123 : vector<8x32xf32>
    %cst_48 = arith.constant 5.000000e-01 : f32
    %126 = vector.broadcast %cst_48 : f32 to vector<8x32xf32>
    %127 = arith.addf %125, %126 : vector<8x32xf32>
    %128 = vector.extract_strided_slice %117 {offsets = [0, 64], sizes = [8, 32], strides = [1, 1]} : vector<8x128xf32> to vector<8x32xf32>
    %129 = vector.extract_strided_slice %117 {offsets = [0, 96], sizes = [8, 32], strides = [1, 1]} : vector<8x128xf32> to vector<8x32xf32>
    %cst_49 = arith.constant 5.000000e-01 : f32
    %130 = vector.broadcast %cst_49 : f32 to vector<8x32xf32>
    %131 = arith.mulf %130, %129 : vector<8x32xf32>
    %cst_50 = arith.constant 5.000000e-01 : f32
    %132 = vector.broadcast %cst_50 : f32 to vector<8x32xf32>
    %133 = arith.addf %131, %132 : vector<8x32xf32>
    %134 = arith.mulf %127, %85 : vector<8x32xf32>
    %135 = arith.mulf %122, %128 : vector<8x32xf32>
    %136 = arith.addf %134, %135 : vector<8x32xf32>
    %137 = math.tanh %136 : vector<8x32xf32>
    %138 = arith.mulf %133, %137 : vector<8x32xf32>
    %139 = tpu.concatenate %87, %11 in 1 : vector<8x32xf32>, vector<8x32xf32> -> vector<8x64xf32>
    %cst_51 = arith.constant dense<0.000000e+00> : vector<8x128xf32>
    %140 = tpu.matmul %139, %8, %cst_51 {dimension_numbers = #tpu.dot_dimension_numbers<[1], [0], [0], [1], [0, 0, 1, 1], [], []>} : vector<8x64xf32>, vector<64x128xf32>, vector<8x128xf32> -> vector<8x128xf32>
    %141 = vector.broadcast %10 : vector<1x128xf32> to vector<8x128xf32>
    %142 = arith.addf %140, %141 : vector<8x128xf32>
    %143 = math.tanh %142 : vector<8x128xf32>
    %144 = vector.extract_strided_slice %143 {offsets = [0, 0], sizes = [8, 32], strides = [1, 1]} : vector<8x128xf32> to vector<8x32xf32>
    %cst_52 = arith.constant 5.000000e-01 : f32
    %145 = vector.broadcast %cst_52 : f32 to vector<8x32xf32>
    %146 = arith.mulf %145, %144 : vector<8x32xf32>
    %cst_53 = arith.constant 5.000000e-01 : f32
    %147 = vector.broadcast %cst_53 : f32 to vector<8x32xf32>
    %148 = arith.addf %146, %147 : vector<8x32xf32>
    %149 = vector.extract_strided_slice %143 {offsets = [0, 32], sizes = [8, 32], strides = [1, 1]} : vector<8x128xf32> to vector<8x32xf32>
    %cst_54 = arith.constant 5.000000e-01 : f32
    %150 = vector.broadcast %cst_54 : f32 to vector<8x32xf32>
    %151 = arith.mulf %150, %149 : vector<8x32xf32>
    %cst_55 = arith.constant 5.000000e-01 : f32
    %152 = vector.broadcast %cst_55 : f32 to vector<8x32xf32>
    %153 = arith.addf %151, %152 : vector<8x32xf32>
    %154 = vector.extract_strided_slice %143 {offsets = [0, 64], sizes = [8, 32], strides = [1, 1]} : vector<8x128xf32> to vector<8x32xf32>
    %155 = vector.extract_strided_slice %143 {offsets = [0, 96], sizes = [8, 32], strides = [1, 1]} : vector<8x128xf32> to vector<8x32xf32>
    %cst_56 = arith.constant 5.000000e-01 : f32
    %156 = vector.broadcast %cst_56 : f32 to vector<8x32xf32>
    %157 = arith.mulf %156, %155 : vector<8x32xf32>
    %cst_57 = arith.constant 5.000000e-01 : f32
    %158 = vector.broadcast %cst_57 : f32 to vector<8x32xf32>
    %159 = arith.addf %157, %158 : vector<8x32xf32>
    %160 = arith.mulf %153, %11 : vector<8x32xf32>
    %161 = arith.mulf %148, %154 : vector<8x32xf32>
    %162 = arith.addf %160, %161 : vector<8x32xf32>
    %163 = math.tanh %162 : vector<8x32xf32>
    %164 = arith.mulf %159, %163 : vector<8x32xf32>
    %165 = vector.extract_strided_slice %5 {offsets = [24, 0], sizes = [8, 128], strides = [1, 1]} : vector<64x128xf32> to vector<8x128xf32>
    %cst_58 = arith.constant dense<0.000000e+00> : vector<8x128xf32>
    %166 = tpu.matmul %112, %6, %cst_58 {dimension_numbers = #tpu.dot_dimension_numbers<[1], [0], [0], [1], [0, 0, 1, 1], [], []>} : vector<8x32xf32>, vector<32x128xf32>, vector<8x128xf32> -> vector<8x128xf32>
    %167 = arith.addf %165, %166 : vector<8x128xf32>
    %168 = math.tanh %167 : vector<8x128xf32>
    %169 = vector.extract_strided_slice %168 {offsets = [0, 0], sizes = [8, 32], strides = [1, 1]} : vector<8x128xf32> to vector<8x32xf32>
    %cst_59 = arith.constant 5.000000e-01 : f32
    %170 = vector.broadcast %cst_59 : f32 to vector<8x32xf32>
    %171 = arith.mulf %170, %169 : vector<8x32xf32>
    %cst_60 = arith.constant 5.000000e-01 : f32
    %172 = vector.broadcast %cst_60 : f32 to vector<8x32xf32>
    %173 = arith.addf %171, %172 : vector<8x32xf32>
    %174 = vector.extract_strided_slice %168 {offsets = [0, 32], sizes = [8, 32], strides = [1, 1]} : vector<8x128xf32> to vector<8x32xf32>
    %cst_61 = arith.constant 5.000000e-01 : f32
    %175 = vector.broadcast %cst_61 : f32 to vector<8x32xf32>
    %176 = arith.mulf %175, %174 : vector<8x32xf32>
    %cst_62 = arith.constant 5.000000e-01 : f32
    %177 = vector.broadcast %cst_62 : f32 to vector<8x32xf32>
    %178 = arith.addf %176, %177 : vector<8x32xf32>
    %179 = vector.extract_strided_slice %168 {offsets = [0, 64], sizes = [8, 32], strides = [1, 1]} : vector<8x128xf32> to vector<8x32xf32>
    %180 = vector.extract_strided_slice %168 {offsets = [0, 96], sizes = [8, 32], strides = [1, 1]} : vector<8x128xf32> to vector<8x32xf32>
    %cst_63 = arith.constant 5.000000e-01 : f32
    %181 = vector.broadcast %cst_63 : f32 to vector<8x32xf32>
    %182 = arith.mulf %181, %180 : vector<8x32xf32>
    %cst_64 = arith.constant 5.000000e-01 : f32
    %183 = vector.broadcast %cst_64 : f32 to vector<8x32xf32>
    %184 = arith.addf %182, %183 : vector<8x32xf32>
    %185 = arith.mulf %178, %110 : vector<8x32xf32>
    %186 = arith.mulf %173, %179 : vector<8x32xf32>
    %187 = arith.addf %185, %186 : vector<8x32xf32>
    %188 = math.tanh %187 : vector<8x32xf32>
    %189 = arith.mulf %184, %188 : vector<8x32xf32>
    %190 = tpu.concatenate %112, %138 in 1 : vector<8x32xf32>, vector<8x32xf32> -> vector<8x64xf32>
    %cst_65 = arith.constant dense<0.000000e+00> : vector<8x128xf32>
    %191 = tpu.matmul %190, %7, %cst_65 {dimension_numbers = #tpu.dot_dimension_numbers<[1], [0], [0], [1], [0, 0, 1, 1], [], []>} : vector<8x64xf32>, vector<64x128xf32>, vector<8x128xf32> -> vector<8x128xf32>
    %192 = vector.broadcast %9 : vector<1x128xf32> to vector<8x128xf32>
    %193 = arith.addf %191, %192 : vector<8x128xf32>
    %194 = math.tanh %193 : vector<8x128xf32>
    %195 = vector.extract_strided_slice %194 {offsets = [0, 0], sizes = [8, 32], strides = [1, 1]} : vector<8x128xf32> to vector<8x32xf32>
    %cst_66 = arith.constant 5.000000e-01 : f32
    %196 = vector.broadcast %cst_66 : f32 to vector<8x32xf32>
    %197 = arith.mulf %196, %195 : vector<8x32xf32>
    %cst_67 = arith.constant 5.000000e-01 : f32
    %198 = vector.broadcast %cst_67 : f32 to vector<8x32xf32>
    %199 = arith.addf %197, %198 : vector<8x32xf32>
    %200 = vector.extract_strided_slice %194 {offsets = [0, 32], sizes = [8, 32], strides = [1, 1]} : vector<8x128xf32> to vector<8x32xf32>
    %cst_68 = arith.constant 5.000000e-01 : f32
    %201 = vector.broadcast %cst_68 : f32 to vector<8x32xf32>
    %202 = arith.mulf %201, %200 : vector<8x32xf32>
    %cst_69 = arith.constant 5.000000e-01 : f32
    %203 = vector.broadcast %cst_69 : f32 to vector<8x32xf32>
    %204 = arith.addf %202, %203 : vector<8x32xf32>
    %205 = vector.extract_strided_slice %194 {offsets = [0, 64], sizes = [8, 32], strides = [1, 1]} : vector<8x128xf32> to vector<8x32xf32>
    %206 = vector.extract_strided_slice %194 {offsets = [0, 96], sizes = [8, 32], strides = [1, 1]} : vector<8x128xf32> to vector<8x32xf32>
    %cst_70 = arith.constant 5.000000e-01 : f32
    %207 = vector.broadcast %cst_70 : f32 to vector<8x32xf32>
    %208 = arith.mulf %207, %206 : vector<8x32xf32>
    %cst_71 = arith.constant 5.000000e-01 : f32
    %209 = vector.broadcast %cst_71 : f32 to vector<8x32xf32>
    %210 = arith.addf %208, %209 : vector<8x32xf32>
    %211 = arith.mulf %204, %136 : vector<8x32xf32>
    %212 = arith.mulf %199, %205 : vector<8x32xf32>
    %213 = arith.addf %211, %212 : vector<8x32xf32>
    %214 = math.tanh %213 : vector<8x32xf32>
    %215 = arith.mulf %210, %214 : vector<8x32xf32>
    %216 = tpu.concatenate %138, %164 in 1 : vector<8x32xf32>, vector<8x32xf32> -> vector<8x64xf32>
    %cst_72 = arith.constant dense<0.000000e+00> : vector<8x128xf32>
    %217 = tpu.matmul %216, %8, %cst_72 {dimension_numbers = #tpu.dot_dimension_numbers<[1], [0], [0], [1], [0, 0, 1, 1], [], []>} : vector<8x64xf32>, vector<64x128xf32>, vector<8x128xf32> -> vector<8x128xf32>
    %218 = vector.broadcast %10 : vector<1x128xf32> to vector<8x128xf32>
    %219 = arith.addf %217, %218 : vector<8x128xf32>
    %220 = math.tanh %219 : vector<8x128xf32>
    %221 = vector.extract_strided_slice %220 {offsets = [0, 0], sizes = [8, 32], strides = [1, 1]} : vector<8x128xf32> to vector<8x32xf32>
    %cst_73 = arith.constant 5.000000e-01 : f32
    %222 = vector.broadcast %cst_73 : f32 to vector<8x32xf32>
    %223 = arith.mulf %222, %221 : vector<8x32xf32>
    %cst_74 = arith.constant 5.000000e-01 : f32
    %224 = vector.broadcast %cst_74 : f32 to vector<8x32xf32>
    %225 = arith.addf %223, %224 : vector<8x32xf32>
    %226 = vector.extract_strided_slice %220 {offsets = [0, 32], sizes = [8, 32], strides = [1, 1]} : vector<8x128xf32> to vector<8x32xf32>
    %cst_75 = arith.constant 5.000000e-01 : f32
    %227 = vector.broadcast %cst_75 : f32 to vector<8x32xf32>
    %228 = arith.mulf %227, %226 : vector<8x32xf32>
    %cst_76 = arith.constant 5.000000e-01 : f32
    %229 = vector.broadcast %cst_76 : f32 to vector<8x32xf32>
    %230 = arith.addf %228, %229 : vector<8x32xf32>
    %231 = vector.extract_strided_slice %220 {offsets = [0, 64], sizes = [8, 32], strides = [1, 1]} : vector<8x128xf32> to vector<8x32xf32>
    %232 = vector.extract_strided_slice %220 {offsets = [0, 96], sizes = [8, 32], strides = [1, 1]} : vector<8x128xf32> to vector<8x32xf32>
    %cst_77 = arith.constant 5.000000e-01 : f32
    %233 = vector.broadcast %cst_77 : f32 to vector<8x32xf32>
    %234 = arith.mulf %233, %232 : vector<8x32xf32>
    %cst_78 = arith.constant 5.000000e-01 : f32
    %235 = vector.broadcast %cst_78 : f32 to vector<8x32xf32>
    %236 = arith.addf %234, %235 : vector<8x32xf32>
    %237 = arith.mulf %230, %162 : vector<8x32xf32>
    %238 = arith.mulf %225, %231 : vector<8x32xf32>
    %239 = arith.addf %237, %238 : vector<8x32xf32>
    %240 = math.tanh %239 : vector<8x32xf32>
    %241 = arith.mulf %236, %240 : vector<8x32xf32>
    %242 = vector.extract_strided_slice %5 {offsets = [32, 0], sizes = [8, 128], strides = [1, 1]} : vector<64x128xf32> to vector<8x128xf32>
    %cst_79 = arith.constant dense<0.000000e+00> : vector<8x128xf32>
    %243 = tpu.matmul %189, %6, %cst_79 {dimension_numbers = #tpu.dot_dimension_numbers<[1], [0], [0], [1], [0, 0, 1, 1], [], []>} : vector<8x32xf32>, vector<32x128xf32>, vector<8x128xf32> -> vector<8x128xf32>
    %244 = arith.addf %242, %243 : vector<8x128xf32>
    %245 = math.tanh %244 : vector<8x128xf32>
    %246 = vector.extract_strided_slice %245 {offsets = [0, 0], sizes = [8, 32], strides = [1, 1]} : vector<8x128xf32> to vector<8x32xf32>
    %cst_80 = arith.constant 5.000000e-01 : f32
    %247 = vector.broadcast %cst_80 : f32 to vector<8x32xf32>
    %248 = arith.mulf %247, %246 : vector<8x32xf32>
    %cst_81 = arith.constant 5.000000e-01 : f32
    %249 = vector.broadcast %cst_81 : f32 to vector<8x32xf32>
    %250 = arith.addf %248, %249 : vector<8x32xf32>
    %251 = vector.extract_strided_slice %245 {offsets = [0, 32], sizes = [8, 32], strides = [1, 1]} : vector<8x128xf32> to vector<8x32xf32>
    %cst_82 = arith.constant 5.000000e-01 : f32
    %252 = vector.broadcast %cst_82 : f32 to vector<8x32xf32>
    %253 = arith.mulf %252, %251 : vector<8x32xf32>
    %cst_83 = arith.constant 5.000000e-01 : f32
    %254 = vector.broadcast %cst_83 : f32 to vector<8x32xf32>
    %255 = arith.addf %253, %254 : vector<8x32xf32>
    %256 = vector.extract_strided_slice %245 {offsets = [0, 64], sizes = [8, 32], strides = [1, 1]} : vector<8x128xf32> to vector<8x32xf32>
    %257 = vector.extract_strided_slice %245 {offsets = [0, 96], sizes = [8, 32], strides = [1, 1]} : vector<8x128xf32> to vector<8x32xf32>
    %cst_84 = arith.constant 5.000000e-01 : f32
    %258 = vector.broadcast %cst_84 : f32 to vector<8x32xf32>
    %259 = arith.mulf %258, %257 : vector<8x32xf32>
    %cst_85 = arith.constant 5.000000e-01 : f32
    %260 = vector.broadcast %cst_85 : f32 to vector<8x32xf32>
    %261 = arith.addf %259, %260 : vector<8x32xf32>
    %262 = arith.mulf %255, %187 : vector<8x32xf32>
    %263 = arith.mulf %250, %256 : vector<8x32xf32>
    %264 = arith.addf %262, %263 : vector<8x32xf32>
    %265 = math.tanh %264 : vector<8x32xf32>
    %266 = arith.mulf %261, %265 : vector<8x32xf32>
    %267 = tpu.concatenate %189, %215 in 1 : vector<8x32xf32>, vector<8x32xf32> -> vector<8x64xf32>
    %cst_86 = arith.constant dense<0.000000e+00> : vector<8x128xf32>
    %268 = tpu.matmul %267, %7, %cst_86 {dimension_numbers = #tpu.dot_dimension_numbers<[1], [0], [0], [1], [0, 0, 1, 1], [], []>} : vector<8x64xf32>, vector<64x128xf32>, vector<8x128xf32> -> vector<8x128xf32>
    %269 = vector.broadcast %9 : vector<1x128xf32> to vector<8x128xf32>
    %270 = arith.addf %268, %269 : vector<8x128xf32>
    %271 = math.tanh %270 : vector<8x128xf32>
    %272 = vector.extract_strided_slice %271 {offsets = [0, 0], sizes = [8, 32], strides = [1, 1]} : vector<8x128xf32> to vector<8x32xf32>
    %cst_87 = arith.constant 5.000000e-01 : f32
    %273 = vector.broadcast %cst_87 : f32 to vector<8x32xf32>
    %274 = arith.mulf %273, %272 : vector<8x32xf32>
    %cst_88 = arith.constant 5.000000e-01 : f32
    %275 = vector.broadcast %cst_88 : f32 to vector<8x32xf32>
    %276 = arith.addf %274, %275 : vector<8x32xf32>
    %277 = vector.extract_strided_slice %271 {offsets = [0, 32], sizes = [8, 32], strides = [1, 1]} : vector<8x128xf32> to vector<8x32xf32>
    %cst_89 = arith.constant 5.000000e-01 : f32
    %278 = vector.broadcast %cst_89 : f32 to vector<8x32xf32>
    %279 = arith.mulf %278, %277 : vector<8x32xf32>
    %cst_90 = arith.constant 5.000000e-01 : f32
    %280 = vector.broadcast %cst_90 : f32 to vector<8x32xf32>
    %281 = arith.addf %279, %280 : vector<8x32xf32>
    %282 = vector.extract_strided_slice %271 {offsets = [0, 64], sizes = [8, 32], strides = [1, 1]} : vector<8x128xf32> to vector<8x32xf32>
    %283 = vector.extract_strided_slice %271 {offsets = [0, 96], sizes = [8, 32], strides = [1, 1]} : vector<8x128xf32> to vector<8x32xf32>
    %cst_91 = arith.constant 5.000000e-01 : f32
    %284 = vector.broadcast %cst_91 : f32 to vector<8x32xf32>
    %285 = arith.mulf %284, %283 : vector<8x32xf32>
    %cst_92 = arith.constant 5.000000e-01 : f32
    %286 = vector.broadcast %cst_92 : f32 to vector<8x32xf32>
    %287 = arith.addf %285, %286 : vector<8x32xf32>
    %288 = arith.mulf %281, %213 : vector<8x32xf32>
    %289 = arith.mulf %276, %282 : vector<8x32xf32>
    %290 = arith.addf %288, %289 : vector<8x32xf32>
    %291 = math.tanh %290 : vector<8x32xf32>
    %292 = arith.mulf %287, %291 : vector<8x32xf32>
    %293 = tpu.concatenate %215, %241 in 1 : vector<8x32xf32>, vector<8x32xf32> -> vector<8x64xf32>
    %cst_93 = arith.constant dense<0.000000e+00> : vector<8x128xf32>
    %294 = tpu.matmul %293, %8, %cst_93 {dimension_numbers = #tpu.dot_dimension_numbers<[1], [0], [0], [1], [0, 0, 1, 1], [], []>} : vector<8x64xf32>, vector<64x128xf32>, vector<8x128xf32> -> vector<8x128xf32>
    %295 = vector.broadcast %10 : vector<1x128xf32> to vector<8x128xf32>
    %296 = arith.addf %294, %295 : vector<8x128xf32>
    %297 = math.tanh %296 : vector<8x128xf32>
    %298 = vector.extract_strided_slice %297 {offsets = [0, 0], sizes = [8, 32], strides = [1, 1]} : vector<8x128xf32> to vector<8x32xf32>
    %cst_94 = arith.constant 5.000000e-01 : f32
    %299 = vector.broadcast %cst_94 : f32 to vector<8x32xf32>
    %300 = arith.mulf %299, %298 : vector<8x32xf32>
    %cst_95 = arith.constant 5.000000e-01 : f32
    %301 = vector.broadcast %cst_95 : f32 to vector<8x32xf32>
    %302 = arith.addf %300, %301 : vector<8x32xf32>
    %303 = vector.extract_strided_slice %297 {offsets = [0, 32], sizes = [8, 32], strides = [1, 1]} : vector<8x128xf32> to vector<8x32xf32>
    %cst_96 = arith.constant 5.000000e-01 : f32
    %304 = vector.broadcast %cst_96 : f32 to vector<8x32xf32>
    %305 = arith.mulf %304, %303 : vector<8x32xf32>
    %cst_97 = arith.constant 5.000000e-01 : f32
    %306 = vector.broadcast %cst_97 : f32 to vector<8x32xf32>
    %307 = arith.addf %305, %306 : vector<8x32xf32>
    %308 = vector.extract_strided_slice %297 {offsets = [0, 64], sizes = [8, 32], strides = [1, 1]} : vector<8x128xf32> to vector<8x32xf32>
    %309 = vector.extract_strided_slice %297 {offsets = [0, 96], sizes = [8, 32], strides = [1, 1]} : vector<8x128xf32> to vector<8x32xf32>
    %cst_98 = arith.constant 5.000000e-01 : f32
    %310 = vector.broadcast %cst_98 : f32 to vector<8x32xf32>
    %311 = arith.mulf %310, %309 : vector<8x32xf32>
    %cst_99 = arith.constant 5.000000e-01 : f32
    %312 = vector.broadcast %cst_99 : f32 to vector<8x32xf32>
    %313 = arith.addf %311, %312 : vector<8x32xf32>
    %314 = arith.mulf %307, %239 : vector<8x32xf32>
    %315 = arith.mulf %302, %308 : vector<8x32xf32>
    %316 = arith.addf %314, %315 : vector<8x32xf32>
    %317 = math.tanh %316 : vector<8x32xf32>
    %318 = arith.mulf %313, %317 : vector<8x32xf32>
    %319 = vector.extract_strided_slice %5 {offsets = [40, 0], sizes = [8, 128], strides = [1, 1]} : vector<64x128xf32> to vector<8x128xf32>
    %cst_100 = arith.constant dense<0.000000e+00> : vector<8x128xf32>
    %320 = tpu.matmul %266, %6, %cst_100 {dimension_numbers = #tpu.dot_dimension_numbers<[1], [0], [0], [1], [0, 0, 1, 1], [], []>} : vector<8x32xf32>, vector<32x128xf32>, vector<8x128xf32> -> vector<8x128xf32>
    %321 = arith.addf %319, %320 : vector<8x128xf32>
    %322 = math.tanh %321 : vector<8x128xf32>
    %323 = vector.extract_strided_slice %322 {offsets = [0, 0], sizes = [8, 32], strides = [1, 1]} : vector<8x128xf32> to vector<8x32xf32>
    %cst_101 = arith.constant 5.000000e-01 : f32
    %324 = vector.broadcast %cst_101 : f32 to vector<8x32xf32>
    %325 = arith.mulf %324, %323 : vector<8x32xf32>
    %cst_102 = arith.constant 5.000000e-01 : f32
    %326 = vector.broadcast %cst_102 : f32 to vector<8x32xf32>
    %327 = arith.addf %325, %326 : vector<8x32xf32>
    %328 = vector.extract_strided_slice %322 {offsets = [0, 32], sizes = [8, 32], strides = [1, 1]} : vector<8x128xf32> to vector<8x32xf32>
    %cst_103 = arith.constant 5.000000e-01 : f32
    %329 = vector.broadcast %cst_103 : f32 to vector<8x32xf32>
    %330 = arith.mulf %329, %328 : vector<8x32xf32>
    %cst_104 = arith.constant 5.000000e-01 : f32
    %331 = vector.broadcast %cst_104 : f32 to vector<8x32xf32>
    %332 = arith.addf %330, %331 : vector<8x32xf32>
    %333 = vector.extract_strided_slice %322 {offsets = [0, 64], sizes = [8, 32], strides = [1, 1]} : vector<8x128xf32> to vector<8x32xf32>
    %334 = vector.extract_strided_slice %322 {offsets = [0, 96], sizes = [8, 32], strides = [1, 1]} : vector<8x128xf32> to vector<8x32xf32>
    %cst_105 = arith.constant 5.000000e-01 : f32
    %335 = vector.broadcast %cst_105 : f32 to vector<8x32xf32>
    %336 = arith.mulf %335, %334 : vector<8x32xf32>
    %cst_106 = arith.constant 5.000000e-01 : f32
    %337 = vector.broadcast %cst_106 : f32 to vector<8x32xf32>
    %338 = arith.addf %336, %337 : vector<8x32xf32>
    %339 = arith.mulf %332, %264 : vector<8x32xf32>
    %340 = arith.mulf %327, %333 : vector<8x32xf32>
    %341 = arith.addf %339, %340 : vector<8x32xf32>
    %342 = math.tanh %341 : vector<8x32xf32>
    %343 = arith.mulf %338, %342 : vector<8x32xf32>
    %344 = tpu.concatenate %266, %292 in 1 : vector<8x32xf32>, vector<8x32xf32> -> vector<8x64xf32>
    %cst_107 = arith.constant dense<0.000000e+00> : vector<8x128xf32>
    %345 = tpu.matmul %344, %7, %cst_107 {dimension_numbers = #tpu.dot_dimension_numbers<[1], [0], [0], [1], [0, 0, 1, 1], [], []>} : vector<8x64xf32>, vector<64x128xf32>, vector<8x128xf32> -> vector<8x128xf32>
    %346 = vector.broadcast %9 : vector<1x128xf32> to vector<8x128xf32>
    %347 = arith.addf %345, %346 : vector<8x128xf32>
    %348 = math.tanh %347 : vector<8x128xf32>
    %349 = vector.extract_strided_slice %348 {offsets = [0, 0], sizes = [8, 32], strides = [1, 1]} : vector<8x128xf32> to vector<8x32xf32>
    %cst_108 = arith.constant 5.000000e-01 : f32
    %350 = vector.broadcast %cst_108 : f32 to vector<8x32xf32>
    %351 = arith.mulf %350, %349 : vector<8x32xf32>
    %cst_109 = arith.constant 5.000000e-01 : f32
    %352 = vector.broadcast %cst_109 : f32 to vector<8x32xf32>
    %353 = arith.addf %351, %352 : vector<8x32xf32>
    %354 = vector.extract_strided_slice %348 {offsets = [0, 32], sizes = [8, 32], strides = [1, 1]} : vector<8x128xf32> to vector<8x32xf32>
    %cst_110 = arith.constant 5.000000e-01 : f32
    %355 = vector.broadcast %cst_110 : f32 to vector<8x32xf32>
    %356 = arith.mulf %355, %354 : vector<8x32xf32>
    %cst_111 = arith.constant 5.000000e-01 : f32
    %357 = vector.broadcast %cst_111 : f32 to vector<8x32xf32>
    %358 = arith.addf %356, %357 : vector<8x32xf32>
    %359 = vector.extract_strided_slice %348 {offsets = [0, 64], sizes = [8, 32], strides = [1, 1]} : vector<8x128xf32> to vector<8x32xf32>
    %360 = vector.extract_strided_slice %348 {offsets = [0, 96], sizes = [8, 32], strides = [1, 1]} : vector<8x128xf32> to vector<8x32xf32>
    %cst_112 = arith.constant 5.000000e-01 : f32
    %361 = vector.broadcast %cst_112 : f32 to vector<8x32xf32>
    %362 = arith.mulf %361, %360 : vector<8x32xf32>
    %cst_113 = arith.constant 5.000000e-01 : f32
    %363 = vector.broadcast %cst_113 : f32 to vector<8x32xf32>
    %364 = arith.addf %362, %363 : vector<8x32xf32>
    %365 = arith.mulf %358, %290 : vector<8x32xf32>
    %366 = arith.mulf %353, %359 : vector<8x32xf32>
    %367 = arith.addf %365, %366 : vector<8x32xf32>
    %368 = math.tanh %367 : vector<8x32xf32>
    %369 = arith.mulf %364, %368 : vector<8x32xf32>
    %370 = tpu.concatenate %292, %318 in 1 : vector<8x32xf32>, vector<8x32xf32> -> vector<8x64xf32>
    %cst_114 = arith.constant dense<0.000000e+00> : vector<8x128xf32>
    %371 = tpu.matmul %370, %8, %cst_114 {dimension_numbers = #tpu.dot_dimension_numbers<[1], [0], [0], [1], [0, 0, 1, 1], [], []>} : vector<8x64xf32>, vector<64x128xf32>, vector<8x128xf32> -> vector<8x128xf32>
    %372 = vector.broadcast %10 : vector<1x128xf32> to vector<8x128xf32>
    %373 = arith.addf %371, %372 : vector<8x128xf32>
    %374 = math.tanh %373 : vector<8x128xf32>
    %375 = vector.extract_strided_slice %374 {offsets = [0, 0], sizes = [8, 32], strides = [1, 1]} : vector<8x128xf32> to vector<8x32xf32>
    %cst_115 = arith.constant 5.000000e-01 : f32
    %376 = vector.broadcast %cst_115 : f32 to vector<8x32xf32>
    %377 = arith.mulf %376, %375 : vector<8x32xf32>
    %cst_116 = arith.constant 5.000000e-01 : f32
    %378 = vector.broadcast %cst_116 : f32 to vector<8x32xf32>
    %379 = arith.addf %377, %378 : vector<8x32xf32>
    %380 = vector.extract_strided_slice %374 {offsets = [0, 32], sizes = [8, 32], strides = [1, 1]} : vector<8x128xf32> to vector<8x32xf32>
    %cst_117 = arith.constant 5.000000e-01 : f32
    %381 = vector.broadcast %cst_117 : f32 to vector<8x32xf32>
    %382 = arith.mulf %381, %380 : vector<8x32xf32>
    %cst_118 = arith.constant 5.000000e-01 : f32
    %383 = vector.broadcast %cst_118 : f32 to vector<8x32xf32>
    %384 = arith.addf %382, %383 : vector<8x32xf32>
    %385 = vector.extract_strided_slice %374 {offsets = [0, 64], sizes = [8, 32], strides = [1, 1]} : vector<8x128xf32> to vector<8x32xf32>
    %386 = vector.extract_strided_slice %374 {offsets = [0, 96], sizes = [8, 32], strides = [1, 1]} : vector<8x128xf32> to vector<8x32xf32>
    %cst_119 = arith.constant 5.000000e-01 : f32
    %387 = vector.broadcast %cst_119 : f32 to vector<8x32xf32>
    %388 = arith.mulf %387, %386 : vector<8x32xf32>
    %cst_120 = arith.constant 5.000000e-01 : f32
    %389 = vector.broadcast %cst_120 : f32 to vector<8x32xf32>
    %390 = arith.addf %388, %389 : vector<8x32xf32>
    %391 = arith.mulf %384, %316 : vector<8x32xf32>
    %392 = arith.mulf %379, %385 : vector<8x32xf32>
    %393 = arith.addf %391, %392 : vector<8x32xf32>
    %394 = math.tanh %393 : vector<8x32xf32>
    %395 = arith.mulf %390, %394 : vector<8x32xf32>
    %396 = vector.extract_strided_slice %5 {offsets = [48, 0], sizes = [8, 128], strides = [1, 1]} : vector<64x128xf32> to vector<8x128xf32>
    %cst_121 = arith.constant dense<0.000000e+00> : vector<8x128xf32>
    %397 = tpu.matmul %343, %6, %cst_121 {dimension_numbers = #tpu.dot_dimension_numbers<[1], [0], [0], [1], [0, 0, 1, 1], [], []>} : vector<8x32xf32>, vector<32x128xf32>, vector<8x128xf32> -> vector<8x128xf32>
    %398 = arith.addf %396, %397 : vector<8x128xf32>
    %399 = math.tanh %398 : vector<8x128xf32>
    %400 = vector.extract_strided_slice %399 {offsets = [0, 0], sizes = [8, 32], strides = [1, 1]} : vector<8x128xf32> to vector<8x32xf32>
    %cst_122 = arith.constant 5.000000e-01 : f32
    %401 = vector.broadcast %cst_122 : f32 to vector<8x32xf32>
    %402 = arith.mulf %401, %400 : vector<8x32xf32>
    %cst_123 = arith.constant 5.000000e-01 : f32
    %403 = vector.broadcast %cst_123 : f32 to vector<8x32xf32>
    %404 = arith.addf %402, %403 : vector<8x32xf32>
    %405 = vector.extract_strided_slice %399 {offsets = [0, 32], sizes = [8, 32], strides = [1, 1]} : vector<8x128xf32> to vector<8x32xf32>
    %cst_124 = arith.constant 5.000000e-01 : f32
    %406 = vector.broadcast %cst_124 : f32 to vector<8x32xf32>
    %407 = arith.mulf %406, %405 : vector<8x32xf32>
    %cst_125 = arith.constant 5.000000e-01 : f32
    %408 = vector.broadcast %cst_125 : f32 to vector<8x32xf32>
    %409 = arith.addf %407, %408 : vector<8x32xf32>
    %410 = vector.extract_strided_slice %399 {offsets = [0, 64], sizes = [8, 32], strides = [1, 1]} : vector<8x128xf32> to vector<8x32xf32>
    %411 = vector.extract_strided_slice %399 {offsets = [0, 96], sizes = [8, 32], strides = [1, 1]} : vector<8x128xf32> to vector<8x32xf32>
    %cst_126 = arith.constant 5.000000e-01 : f32
    %412 = vector.broadcast %cst_126 : f32 to vector<8x32xf32>
    %413 = arith.mulf %412, %411 : vector<8x32xf32>
    %cst_127 = arith.constant 5.000000e-01 : f32
    %414 = vector.broadcast %cst_127 : f32 to vector<8x32xf32>
    %415 = arith.addf %413, %414 : vector<8x32xf32>
    %416 = arith.mulf %409, %341 : vector<8x32xf32>
    %417 = arith.mulf %404, %410 : vector<8x32xf32>
    %418 = arith.addf %416, %417 : vector<8x32xf32>
    %419 = math.tanh %418 : vector<8x32xf32>
    %420 = arith.mulf %415, %419 : vector<8x32xf32>
    %421 = tpu.concatenate %343, %369 in 1 : vector<8x32xf32>, vector<8x32xf32> -> vector<8x64xf32>
    %cst_128 = arith.constant dense<0.000000e+00> : vector<8x128xf32>
    %422 = tpu.matmul %421, %7, %cst_128 {dimension_numbers = #tpu.dot_dimension_numbers<[1], [0], [0], [1], [0, 0, 1, 1], [], []>} : vector<8x64xf32>, vector<64x128xf32>, vector<8x128xf32> -> vector<8x128xf32>
    %423 = vector.broadcast %9 : vector<1x128xf32> to vector<8x128xf32>
    %424 = arith.addf %422, %423 : vector<8x128xf32>
    %425 = math.tanh %424 : vector<8x128xf32>
    %426 = vector.extract_strided_slice %425 {offsets = [0, 0], sizes = [8, 32], strides = [1, 1]} : vector<8x128xf32> to vector<8x32xf32>
    %cst_129 = arith.constant 5.000000e-01 : f32
    %427 = vector.broadcast %cst_129 : f32 to vector<8x32xf32>
    %428 = arith.mulf %427, %426 : vector<8x32xf32>
    %cst_130 = arith.constant 5.000000e-01 : f32
    %429 = vector.broadcast %cst_130 : f32 to vector<8x32xf32>
    %430 = arith.addf %428, %429 : vector<8x32xf32>
    %431 = vector.extract_strided_slice %425 {offsets = [0, 32], sizes = [8, 32], strides = [1, 1]} : vector<8x128xf32> to vector<8x32xf32>
    %cst_131 = arith.constant 5.000000e-01 : f32
    %432 = vector.broadcast %cst_131 : f32 to vector<8x32xf32>
    %433 = arith.mulf %432, %431 : vector<8x32xf32>
    %cst_132 = arith.constant 5.000000e-01 : f32
    %434 = vector.broadcast %cst_132 : f32 to vector<8x32xf32>
    %435 = arith.addf %433, %434 : vector<8x32xf32>
    %436 = vector.extract_strided_slice %425 {offsets = [0, 64], sizes = [8, 32], strides = [1, 1]} : vector<8x128xf32> to vector<8x32xf32>
    %437 = vector.extract_strided_slice %425 {offsets = [0, 96], sizes = [8, 32], strides = [1, 1]} : vector<8x128xf32> to vector<8x32xf32>
    %cst_133 = arith.constant 5.000000e-01 : f32
    %438 = vector.broadcast %cst_133 : f32 to vector<8x32xf32>
    %439 = arith.mulf %438, %437 : vector<8x32xf32>
    %cst_134 = arith.constant 5.000000e-01 : f32
    %440 = vector.broadcast %cst_134 : f32 to vector<8x32xf32>
    %441 = arith.addf %439, %440 : vector<8x32xf32>
    %442 = arith.mulf %435, %367 : vector<8x32xf32>
    %443 = arith.mulf %430, %436 : vector<8x32xf32>
    %444 = arith.addf %442, %443 : vector<8x32xf32>
    %445 = math.tanh %444 : vector<8x32xf32>
    %446 = arith.mulf %441, %445 : vector<8x32xf32>
    %447 = tpu.concatenate %369, %395 in 1 : vector<8x32xf32>, vector<8x32xf32> -> vector<8x64xf32>
    %cst_135 = arith.constant dense<0.000000e+00> : vector<8x128xf32>
    %448 = tpu.matmul %447, %8, %cst_135 {dimension_numbers = #tpu.dot_dimension_numbers<[1], [0], [0], [1], [0, 0, 1, 1], [], []>} : vector<8x64xf32>, vector<64x128xf32>, vector<8x128xf32> -> vector<8x128xf32>
    %449 = vector.broadcast %10 : vector<1x128xf32> to vector<8x128xf32>
    %450 = arith.addf %448, %449 : vector<8x128xf32>
    %451 = math.tanh %450 : vector<8x128xf32>
    %452 = vector.extract_strided_slice %451 {offsets = [0, 0], sizes = [8, 32], strides = [1, 1]} : vector<8x128xf32> to vector<8x32xf32>
    %cst_136 = arith.constant 5.000000e-01 : f32
    %453 = vector.broadcast %cst_136 : f32 to vector<8x32xf32>
    %454 = arith.mulf %453, %452 : vector<8x32xf32>
    %cst_137 = arith.constant 5.000000e-01 : f32
    %455 = vector.broadcast %cst_137 : f32 to vector<8x32xf32>
    %456 = arith.addf %454, %455 : vector<8x32xf32>
    %457 = vector.extract_strided_slice %451 {offsets = [0, 32], sizes = [8, 32], strides = [1, 1]} : vector<8x128xf32> to vector<8x32xf32>
    %cst_138 = arith.constant 5.000000e-01 : f32
    %458 = vector.broadcast %cst_138 : f32 to vector<8x32xf32>
    %459 = arith.mulf %458, %457 : vector<8x32xf32>
    %cst_139 = arith.constant 5.000000e-01 : f32
    %460 = vector.broadcast %cst_139 : f32 to vector<8x32xf32>
    %461 = arith.addf %459, %460 : vector<8x32xf32>
    %462 = vector.extract_strided_slice %451 {offsets = [0, 64], sizes = [8, 32], strides = [1, 1]} : vector<8x128xf32> to vector<8x32xf32>
    %463 = vector.extract_strided_slice %451 {offsets = [0, 96], sizes = [8, 32], strides = [1, 1]} : vector<8x128xf32> to vector<8x32xf32>
    %cst_140 = arith.constant 5.000000e-01 : f32
    %464 = vector.broadcast %cst_140 : f32 to vector<8x32xf32>
    %465 = arith.mulf %464, %463 : vector<8x32xf32>
    %cst_141 = arith.constant 5.000000e-01 : f32
    %466 = vector.broadcast %cst_141 : f32 to vector<8x32xf32>
    %467 = arith.addf %465, %466 : vector<8x32xf32>
    %468 = arith.mulf %461, %393 : vector<8x32xf32>
    %469 = arith.mulf %456, %462 : vector<8x32xf32>
    %470 = arith.addf %468, %469 : vector<8x32xf32>
    %471 = math.tanh %470 : vector<8x32xf32>
    %472 = arith.mulf %467, %471 : vector<8x32xf32>
    %473 = vector.extract_strided_slice %5 {offsets = [56, 0], sizes = [8, 128], strides = [1, 1]} : vector<64x128xf32> to vector<8x128xf32>
    %cst_142 = arith.constant dense<0.000000e+00> : vector<8x128xf32>
    %474 = tpu.matmul %420, %6, %cst_142 {dimension_numbers = #tpu.dot_dimension_numbers<[1], [0], [0], [1], [0, 0, 1, 1], [], []>} : vector<8x32xf32>, vector<32x128xf32>, vector<8x128xf32> -> vector<8x128xf32>
    %475 = arith.addf %473, %474 : vector<8x128xf32>
    %476 = math.tanh %475 : vector<8x128xf32>
    %477 = vector.extract_strided_slice %476 {offsets = [0, 0], sizes = [8, 32], strides = [1, 1]} : vector<8x128xf32> to vector<8x32xf32>
    %cst_143 = arith.constant 5.000000e-01 : f32
    %478 = vector.broadcast %cst_143 : f32 to vector<8x32xf32>
    %479 = arith.mulf %478, %477 : vector<8x32xf32>
    %cst_144 = arith.constant 5.000000e-01 : f32
    %480 = vector.broadcast %cst_144 : f32 to vector<8x32xf32>
    %481 = arith.addf %479, %480 : vector<8x32xf32>
    %482 = vector.extract_strided_slice %476 {offsets = [0, 32], sizes = [8, 32], strides = [1, 1]} : vector<8x128xf32> to vector<8x32xf32>
    %cst_145 = arith.constant 5.000000e-01 : f32
    %483 = vector.broadcast %cst_145 : f32 to vector<8x32xf32>
    %484 = arith.mulf %483, %482 : vector<8x32xf32>
    %cst_146 = arith.constant 5.000000e-01 : f32
    %485 = vector.broadcast %cst_146 : f32 to vector<8x32xf32>
    %486 = arith.addf %484, %485 : vector<8x32xf32>
    %487 = vector.extract_strided_slice %476 {offsets = [0, 64], sizes = [8, 32], strides = [1, 1]} : vector<8x128xf32> to vector<8x32xf32>
    %488 = vector.extract_strided_slice %476 {offsets = [0, 96], sizes = [8, 32], strides = [1, 1]} : vector<8x128xf32> to vector<8x32xf32>
    %cst_147 = arith.constant 5.000000e-01 : f32
    %489 = vector.broadcast %cst_147 : f32 to vector<8x32xf32>
    %490 = arith.mulf %489, %488 : vector<8x32xf32>
    %cst_148 = arith.constant 5.000000e-01 : f32
    %491 = vector.broadcast %cst_148 : f32 to vector<8x32xf32>
    %492 = arith.addf %490, %491 : vector<8x32xf32>
    %493 = arith.mulf %486, %418 : vector<8x32xf32>
    %494 = arith.mulf %481, %487 : vector<8x32xf32>
    %495 = arith.addf %493, %494 : vector<8x32xf32>
    %496 = math.tanh %495 : vector<8x32xf32>
    %497 = arith.mulf %492, %496 : vector<8x32xf32>
    %498 = tpu.concatenate %420, %446 in 1 : vector<8x32xf32>, vector<8x32xf32> -> vector<8x64xf32>
    %cst_149 = arith.constant dense<0.000000e+00> : vector<8x128xf32>
    %499 = tpu.matmul %498, %7, %cst_149 {dimension_numbers = #tpu.dot_dimension_numbers<[1], [0], [0], [1], [0, 0, 1, 1], [], []>} : vector<8x64xf32>, vector<64x128xf32>, vector<8x128xf32> -> vector<8x128xf32>
    %500 = vector.broadcast %9 : vector<1x128xf32> to vector<8x128xf32>
    %501 = arith.addf %499, %500 : vector<8x128xf32>
    %502 = math.tanh %501 : vector<8x128xf32>
    %503 = vector.extract_strided_slice %502 {offsets = [0, 0], sizes = [8, 32], strides = [1, 1]} : vector<8x128xf32> to vector<8x32xf32>
    %cst_150 = arith.constant 5.000000e-01 : f32
    %504 = vector.broadcast %cst_150 : f32 to vector<8x32xf32>
    %505 = arith.mulf %504, %503 : vector<8x32xf32>
    %cst_151 = arith.constant 5.000000e-01 : f32
    %506 = vector.broadcast %cst_151 : f32 to vector<8x32xf32>
    %507 = arith.addf %505, %506 : vector<8x32xf32>
    %508 = vector.extract_strided_slice %502 {offsets = [0, 32], sizes = [8, 32], strides = [1, 1]} : vector<8x128xf32> to vector<8x32xf32>
    %cst_152 = arith.constant 5.000000e-01 : f32
    %509 = vector.broadcast %cst_152 : f32 to vector<8x32xf32>
    %510 = arith.mulf %509, %508 : vector<8x32xf32>
    %cst_153 = arith.constant 5.000000e-01 : f32
    %511 = vector.broadcast %cst_153 : f32 to vector<8x32xf32>
    %512 = arith.addf %510, %511 : vector<8x32xf32>
    %513 = vector.extract_strided_slice %502 {offsets = [0, 64], sizes = [8, 32], strides = [1, 1]} : vector<8x128xf32> to vector<8x32xf32>
    %514 = vector.extract_strided_slice %502 {offsets = [0, 96], sizes = [8, 32], strides = [1, 1]} : vector<8x128xf32> to vector<8x32xf32>
    %cst_154 = arith.constant 5.000000e-01 : f32
    %515 = vector.broadcast %cst_154 : f32 to vector<8x32xf32>
    %516 = arith.mulf %515, %514 : vector<8x32xf32>
    %cst_155 = arith.constant 5.000000e-01 : f32
    %517 = vector.broadcast %cst_155 : f32 to vector<8x32xf32>
    %518 = arith.addf %516, %517 : vector<8x32xf32>
    %519 = arith.mulf %512, %444 : vector<8x32xf32>
    %520 = arith.mulf %507, %513 : vector<8x32xf32>
    %521 = arith.addf %519, %520 : vector<8x32xf32>
    %522 = math.tanh %521 : vector<8x32xf32>
    %523 = arith.mulf %518, %522 : vector<8x32xf32>
    %524 = tpu.concatenate %446, %472 in 1 : vector<8x32xf32>, vector<8x32xf32> -> vector<8x64xf32>
    %cst_156 = arith.constant dense<0.000000e+00> : vector<8x128xf32>
    %525 = tpu.matmul %524, %8, %cst_156 {dimension_numbers = #tpu.dot_dimension_numbers<[1], [0], [0], [1], [0, 0, 1, 1], [], []>} : vector<8x64xf32>, vector<64x128xf32>, vector<8x128xf32> -> vector<8x128xf32>
    %526 = vector.broadcast %10 : vector<1x128xf32> to vector<8x128xf32>
    %527 = arith.addf %525, %526 : vector<8x128xf32>
    %528 = math.tanh %527 : vector<8x128xf32>
    %529 = vector.extract_strided_slice %528 {offsets = [0, 0], sizes = [8, 32], strides = [1, 1]} : vector<8x128xf32> to vector<8x32xf32>
    %cst_157 = arith.constant 5.000000e-01 : f32
    %530 = vector.broadcast %cst_157 : f32 to vector<8x32xf32>
    %531 = arith.mulf %530, %529 : vector<8x32xf32>
    %cst_158 = arith.constant 5.000000e-01 : f32
    %532 = vector.broadcast %cst_158 : f32 to vector<8x32xf32>
    %533 = arith.addf %531, %532 : vector<8x32xf32>
    %534 = vector.extract_strided_slice %528 {offsets = [0, 32], sizes = [8, 32], strides = [1, 1]} : vector<8x128xf32> to vector<8x32xf32>
    %cst_159 = arith.constant 5.000000e-01 : f32
    %535 = vector.broadcast %cst_159 : f32 to vector<8x32xf32>
    %536 = arith.mulf %535, %534 : vector<8x32xf32>
    %cst_160 = arith.constant 5.000000e-01 : f32
    %537 = vector.broadcast %cst_160 : f32 to vector<8x32xf32>
    %538 = arith.addf %536, %537 : vector<8x32xf32>
    %539 = vector.extract_strided_slice %528 {offsets = [0, 64], sizes = [8, 32], strides = [1, 1]} : vector<8x128xf32> to vector<8x32xf32>
    %540 = vector.extract_strided_slice %528 {offsets = [0, 96], sizes = [8, 32], strides = [1, 1]} : vector<8x128xf32> to vector<8x32xf32>
    %cst_161 = arith.constant 5.000000e-01 : f32
    %541 = vector.broadcast %cst_161 : f32 to vector<8x32xf32>
    %542 = arith.mulf %541, %540 : vector<8x32xf32>
    %cst_162 = arith.constant 5.000000e-01 : f32
    %543 = vector.broadcast %cst_162 : f32 to vector<8x32xf32>
    %544 = arith.addf %542, %543 : vector<8x32xf32>
    %545 = arith.mulf %538, %470 : vector<8x32xf32>
    %546 = arith.mulf %533, %539 : vector<8x32xf32>
    %547 = arith.addf %545, %546 : vector<8x32xf32>
    %548 = math.tanh %547 : vector<8x32xf32>
    %549 = arith.mulf %544, %548 : vector<8x32xf32>
    %550 = tpu.concatenate %497, %523 in 1 : vector<8x32xf32>, vector<8x32xf32> -> vector<8x64xf32>
    %cst_163 = arith.constant dense<0.000000e+00> : vector<8x128xf32>
    %551 = tpu.matmul %550, %7, %cst_163 {dimension_numbers = #tpu.dot_dimension_numbers<[1], [0], [0], [1], [0, 0, 1, 1], [], []>} : vector<8x64xf32>, vector<64x128xf32>, vector<8x128xf32> -> vector<8x128xf32>
    %552 = vector.broadcast %9 : vector<1x128xf32> to vector<8x128xf32>
    %553 = arith.addf %551, %552 : vector<8x128xf32>
    %554 = math.tanh %553 : vector<8x128xf32>
    %555 = vector.extract_strided_slice %554 {offsets = [0, 0], sizes = [8, 32], strides = [1, 1]} : vector<8x128xf32> to vector<8x32xf32>
    %cst_164 = arith.constant 5.000000e-01 : f32
    %556 = vector.broadcast %cst_164 : f32 to vector<8x32xf32>
    %557 = arith.mulf %556, %555 : vector<8x32xf32>
    %cst_165 = arith.constant 5.000000e-01 : f32
    %558 = vector.broadcast %cst_165 : f32 to vector<8x32xf32>
    %559 = arith.addf %557, %558 : vector<8x32xf32>
    %560 = vector.extract_strided_slice %554 {offsets = [0, 32], sizes = [8, 32], strides = [1, 1]} : vector<8x128xf32> to vector<8x32xf32>
    %cst_166 = arith.constant 5.000000e-01 : f32
    %561 = vector.broadcast %cst_166 : f32 to vector<8x32xf32>
    %562 = arith.mulf %561, %560 : vector<8x32xf32>
    %cst_167 = arith.constant 5.000000e-01 : f32
    %563 = vector.broadcast %cst_167 : f32 to vector<8x32xf32>
    %564 = arith.addf %562, %563 : vector<8x32xf32>
    %565 = vector.extract_strided_slice %554 {offsets = [0, 64], sizes = [8, 32], strides = [1, 1]} : vector<8x128xf32> to vector<8x32xf32>
    %566 = vector.extract_strided_slice %554 {offsets = [0, 96], sizes = [8, 32], strides = [1, 1]} : vector<8x128xf32> to vector<8x32xf32>
    %cst_168 = arith.constant 5.000000e-01 : f32
    %567 = vector.broadcast %cst_168 : f32 to vector<8x32xf32>
    %568 = arith.mulf %567, %566 : vector<8x32xf32>
    %cst_169 = arith.constant 5.000000e-01 : f32
    %569 = vector.broadcast %cst_169 : f32 to vector<8x32xf32>
    %570 = arith.addf %568, %569 : vector<8x32xf32>
    %571 = arith.mulf %564, %521 : vector<8x32xf32>
    %572 = arith.mulf %559, %565 : vector<8x32xf32>
    %573 = arith.addf %571, %572 : vector<8x32xf32>
    %574 = math.tanh %573 : vector<8x32xf32>
    %575 = arith.mulf %570, %574 : vector<8x32xf32>
    %576 = tpu.concatenate %523, %549 in 1 : vector<8x32xf32>, vector<8x32xf32> -> vector<8x64xf32>
    %cst_170 = arith.constant dense<0.000000e+00> : vector<8x128xf32>
    %577 = tpu.matmul %576, %8, %cst_170 {dimension_numbers = #tpu.dot_dimension_numbers<[1], [0], [0], [1], [0, 0, 1, 1], [], []>} : vector<8x64xf32>, vector<64x128xf32>, vector<8x128xf32> -> vector<8x128xf32>
    %578 = vector.broadcast %10 : vector<1x128xf32> to vector<8x128xf32>
    %579 = arith.addf %577, %578 : vector<8x128xf32>
    %580 = math.tanh %579 : vector<8x128xf32>
    %581 = vector.extract_strided_slice %580 {offsets = [0, 0], sizes = [8, 32], strides = [1, 1]} : vector<8x128xf32> to vector<8x32xf32>
    %cst_171 = arith.constant 5.000000e-01 : f32
    %582 = vector.broadcast %cst_171 : f32 to vector<8x32xf32>
    %583 = arith.mulf %582, %581 : vector<8x32xf32>
    %cst_172 = arith.constant 5.000000e-01 : f32
    %584 = vector.broadcast %cst_172 : f32 to vector<8x32xf32>
    %585 = arith.addf %583, %584 : vector<8x32xf32>
    %586 = vector.extract_strided_slice %580 {offsets = [0, 32], sizes = [8, 32], strides = [1, 1]} : vector<8x128xf32> to vector<8x32xf32>
    %cst_173 = arith.constant 5.000000e-01 : f32
    %587 = vector.broadcast %cst_173 : f32 to vector<8x32xf32>
    %588 = arith.mulf %587, %586 : vector<8x32xf32>
    %cst_174 = arith.constant 5.000000e-01 : f32
    %589 = vector.broadcast %cst_174 : f32 to vector<8x32xf32>
    %590 = arith.addf %588, %589 : vector<8x32xf32>
    %591 = vector.extract_strided_slice %580 {offsets = [0, 64], sizes = [8, 32], strides = [1, 1]} : vector<8x128xf32> to vector<8x32xf32>
    %592 = vector.extract_strided_slice %580 {offsets = [0, 96], sizes = [8, 32], strides = [1, 1]} : vector<8x128xf32> to vector<8x32xf32>
    %cst_175 = arith.constant 5.000000e-01 : f32
    %593 = vector.broadcast %cst_175 : f32 to vector<8x32xf32>
    %594 = arith.mulf %593, %592 : vector<8x32xf32>
    %cst_176 = arith.constant 5.000000e-01 : f32
    %595 = vector.broadcast %cst_176 : f32 to vector<8x32xf32>
    %596 = arith.addf %594, %595 : vector<8x32xf32>
    %597 = arith.mulf %590, %547 : vector<8x32xf32>
    %598 = arith.mulf %585, %591 : vector<8x32xf32>
    %599 = arith.addf %597, %598 : vector<8x32xf32>
    %600 = math.tanh %599 : vector<8x32xf32>
    %601 = arith.mulf %596, %600 : vector<8x32xf32>
    %602 = tpu.concatenate %575, %601 in 1 : vector<8x32xf32>, vector<8x32xf32> -> vector<8x64xf32>
    %cst_177 = arith.constant dense<0.000000e+00> : vector<8x128xf32>
    %603 = tpu.matmul %602, %8, %cst_177 {dimension_numbers = #tpu.dot_dimension_numbers<[1], [0], [0], [1], [0, 0, 1, 1], [], []>} : vector<8x64xf32>, vector<64x128xf32>, vector<8x128xf32> -> vector<8x128xf32>
    %604 = vector.broadcast %10 : vector<1x128xf32> to vector<8x128xf32>
    %605 = arith.addf %603, %604 : vector<8x128xf32>
    %606 = math.tanh %605 : vector<8x128xf32>
    %607 = vector.extract_strided_slice %606 {offsets = [0, 0], sizes = [8, 32], strides = [1, 1]} : vector<8x128xf32> to vector<8x32xf32>
    %cst_178 = arith.constant 5.000000e-01 : f32
    %608 = vector.broadcast %cst_178 : f32 to vector<8x32xf32>
    %609 = arith.mulf %608, %607 : vector<8x32xf32>
    %cst_179 = arith.constant 5.000000e-01 : f32
    %610 = vector.broadcast %cst_179 : f32 to vector<8x32xf32>
    %611 = arith.addf %609, %610 : vector<8x32xf32>
    %612 = vector.extract_strided_slice %606 {offsets = [0, 32], sizes = [8, 32], strides = [1, 1]} : vector<8x128xf32> to vector<8x32xf32>
    %cst_180 = arith.constant 5.000000e-01 : f32
    %613 = vector.broadcast %cst_180 : f32 to vector<8x32xf32>
    %614 = arith.mulf %613, %612 : vector<8x32xf32>
    %cst_181 = arith.constant 5.000000e-01 : f32
    %615 = vector.broadcast %cst_181 : f32 to vector<8x32xf32>
    %616 = arith.addf %614, %615 : vector<8x32xf32>
    %617 = vector.extract_strided_slice %606 {offsets = [0, 64], sizes = [8, 32], strides = [1, 1]} : vector<8x128xf32> to vector<8x32xf32>
    %618 = vector.extract_strided_slice %606 {offsets = [0, 96], sizes = [8, 32], strides = [1, 1]} : vector<8x128xf32> to vector<8x32xf32>
    %cst_182 = arith.constant 5.000000e-01 : f32
    %619 = vector.broadcast %cst_182 : f32 to vector<8x32xf32>
    %620 = arith.mulf %619, %618 : vector<8x32xf32>
    %cst_183 = arith.constant 5.000000e-01 : f32
    %621 = vector.broadcast %cst_183 : f32 to vector<8x32xf32>
    %622 = arith.addf %620, %621 : vector<8x32xf32>
    %623 = arith.mulf %616, %599 : vector<8x32xf32>
    %624 = arith.mulf %611, %617 : vector<8x32xf32>
    %625 = arith.addf %623, %624 : vector<8x32xf32>
    %626 = math.tanh %625 : vector<8x32xf32>
    %627 = arith.mulf %622, %626 : vector<8x32xf32>
    %c0_184 = arith.constant 0 : index
    %c0_185 = arith.constant 0 : index
    %628 = vector.load %arg8[%c0_184, %c0_185] : memref<32x16xf32, #tpu.memory_space<vmem>>, vector<32x16xf32>
    %cst_186 = arith.constant dense<0.000000e+00> : vector<8x16xf32>
    %629 = tpu.matmul %627, %628, %cst_186 {dimension_numbers = #tpu.dot_dimension_numbers<[1], [0], [0], [1], [0, 0, 1, 1], [], []>} : vector<8x32xf32>, vector<32x16xf32>, vector<8x16xf32> -> vector<8x16xf32>
    %c0_187 = arith.constant 0 : index
    %c0_188 = arith.constant 0 : index
    %630 = vector.load %arg9[%c0_187, %c0_188] : memref<1x16xf32, #tpu.memory_space<vmem>>, vector<1x16xf32>
    %631 = vector.broadcast %630 : vector<1x16xf32> to vector<8x16xf32>
    %632 = arith.addf %629, %631 : vector<8x16xf32>
    %cst_189 = arith.constant 0.000000e+00 : f32
    %633 = vector.broadcast %cst_189 : f32 to vector<8x16xf32>
    %634 = arith.maximumf %632, %633 : vector<8x16xf32>
    %c0_190 = arith.constant 0 : index
    %c0_191 = arith.constant 0 : index
    %635 = vector.load %arg10[%c0_190, %c0_191] : memref<16x5xf32, #tpu.memory_space<vmem>>, vector<16x5xf32>
    %cst_192 = arith.constant dense<0.000000e+00> : vector<8x5xf32>
    %636 = tpu.matmul %634, %635, %cst_192 {dimension_numbers = #tpu.dot_dimension_numbers<[1], [0], [0], [1], [0, 0, 1, 1], [], []>} : vector<8x16xf32>, vector<16x5xf32>, vector<8x5xf32> -> vector<8x5xf32>
    %c0_193 = arith.constant 0 : index
    %c0_194 = arith.constant 0 : index
    %637 = vector.load %arg11[%c0_193, %c0_194] : memref<1x5xf32, #tpu.memory_space<vmem>>, vector<1x5xf32>
    %638 = vector.broadcast %637 : vector<1x5xf32> to vector<8x5xf32>
    %639 = arith.addf %636, %638 : vector<8x5xf32>
    %c0_195 = arith.constant 0 : index
    %c0_196 = arith.constant 0 : index
    %640 = vector.load %arg12[%c0_195, %c0_196] : memref<8x5xf32, #tpu.memory_space<vmem>>, vector<8x5xf32>
    tpu.vector_store %arg12[%c0_195, %c0_196], %639 {strides = array<i32>} : memref<8x5xf32, #tpu.memory_space<vmem>>, vector<8x5xf32>,
    return
  }
}

</mosaic_0001>

<llo_original>
// kernel: lstm_model_forward.1
$region0: #{lstm_model_forward.1}
  #allocation0 [shape = 'u32[]', space=smem, size = 0x4, offset = 0x4, fixed_abs, tag = 'smem constant byte address 0x4 - core index']
  #allocation1 [shape = 'u32[144,128]{1,0:T(1,128)}', space=vmem, size = 0x12000, scoped, tag = 'internal scratch']
  %s0 = inlined_call_operand.vmem [shape: f32[64,16], index: 0, kind: input, shape index: {}]
  %s1 = inlined_call_operand.vmem [shape: f32[16,128], index: 1, kind: input, shape index: {}]
  %s2 = inlined_call_operand.vmem [shape: f32[32,128], index: 2, kind: input, shape index: {}]
  %s3 = inlined_call_operand.vmem [shape: f32[1,128], index: 3, kind: input, shape index: {}]
  %s4 = inlined_call_operand.vmem [shape: f32[64,128], index: 4, kind: input, shape index: {}]
  %s5 = inlined_call_operand.vmem [shape: f32[1,128], index: 5, kind: input, shape index: {}]
  %s6 = inlined_call_operand.vmem [shape: f32[64,128], index: 6, kind: input, shape index: {}]
  %s7 = inlined_call_operand.vmem [shape: f32[1,128], index: 7, kind: input, shape index: {}]
  %s8 = inlined_call_operand.vmem [shape: f32[32,16], index: 8, kind: input, shape index: {}]
  %s9 = inlined_call_operand.vmem [shape: f32[1,16], index: 9, kind: input, shape index: {}]
  %s10 = inlined_call_operand.vmem [shape: f32[16,5], index: 10, kind: input, shape index: {}]
  %s11 = inlined_call_operand.vmem [shape: f32[1,5], index: 11, kind: input, shape index: {}]
  %s12 = inlined_call_operand.vmem [shape: f32[8,5], index: 12, kind: output, shape index: {}]
  %s13 = sld [smem:[#allocation0]]
  $region58: #{lstm_model_forward.1} parent=0
    _
  %s15 = ssub.s32 1, %s13
  %s16 = scalar_select 0, %s15, %s13
  // Predicated region
  $region2: #{lstm_model_forward.1} parent=0 // pred_check
    _
  $region3: #{lstm_model_forward.1} parent=0 // pred_check_branch
    %18 = sbr.rel (0) target = $region5
  $region4: #{lstm_model_forward.1} parent=0 // pred_region
    _
  $region5: #{lstm_model_forward.1} parent=0 // pred_fallthru
    _
  // Predicated region
  $region6: #{lstm_model_forward.1} parent=0 // pred_check
    _
  $region7: #{lstm_model_forward.1} parent=0 // pred_check_branch
    %20 = sbr.rel (0) target = $region9
  $region8: #{lstm_model_forward.1} parent=0 // pred_region
    _
  $region9: #{lstm_model_forward.1} parent=0 // pred_fallthru
    _
  // Predicated region
  $region10: #{lstm_model_forward.1} parent=0 // pred_check
    _
  $region11: #{lstm_model_forward.1} parent=0 // pred_check_branch
    %22 = sbr.rel (0) target = $region13
  $region12: #{lstm_model_forward.1} parent=0 // pred_region
    _
  $region13: #{lstm_model_forward.1} parent=0 // pred_fallthru
    _
  // Predicated region
  $region14: #{lstm_model_forward.1} parent=0 // pred_check
    _
  $region15: #{lstm_model_forward.1} parent=0 // pred_check_branch
    %24 = sbr.rel (0) target = $region17
  $region16: #{lstm_model_forward.1} parent=0 // pred_region
    _
  $region17: #{lstm_model_forward.1} parent=0 // pred_fallthru
    _
  // Predicated region
  $region18: #{lstm_model_forward.1} parent=0 // pred_check
    _
  $region19: #{lstm_model_forward.1} parent=0 // pred_check_branch
    %26 = sbr.rel (0) target = $region21
  $region20: #{lstm_model_forward.1} parent=0 // pred_region
    _
  $region21: #{lstm_model_forward.1} parent=0 // pred_fallthru
    _
  // Predicated region
  $region22: #{lstm_model_forward.1} parent=0 // pred_check
    _
  $region23: #{lstm_model_forward.1} parent=0 // pred_check_branch
    %28 = sbr.rel (0) target = $region25
  $region24: #{lstm_model_forward.1} parent=0 // pred_region
    _
  $region25: #{lstm_model_forward.1} parent=0 // pred_fallthru
    _
  // Predicated region
  $region26: #{lstm_model_forward.1} parent=0 // pred_check
    _
  $region27: #{lstm_model_forward.1} parent=0 // pred_check_branch
    %30 = sbr.rel (0) target = $region29
  $region28: #{lstm_model_forward.1} parent=0 // pred_region
    _
  $region29: #{lstm_model_forward.1} parent=0 // pred_fallthru
    _
  // Predicated region
  $region30: #{lstm_model_forward.1} parent=0 // pred_check
    _
  $region31: #{lstm_model_forward.1} parent=0 // pred_check_branch
    %32 = sbr.rel (0) target = $region33
  $region32: #{lstm_model_forward.1} parent=0 // pred_region
    _
  $region33: #{lstm_model_forward.1} parent=0 // pred_fallthru
    _
  // Predicated region
  $region34: #{lstm_model_forward.1} parent=0 // pred_check
    _
  $region35: #{lstm_model_forward.1} parent=0 // pred_check_branch
    %34 = sbr.rel (0) target = $region37
  $region36: #{lstm_model_forward.1} parent=0 // pred_region
    _
  $region37: #{lstm_model_forward.1} parent=0 // pred_fallthru
    _
  // Predicated region
  $region38: #{lstm_model_forward.1} parent=0 // pred_check
    _
  $region39: #{lstm_model_forward.1} parent=0 // pred_check_branch
    %36 = sbr.rel (0) target = $region41
  $region40: #{lstm_model_forward.1} parent=0 // pred_region
    _
  $region41: #{lstm_model_forward.1} parent=0 // pred_fallthru
    _
  // Predicated region
  $region42: #{lstm_model_forward.1} parent=0 // pred_check
    _
  $region43: #{lstm_model_forward.1} parent=0 // pred_check_branch
    %38 = sbr.rel (0) target = $region45
  $region44: #{lstm_model_forward.1} parent=0 // pred_region
    _
  $region45: #{lstm_model_forward.1} parent=0 // pred_fallthru
    _
  // Predicated region
  $region46: #{lstm_model_forward.1} parent=0 // pred_check
    _
  $region47: #{lstm_model_forward.1} parent=0 // pred_check_branch
    %40 = sbr.rel (0) target = $region49
  $region48: #{lstm_model_forward.1} parent=0 // pred_region
    _
  $region49: #{lstm_model_forward.1} parent=0 // pred_fallthru
    _
  %v41 = vld [vmem:[%s0] sm:$0xff]
  %v42 = vld [vmem:[%s0 + $0x8] sm:$0xff]
  %v43 = vld [vmem:[%s0 + $0x10] sm:$0xff]
  %v44 = vld [vmem:[%s0 + $0x18] sm:$0xff]
  %v45 = vld [vmem:[%s0 + $0x20] sm:$0xff]
  %v46 = vld [vmem:[%s0 + $0x28] sm:$0xff]
  %v47 = vld [vmem:[%s0 + $0x30] sm:$0xff]
  %v48 = vld [vmem:[%s0 + $0x38] sm:$0xff]
  %v49 = vld [vmem:[%s1] sm:$0xff]
  %v50 = vld [vmem:[%s1 + $0x8] sm:$0xff]
  %v51 = vld [vmem:[%s3] sm:$0x1]
  %v53 = vlaneseq
  %v54 = vshrl.u32 %v53, 7
  %v55 = vsub.s32 0, %v54
  %v56 = vrot.slane %v51, %v55
  %vm58 = vcmask 130048
  %v60 = vsel %vm58, %v41, 0
  %v63 = vsel %vm58, %v42, 0
  %v66 = vsel %vm58, %v43, 0
  %v69 = vsel %vm58, %v44, 0
  %v72 = vsel %vm58, %v45, 0
  %v75 = vsel %vm58, %v46, 0
  %v78 = vsel %vm58, %v47, 0
  %v81 = vsel %vm58, %v48, 0
  %83 = vmatprep.subr.mxu0 0.0
  %84 = vmatpush1.msra.mxu0 %v49
  %85 = vmatprep.subr.mxu0 0.0
  %86 = vmatpush1.msra.mxu0 %v50
  %87 = vmatprep.subr.mxu0 0.0
  %88 = vmatpush1.msra.mxu0 0.0
  %89 = vmatprep.subr.mxu0 0.0
  %90 = vmatpush1.msra.mxu0 0.0
  %91 = vmatprep.subr.mxu0 0.0
  %92 = vmatpush1.msra.mxu0 0.0
  %93 = vmatprep.subr.mxu0 0.0
  %94 = vmatpush1.msra.mxu0 0.0
  %95 = vmatprep.subr.mxu0 0.0
  %96 = vmatpush1.msra.mxu0 0.0
  %97 = vmatprep.subr.mxu0 0.0
  %98 = vmatpush1.msra.mxu0 0.0
  %99 = vmatprep.subr.mxu0 0.0
  %100 = vmatpush1.msra.mxu0 0.0
  %101 = vmatprep.subr.mxu0 0.0
  %102 = vmatpush1.msra.mxu0 0.0
  %103 = vmatprep.subr.mxu0 0.0
  %104 = vmatpush1.msra.mxu0 0.0
  %105 = vmatprep.subr.mxu0 0.0
  %106 = vmatpush1.msra.mxu0 0.0
  %107 = vmatprep.subr.mxu0 0.0
  %108 = vmatpush1.msra.mxu0 0.0
  %109 = vmatprep.subr.mxu0 0.0
  %110 = vmatpush1.msra.mxu0 0.0
  %111 = vmatprep.subr.mxu0 0.0
  %112 = vmatpush1.msra.mxu0 0.0
  %113 = vmatprep.subr.mxu0 0.0
  %114 = vmatpush1.msra.mxu0 0.0
  %115 = vmatprep.subr.mxu0 0.0
  %116 = vmatpush1.msra.mxu0 0.0
  %117 = vmatprep.subr.mxu0 0.0
  %118 = vmatpush1.msra.mxu0 0.0
  %119 = vmatprep.subr.mxu0 0.0
  %120 = vmatpush1.msra.mxu0 0.0
  %121 = vmatprep.subr.mxu0 0.0
  %122 = vmatpush1.msra.mxu0 0.0
  %123 = vmatprep.subr.mxu0 0.0
  %124 = vmatpush1.msra.mxu0 0.0
  %125 = vmatprep.subr.mxu0 0.0
  %126 = vmatpush1.msra.mxu0 0.0
  %127 = vmatprep.subr.mxu0 0.0
  %128 = vmatpush1.msra.mxu0 0.0
  %129 = vmatprep.subr.mxu0 0.0
  %130 = vmatpush1.msra.mxu0 0.0
  %131 = vmatprep.subr.mxu0 0.0
  %132 = vmatpush1.msra.mxu0 0.0
  %133 = vmatprep.subr.mxu0 0.0
  %134 = vmatpush1.msra.mxu0 0.0
  %135 = vmatprep.subr.mxu0 0.0
  %136 = vmatpush1.msra.mxu0 0.0
  %137 = vmatprep.subr.mxu0 0.0
  %138 = vmatpush1.msra.mxu0 0.0
  %139 = vmatprep.subr.mxu0 0.0
  %140 = vmatpush1.msra.mxu0 0.0
  %141 = vmatprep.subr.mxu0 0.0
  %142 = vmatpush1.msra.mxu0 0.0
  %143 = vmatprep.subr.mxu0 0.0
  %144 = vmatpush1.msra.mxu0 0.0
  %145 = vmatprep.subr.mxu0 0.0
  %146 = vmatpush1.msra.mxu0 0.0
  %147 = vmatprep.mubr.f32.mxu0 0.0
  %148 = vmatmul.mubr.f32.gmra.mrb[0].mxu0 %v60
  %v149 = vpop.f32.mrb[0].mxu0
  %v150 = vadd.f32 %v56, %v149
  %v151 = vpop.f32.mrb[0].mxu0
  %152 = vmatprep.mubr.f32.mxu0 0.0
  %153 = vmatmul.mubr.f32.gmra.mrb[0].mxu0 %v63
  %v154 = vpop.f32.mrb[0].mxu0
  %v155 = vadd.f32 %v56, %v154
  %v156 = vpop.f32.mrb[0].mxu0
  %157 = vmatprep.mubr.f32.mxu0 0.0
  %158 = vmatmul.mubr.f32.gmra.mrb[0].mxu0 %v66
  %v159 = vpop.f32.mrb[0].mxu0
  %v160 = vadd.f32 %v56, %v159
  %v161 = vpop.f32.mrb[0].mxu0
  %162 = vmatprep.mubr.f32.mxu0 0.0
  %163 = vmatmul.mubr.f32.gmra.mrb[0].mxu0 %v69
  %v164 = vpop.f32.mrb[0].mxu0
  %v165 = vadd.f32 %v56, %v164
  %v166 = vpop.f32.mrb[0].mxu0
  %167 = vmatprep.mubr.f32.mxu0 0.0
  %168 = vmatmul.mubr.f32.gmra.mrb[0].mxu0 %v72
  %v169 = vpop.f32.mrb[0].mxu0
  %v170 = vadd.f32 %v56, %v169
  %v171 = vpop.f32.mrb[0].mxu0
  %172 = vmatprep.mubr.f32.mxu0 0.0
  %173 = vmatmul.mubr.f32.gmra.mrb[0].mxu0 %v75
  %v174 = vpop.f32.mrb[0].mxu0
  %v175 = vadd.f32 %v56, %v174
  %v176 = vpop.f32.mrb[0].mxu0
  %177 = vmatprep.mubr.f32.mxu0 0.0
  %178 = vmatmul.mubr.f32.gmra.mrb[0].mxu0 %v78
  %v179 = vpop.f32.mrb[0].mxu0
  %v180 = vadd.f32 %v56, %v179
  %v181 = vpop.f32.mrb[0].mxu0
  %182 = vmatprep.mubr.f32.mxu0 0.0
  %183 = vmatmul.mubr.f32.gmra.mrb[0].mxu0 %v81
  %v184 = vpop.f32.mrb[0].mxu0
  %v185 = vadd.f32 %v56, %v184
  %v186 = vpop.f32.mrb[0].mxu0
  %187 = vdwg.mxu0
  %v188 = vld [vmem:[%s2] sm:$0xff]
  %v189 = vld [vmem:[%s2 + $0x8] sm:$0xff]
  %v190 = vld [vmem:[%s2 + $0x10] sm:$0xff]
  %v191 = vld [vmem:[%s2 + $0x18] sm:$0xff]
  %v192 = vld [vmem:[%s4] sm:$0xff]
  %v193 = vld [vmem:[%s4 + $0x8] sm:$0xff]
  %v194 = vld [vmem:[%s4 + $0x10] sm:$0xff]
  %v195 = vld [vmem:[%s4 + $0x18] sm:$0xff]
  %v196 = vld [vmem:[%s4 + $0x20] sm:$0xff]
  %v197 = vld [vmem:[%s4 + $0x28] sm:$0xff]
  %v198 = vld [vmem:[%s4 + $0x30] sm:$0xff]
  %v199 = vld [vmem:[%s4 + $0x38] sm:$0xff]
  %v200 = vld [vmem:[%s6] sm:$0xff]
  %v201 = vld [vmem:[%s6 + $0x8] sm:$0xff]
  %v202 = vld [vmem:[%s6 + $0x10] sm:$0xff]
  %v203 = vld [vmem:[%s6 + $0x18] sm:$0xff]
  %v204 = vld [vmem:[%s6 + $0x20] sm:$0xff]
  %v205 = vld [vmem:[%s6 + $0x28] sm:$0xff]
  %v206 = vld [vmem:[%s6 + $0x30] sm:$0xff]
  %v207 = vld [vmem:[%s6 + $0x38] sm:$0xff]
  %v208 = vld [vmem:[%s5] sm:$0x1]
  %v209 = vld [vmem:[%s7] sm:$0x1]
  %vm210 = vcmask 261120
  %v212 = vsel %vm210, 0.0, 0
  %214 = vmatprep.subr.mxu0 0.0
  %215 = vmatpush1.msra.mxu0 %v188
  %216 = vmatprep.subr.mxu0 0.0
  %217 = vmatpush1.msra.mxu0 %v189
  %218 = vmatprep.subr.mxu0 0.0
  %219 = vmatpush1.msra.mxu0 %v190
  %220 = vmatprep.subr.mxu0 0.0
  %221 = vmatpush1.msra.mxu0 %v191
  %222 = vmatprep.subr.mxu0 0.0
  %223 = vmatpush1.msra.mxu0 0.0
  %224 = vmatprep.subr.mxu0 0.0
  %225 = vmatpush1.msra.mxu0 0.0
  %226 = vmatprep.subr.mxu0 0.0
  %227 = vmatpush1.msra.mxu0 0.0
  %228 = vmatprep.subr.mxu0 0.0
  %229 = vmatpush1.msra.mxu0 0.0
  %230 = vmatprep.subr.mxu0 0.0
  %231 = vmatpush1.msra.mxu0 0.0
  %232 = vmatprep.subr.mxu0 0.0
  %233 = vmatpush1.msra.mxu0 0.0
  %234 = vmatprep.subr.mxu0 0.0
  %235 = vmatpush1.msra.mxu0 0.0
  %236 = vmatprep.subr.mxu0 0.0
  %237 = vmatpush1.msra.mxu0 0.0
  %238 = vmatprep.subr.mxu0 0.0
  %239 = vmatpush1.msra.mxu0 0.0
  %240 = vmatprep.subr.mxu0 0.0
  %241 = vmatpush1.msra.mxu0 0.0
  %242 = vmatprep.subr.mxu0 0.0
  %243 = vmatpush1.msra.mxu0 0.0
  %244 = vmatprep.subr.mxu0 0.0
  %245 = vmatpush1.msra.mxu0 0.0
  %246 = vmatprep.subr.mxu0 0.0
  %247 = vmatpush1.msra.mxu0 0.0
  %248 = vmatprep.subr.mxu0 0.0
  %249 = vmatpush1.msra.mxu0 0.0
  %250 = vmatprep.subr.mxu0 0.0
  %251 = vmatpush1.msra.mxu0 0.0
  %252 = vmatprep.subr.mxu0 0.0
  %253 = vmatpush1.msra.mxu0 0.0
  %254 = vmatprep.subr.mxu0 0.0
  %255 = vmatpush1.msra.mxu0 0.0
  %256 = vmatprep.subr.mxu0 0.0
  %257 = vmatpush1.msra.mxu0 0.0
  %258 = vmatprep.subr.mxu0 0.0
  %259 = vmatpush1.msra.mxu0 0.0
  %260 = vmatprep.subr.mxu0 0.0
  %261 = vmatpush1.msra.mxu0 0.0
  %262 = vmatprep.subr.mxu0 0.0
  %263 = vmatpush1.msra.mxu0 0.0
  %264 = vmatprep.subr.mxu0 0.0
  %265 = vmatpush1.msra.mxu0 0.0
  %266 = vmatprep.subr.mxu0 0.0
  %267 = vmatpush1.msra.mxu0 0.0
  %268 = vmatprep.subr.mxu0 0.0
  %269 = vmatpush1.msra.mxu0 0.0
  %270 = vmatprep.subr.mxu0 0.0
  %271 = vmatpush1.msra.mxu0 0.0
  %272 = vmatprep.subr.mxu0 0.0
  %273 = vmatpush1.msra.mxu0 0.0
  %274 = vmatprep.subr.mxu0 0.0
  %275 = vmatpush1.msra.mxu0 0.0
  %276 = vmatprep.subr.mxu0 0.0
  %277 = vmatpush1.msra.mxu0 0.0
  %278 = vmatprep.mubr.f32.mxu0 0.0
  %279 = vmatmul.mubr.f32.gmra.mrb[0].mxu0 %v212
  %v280 = vpop.f32.mrb[0].mxu0
  %v281 = vadd.f32 0.0, %v280
  %v282 = vpop.f32.mrb[0].mxu0
  %283 = vdwg.mxu0
  %v284 = vadd.f32 %v150, %v281
  %v285 = vtanh.pop %v284
  %v286 = vmul.f32 %v285, 0.5
  %v287 = vadd.f32 %v286, 0.5
  %v288 = vmul.f32 %v287, 0.0
  %290 = vrot.lane.b32.xlu0 %v285, 64
  %v291 = vpop.permute.xlu0 %290
  %v293 = vmul.f32 %v287, %v291
  %295 = vrot.lane.b32.xlu0 %v293, 32
  %v296 = vpop.permute.xlu0 %295
  %v298 = vadd.f32 %v288, %v296
  %v299 = vtanh.pop %v298
  %301 = vrot.lane.b32.xlu0 %v299, 64
  %v302 = vpop.permute.xlu0 %301
  %v304 = vmul.f32 %v287, %v302
  %306 = vrot.lane.b32.xlu0 %v304, 32
  %v307 = vpop.permute.xlu0 %306
  %v308 = vsel %vm210, %v307, 0
  %310 = vmatprep.subr.mxu0 0.0
  %311 = vmatpush1.msra.mxu0 %v188
  %312 = vmatprep.subr.mxu0 0.0
  %313 = vmatpush1.msra.mxu0 %v189
  %314 = vmatprep.subr.mxu0 0.0
  %315 = vmatpush1.msra.mxu0 %v190
  %316 = vmatprep.subr.mxu0 0.0
  %317 = vmatpush1.msra.mxu0 %v191
  %318 = vmatprep.subr.mxu0 0.0
  %319 = vmatpush1.msra.mxu0 0.0
  %320 = vmatprep.subr.mxu0 0.0
  %321 = vmatpush1.msra.mxu0 0.0
  %322 = vmatprep.subr.mxu0 0.0
  %323 = vmatpush1.msra.mxu0 0.0
  %324 = vmatprep.subr.mxu0 0.0
  %325 = vmatpush1.msra.mxu0 0.0
  %326 = vmatprep.subr.mxu0 0.0
  %327 = vmatpush1.msra.mxu0 0.0
  %328 = vmatprep.subr.mxu0 0.0
  %329 = vmatpush1.msra.mxu0 0.0
  %330 = vmatprep.subr.mxu0 0.0
  %331 = vmatpush1.msra.mxu0 0.0
  %332 = vmatprep.subr.mxu0 0.0
  %333 = vmatpush1.msra.mxu0 0.0
  %334 = vmatprep.subr.mxu0 0.0
  %335 = vmatpush1.msra.mxu0 0.0
  %336 = vmatprep.subr.mxu0 0.0
  %337 = vmatpush1.msra.mxu0 0.0
  %338 = vmatprep.subr.mxu0 0.0
  %339 = vmatpush1.msra.mxu0 0.0
  %340 = vmatprep.subr.mxu0 0.0
  %341 = vmatpush1.msra.mxu0 0.0
  %342 = vmatprep.subr.mxu0 0.0
  %343 = vmatpush1.msra.mxu0 0.0
  %344 = vmatprep.subr.mxu0 0.0
  %345 = vmatpush1.msra.mxu0 0.0
  %346 = vmatprep.subr.mxu0 0.0
  %347 = vmatpush1.msra.mxu0 0.0
  %348 = vmatprep.subr.mxu0 0.0
  %349 = vmatpush1.msra.mxu0 0.0
  %350 = vmatprep.subr.mxu0 0.0
  %351 = vmatpush1.msra.mxu0 0.0
  %352 = vmatprep.subr.mxu0 0.0
  %353 = vmatpush1.msra.mxu0 0.0
  %354 = vmatprep.subr.mxu0 0.0
  %355 = vmatpush1.msra.mxu0 0.0
  %356 = vmatprep.subr.mxu0 0.0
  %357 = vmatpush1.msra.mxu0 0.0
  %358 = vmatprep.subr.mxu0 0.0
  %359 = vmatpush1.msra.mxu0 0.0
  %360 = vmatprep.subr.mxu0 0.0
  %361 = vmatpush1.msra.mxu0 0.0
  %362 = vmatprep.subr.mxu0 0.0
  %363 = vmatpush1.msra.mxu0 0.0
  %364 = vmatprep.subr.mxu0 0.0
  %365 = vmatpush1.msra.mxu0 0.0
  %366 = vmatprep.subr.mxu0 0.0
  %367 = vmatpush1.msra.mxu0 0.0
  %368 = vmatprep.subr.mxu0 0.0
  %369 = vmatpush1.msra.mxu0 0.0
  %370 = vmatprep.subr.mxu0 0.0
  %371 = vmatpush1.msra.mxu0 0.0
  %372 = vmatprep.subr.mxu0 0.0
  %373 = vmatpush1.msra.mxu0 0.0
  %374 = vmatprep.mubr.f32.mxu0 0.0
  %375 = vmatmul.mubr.f32.gmra.mrb[0].mxu0 %v308
  %v376 = vpop.f32.mrb[0].mxu0
  %v377 = vadd.f32 0.0, %v376
  %v378 = vpop.f32.mrb[0].mxu0
  %379 = vdwg.mxu0
  %v380 = vadd.f32 %v155, %v377
  %v381 = vtanh.pop %v380
  %v382 = vmul.f32 %v381, 0.5
  %v383 = vadd.f32 %v382, 0.5
  %v384 = vmul.f32 %v383, %v298
  %386 = vrot.lane.b32.xlu0 %v381, 64
  %v387 = vpop.permute.xlu0 %386
  %v389 = vmul.f32 %v383, %v387
  %391 = vrot.lane.b32.xlu0 %v389, 32
  %v392 = vpop.permute.xlu0 %391
  %v394 = vadd.f32 %v384, %v392
  %v395 = vtanh.pop %v394
  %397 = vrot.lane.b32.xlu0 %v395, 64
  %v398 = vpop.permute.xlu0 %397
  %v400 = vmul.f32 %v383, %v398
  %v402 = vsel %vm210, %v307, 0.0
  %v404 = vlaneseq
  %v405 = vshrl.u32 %v404, 7
  %v406 = vsub.s32 0, %v405
  %v407 = vrot.slane %v208, %v406
  %vm409 = vcmask 523264
  %v411 = vsel %vm409, %v402, 0
  %413 = vmatprep.subr.mxu0 0.0
  %414 = vmatpush1.msra.mxu0 %v192
  %415 = vmatprep.subr.mxu0 0.0
  %416 = vmatpush1.msra.mxu0 %v193
  %417 = vmatprep.subr.mxu0 0.0
  %418 = vmatpush1.msra.mxu0 %v194
  %419 = vmatprep.subr.mxu0 0.0
  %420 = vmatpush1.msra.mxu0 %v195
  %421 = vmatprep.subr.mxu0 0.0
  %422 = vmatpush1.msra.mxu0 %v196
  %423 = vmatprep.subr.mxu0 0.0
  %424 = vmatpush1.msra.mxu0 %v197
  %425 = vmatprep.subr.mxu0 0.0
  %426 = vmatpush1.msra.mxu0 %v198
  %427 = vmatprep.subr.mxu0 0.0
  %428 = vmatpush1.msra.mxu0 %v199
  %429 = vmatprep.subr.mxu0 0.0
  %430 = vmatpush1.msra.mxu0 0.0
  %431 = vmatprep.subr.mxu0 0.0
  %432 = vmatpush1.msra.mxu0 0.0
  %433 = vmatprep.subr.mxu0 0.0
  %434 = vmatpush1.msra.mxu0 0.0
  %435 = vmatprep.subr.mxu0 0.0
  %436 = vmatpush1.msra.mxu0 0.0
  %437 = vmatprep.subr.mxu0 0.0
  %438 = vmatpush1.msra.mxu0 0.0
  %439 = vmatprep.subr.mxu0 0.0
  %440 = vmatpush1.msra.mxu0 0.0
  %441 = vmatprep.subr.mxu0 0.0
  %442 = vmatpush1.msra.mxu0 0.0
  %443 = vmatprep.subr.mxu0 0.0
  %444 = vmatpush1.msra.mxu0 0.0
  %445 = vmatprep.subr.mxu0 0.0
  %446 = vmatpush1.msra.mxu0 0.0
  %447 = vmatprep.subr.mxu0 0.0
  %448 = vmatpush1.msra.mxu0 0.0
  %449 = vmatprep.subr.mxu0 0.0
  %450 = vmatpush1.msra.mxu0 0.0
  %451 = vmatprep.subr.mxu0 0.0
  %452 = vmatpush1.msra.mxu0 0.0
  %453 = vmatprep.subr.mxu0 0.0
  %454 = vmatpush1.msra.mxu0 0.0
  %455 = vmatprep.subr.mxu0 0.0
  %456 = vmatpush1.msra.mxu0 0.0
  %457 = vmatprep.subr.mxu0 0.0
  %458 = vmatpush1.msra.mxu0 0.0
  %459 = vmatprep.subr.mxu0 0.0
  %460 = vmatpush1.msra.mxu0 0.0
  %461 = vmatprep.subr.mxu0 0.0
  %462 = vmatpush1.msra.mxu0 0.0
  %463 = vmatprep.subr.mxu0 0.0
  %464 = vmatpush1.msra.mxu0 0.0
  %465 = vmatprep.subr.mxu0 0.0
  %466 = vmatpush1.msra.mxu0 0.0
  %467 = vmatprep.subr.mxu0 0.0
  %468 = vmatpush1.msra.mxu0 0.0
  %469 = vmatprep.subr.mxu0 0.0
  %470 = vmatpush1.msra.mxu0 0.0
  %471 = vmatprep.subr.mxu0 0.0
  %472 = vmatpush1.msra.mxu0 0.0
  %473 = vmatprep.subr.mxu0 0.0
  %474 = vmatpush1.msra.mxu0 0.0
  %475 = vmatprep.subr.mxu0 0.0
  %476 = vmatpush1.msra.mxu0 0.0
  %477 = vmatprep.mubr.f32.mxu0 0.0
  %478 = vmatmul.mubr.f32.gmra.mrb[0].mxu0 %v411
  %v479 = vpop.f32.mrb[0].mxu0
  %v480 = vadd.f32 %v407, %v479
  %v481 = vpop.f32.mrb[0].mxu0
  %482 = vdwg.mxu0
  %v483 = vtanh.pop %v480
  %v484 = vmul.f32 %v483, 0.5
  %v485 = vadd.f32 %v484, 0.5
  %v486 = vmul.f32 %v485, 0.0
  %488 = vrot.lane.b32.xlu0 %v483, 64
  %v489 = vpop.permute.xlu0 %488
  %v491 = vmul.f32 %v485, %v489
  %493 = vrot.lane.b32.xlu0 %v491, 32
  %v494 = vpop.permute.xlu0 %493
  %v496 = vadd.f32 %v486, %v494
  %v497 = vtanh.pop %v496
  %499 = vrot.lane.b32.xlu0 %v497, 64
  %v500 = vpop.permute.xlu0 %499
  %v502 = vmul.f32 %v485, %v500
  %504 = vrot.lane.b32.xlu0 %v400, 32
  %v505 = vpop.permute.xlu0 %504
  %v506 = vsel %vm210, %v505, 0
  %508 = vmatprep.subr.mxu0 0.0
  %509 = vmatpush1.msra.mxu0 %v188
  %510 = vmatprep.subr.mxu0 0.0
  %511 = vmatpush1.msra.mxu0 %v189
  %512 = vmatprep.subr.mxu0 0.0
  %513 = vmatpush1.msra.mxu0 %v190
  %514 = vmatprep.subr.mxu0 0.0
  %515 = vmatpush1.msra.mxu0 %v191
  %516 = vmatprep.subr.mxu0 0.0
  %517 = vmatpush1.msra.mxu0 0.0
  %518 = vmatprep.subr.mxu0 0.0
  %519 = vmatpush1.msra.mxu0 0.0
  %520 = vmatprep.subr.mxu0 0.0
  %521 = vmatpush1.msra.mxu0 0.0
  %522 = vmatprep.subr.mxu0 0.0
  %523 = vmatpush1.msra.mxu0 0.0
  %524 = vmatprep.subr.mxu0 0.0
  %525 = vmatpush1.msra.mxu0 0.0
  %526 = vmatprep.subr.mxu0 0.0
  %527 = vmatpush1.msra.mxu0 0.0
  %528 = vmatprep.subr.mxu0 0.0
  %529 = vmatpush1.msra.mxu0 0.0
  %530 = vmatprep.subr.mxu0 0.0
  %531 = vmatpush1.msra.mxu0 0.0
  %532 = vmatprep.subr.mxu0 0.0
  %533 = vmatpush1.msra.mxu0 0.0
  %534 = vmatprep.subr.mxu0 0.0
  %535 = vmatpush1.msra.mxu0 0.0
  %536 = vmatprep.subr.mxu0 0.0
  %537 = vmatpush1.msra.mxu0 0.0
  %538 = vmatprep.subr.mxu0 0.0
  %539 = vmatpush1.msra.mxu0 0.0
  %540 = vmatprep.subr.mxu0 0.0
  %541 = vmatpush1.msra.mxu0 0.0
  %542 = vmatprep.subr.mxu0 0.0
  %543 = vmatpush1.msra.mxu0 0.0
  %544 = vmatprep.subr.mxu0 0.0
  %545 = vmatpush1.msra.mxu0 0.0
  %546 = vmatprep.subr.mxu0 0.0
  %547 = vmatpush1.msra.mxu0 0.0
  %548 = vmatprep.subr.mxu0 0.0
  %549 = vmatpush1.msra.mxu0 0.0
  %550 = vmatprep.subr.mxu0 0.0
  %551 = vmatpush1.msra.mxu0 0.0
  %552 = vmatprep.subr.mxu0 0.0
  %553 = vmatpush1.msra.mxu0 0.0
  %554 = vmatprep.subr.mxu0 0.0
  %555 = vmatpush1.msra.mxu0 0.0
  %556 = vmatprep.subr.mxu0 0.0
  %557 = vmatpush1.msra.mxu0 0.0
  %558 = vmatprep.subr.mxu0 0.0
  %559 = vmatpush1.msra.mxu0 0.0
  %560 = vmatprep.subr.mxu0 0.0
  %561 = vmatpush1.msra.mxu0 0.0
  %562 = vmatprep.subr.mxu0 0.0
  %563 = vmatpush1.msra.mxu0 0.0
  %564 = vmatprep.subr.mxu0 0.0
  %565 = vmatpush1.msra.mxu0 0.0
  %566 = vmatprep.subr.mxu0 0.0
  %567 = vmatpush1.msra.mxu0 0.0
  %568 = vmatprep.subr.mxu0 0.0
  %569 = vmatpush1.msra.mxu0 0.0
  %570 = vmatprep.subr.mxu0 0.0
  %571 = vmatpush1.msra.mxu0 0.0
  %572 = vmatprep.mubr.f32.mxu0 0.0
  %573 = vmatmul.mubr.f32.gmra.mrb[0].mxu0 %v506
  %v574 = vpop.f32.mrb[0].mxu0
  %v575 = vadd.f32 0.0, %v574
  %v576 = vpop.f32.mrb[0].mxu0
  %577 = vdwg.mxu0
  %v578 = vadd.f32 %v160, %v575
  %v579 = vtanh.pop %v578
  %v580 = vmul.f32 %v579, 0.5
  %v581 = vadd.f32 %v580, 0.5
  %v582 = vmul.f32 %v581, %v394
  %584 = vrot.lane.b32.xlu0 %v579, 64
  %v585 = vpop.permute.xlu0 %584
  %v587 = vmul.f32 %v581, %v585
  %589 = vrot.lane.b32.xlu0 %v587, 32
  %v590 = vpop.permute.xlu0 %589
  %v592 = vadd.f32 %v582, %v590
  %v593 = vtanh.pop %v592
  %595 = vrot.lane.b32.xlu0 %v593, 64
  %v596 = vpop.permute.xlu0 %595
  %v598 = vmul.f32 %v581, %v596
  %601 = vrot.lane.b32.xlu0 %v502, 64
  %v602 = vpop.permute.xlu0 %601
  %v604 = vsel %vm210, %v505, %v602
  %v606 = vsel %vm409, %v604, 0
  %608 = vmatprep.subr.mxu0 0.0
  %609 = vmatpush1.msra.mxu0 %v192
  %610 = vmatprep.subr.mxu0 0.0
  %611 = vmatpush1.msra.mxu0 %v193
  %612 = vmatprep.subr.mxu0 0.0
  %613 = vmatpush1.msra.mxu0 %v194
  %614 = vmatprep.subr.mxu0 0.0
  %615 = vmatpush1.msra.mxu0 %v195
  %616 = vmatprep.subr.mxu0 0.0
  %617 = vmatpush1.msra.mxu0 %v196
  %618 = vmatprep.subr.mxu0 0.0
  %619 = vmatpush1.msra.mxu0 %v197
  %620 = vmatprep.subr.mxu0 0.0
  %621 = vmatpush1.msra.mxu0 %v198
  %622 = vmatprep.subr.mxu0 0.0
  %623 = vmatpush1.msra.mxu0 %v199
  %624 = vmatprep.subr.mxu0 0.0
  %625 = vmatpush1.msra.mxu0 0.0
  %626 = vmatprep.subr.mxu0 0.0
  %627 = vmatpush1.msra.mxu0 0.0
  %628 = vmatprep.subr.mxu0 0.0
  %629 = vmatpush1.msra.mxu0 0.0
  %630 = vmatprep.subr.mxu0 0.0
  %631 = vmatpush1.msra.mxu0 0.0
  %632 = vmatprep.subr.mxu0 0.0
  %633 = vmatpush1.msra.mxu0 0.0
  %634 = vmatprep.subr.mxu0 0.0
  %635 = vmatpush1.msra.mxu0 0.0
  %636 = vmatprep.subr.mxu0 0.0
  %637 = vmatpush1.msra.mxu0 0.0
  %638 = vmatprep.subr.mxu0 0.0
  %639 = vmatpush1.msra.mxu0 0.0
  %640 = vmatprep.subr.mxu0 0.0
  %641 = vmatpush1.msra.mxu0 0.0
  %642 = vmatprep.subr.mxu0 0.0
  %643 = vmatpush1.msra.mxu0 0.0
  %644 = vmatprep.subr.mxu0 0.0
  %645 = vmatpush1.msra.mxu0 0.0
  %646 = vmatprep.subr.mxu0 0.0
  %647 = vmatpush1.msra.mxu0 0.0
  %648 = vmatprep.subr.mxu0 0.0
  %649 = vmatpush1.msra.mxu0 0.0
  %650 = vmatprep.subr.mxu0 0.0
  %651 = vmatpush1.msra.mxu0 0.0
  %652 = vmatprep.subr.mxu0 0.0
  %653 = vmatpush1.msra.mxu0 0.0
  %654 = vmatprep.subr.mxu0 0.0
  %655 = vmatpush1.msra.mxu0 0.0
  %656 = vmatprep.subr.mxu0 0.0
  %657 = vmatpush1.msra.mxu0 0.0
  %658 = vmatprep.subr.mxu0 0.0
  %659 = vmatpush1.msra.mxu0 0.0
  %660 = vmatprep.subr.mxu0 0.0
  %661 = vmatpush1.msra.mxu0 0.0
  %662 = vmatprep.subr.mxu0 0.0
  %663 = vmatpush1.msra.mxu0 0.0
  %664 = vmatprep.subr.mxu0 0.0
  %665 = vmatpush1.msra.mxu0 0.0
  %666 = vmatprep.subr.mxu0 0.0
  %667 = vmatpush1.msra.mxu0 0.0
  %668 = vmatprep.subr.mxu0 0.0
  %669 = vmatpush1.msra.mxu0 0.0
  %670 = vmatprep.subr.mxu0 0.0
  %671 = vmatpush1.msra.mxu0 0.0
  %672 = vmatprep.mubr.f32.mxu0 0.0
  %673 = vmatmul.mubr.f32.gmra.mrb[0].mxu0 %v606
  %v674 = vpop.f32.mrb[0].mxu0
  %v675 = vadd.f32 %v407, %v674
  %v676 = vpop.f32.mrb[0].mxu0
  %677 = vdwg.mxu0
  %v678 = vtanh.pop %v675
  %v679 = vmul.f32 %v678, 0.5
  %v680 = vadd.f32 %v679, 0.5
  %v681 = vmul.f32 %v680, %v496
  %683 = vrot.lane.b32.xlu0 %v678, 64
  %v684 = vpop.permute.xlu0 %683
  %v686 = vmul.f32 %v680, %v684
  %688 = vrot.lane.b32.xlu0 %v686, 32
  %v689 = vpop.permute.xlu0 %688
  %v691 = vadd.f32 %v681, %v689
  %v692 = vtanh.pop %v691
  %694 = vrot.lane.b32.xlu0 %v692, 64
  %v695 = vpop.permute.xlu0 %694
  %v697 = vmul.f32 %v680, %v695
  %698 = vrot.lane.b32.xlu0 %v502, 32
  %v699 = vpop.permute.xlu0 %698
  %v701 = vsel %vm210, %v699, 0.0
  %v703 = vlaneseq
  %v704 = vshrl.u32 %v703, 7
  %v705 = vsub.s32 0, %v704
  %v706 = vrot.slane %v209, %v705
  %v709 = vsel %vm409, %v701, 0
  %711 = vmatprep.subr.mxu0 0.0
  %712 = vmatpush1.msra.mxu0 %v200
  %713 = vmatprep.subr.mxu0 0.0
  %714 = vmatpush1.msra.mxu0 %v201
  %715 = vmatprep.subr.mxu0 0.0
  %716 = vmatpush1.msra.mxu0 %v202
  %717 = vmatprep.subr.mxu0 0.0
  %718 = vmatpush1.msra.mxu0 %v203
  %719 = vmatprep.subr.mxu0 0.0
  %720 = vmatpush1.msra.mxu0 %v204
  %721 = vmatprep.subr.mxu0 0.0
  %722 = vmatpush1.msra.mxu0 %v205
  %723 = vmatprep.subr.mxu0 0.0
  %724 = vmatpush1.msra.mxu0 %v206
  %725 = vmatprep.subr.mxu0 0.0
  %726 = vmatpush1.msra.mxu0 %v207
  %727 = vmatprep.subr.mxu0 0.0
  %728 = vmatpush1.msra.mxu0 0.0
  %729 = vmatprep.subr.mxu0 0.0
  %730 = vmatpush1.msra.mxu0 0.0
  %731 = vmatprep.subr.mxu0 0.0
  %732 = vmatpush1.msra.mxu0 0.0
  %733 = vmatprep.subr.mxu0 0.0
  %734 = vmatpush1.msra.mxu0 0.0
  %735 = vmatprep.subr.mxu0 0.0
  %736 = vmatpush1.msra.mxu0 0.0
  %737 = vmatprep.subr.mxu0 0.0
  %738 = vmatpush1.msra.mxu0 0.0
  %739 = vmatprep.subr.mxu0 0.0
  %740 = vmatpush1.msra.mxu0 0.0
  %741 = vmatprep.subr.mxu0 0.0
  %742 = vmatpush1.msra.mxu0 0.0
  %743 = vmatprep.subr.mxu0 0.0
  %744 = vmatpush1.msra.mxu0 0.0
  %745 = vmatprep.subr.mxu0 0.0
  %746 = vmatpush1.msra.mxu0 0.0
  %747 = vmatprep.subr.mxu0 0.0
  %748 = vmatpush1.msra.mxu0 0.0
  %749 = vmatprep.subr.mxu0 0.0
  %750 = vmatpush1.msra.mxu0 0.0
  %751 = vmatprep.subr.mxu0 0.0
  %752 = vmatpush1.msra.mxu0 0.0
  %753 = vmatprep.subr.mxu0 0.0
  %754 = vmatpush1.msra.mxu0 0.0
  %755 = vmatprep.subr.mxu0 0.0
  %756 = vmatpush1.msra.mxu0 0.0
  %757 = vmatprep.subr.mxu0 0.0
  %758 = vmatpush1.msra.mxu0 0.0
  %759 = vmatprep.subr.mxu0 0.0
  %760 = vmatpush1.msra.mxu0 0.0
  %761 = vmatprep.subr.mxu0 0.0
  %762 = vmatpush1.msra.mxu0 0.0
  %763 = vmatprep.subr.mxu0 0.0
  %764 = vmatpush1.msra.mxu0 0.0
  %765 = vmatprep.subr.mxu0 0.0
  %766 = vmatpush1.msra.mxu0 0.0
  %767 = vmatprep.subr.mxu0 0.0
  %768 = vmatpush1.msra.mxu0 0.0
  %769 = vmatprep.subr.mxu0 0.0
  %770 = vmatpush1.msra.mxu0 0.0
  %771 = vmatprep.subr.mxu0 0.0
  %772 = vmatpush1.msra.mxu0 0.0
  %773 = vmatprep.subr.mxu0 0.0
  %774 = vmatpush1.msra.mxu0 0.0
  %775 = vmatprep.mubr.f32.mxu0 0.0
  %776 = vmatmul.mubr.f32.gmra.mrb[0].mxu0 %v709
  %v777 = vpop.f32.mrb[0].mxu0
  %v778 = vadd.f32 %v706, %v777
  %v779 = vpop.f32.mrb[0].mxu0
  %780 = vdwg.mxu0
  %v781 = vtanh.pop %v778
  %v782 = vmul.f32 %v781, 0.5
  %v783 = vadd.f32 %v782, 0.5
  %v784 = vmul.f32 %v783, 0.0
  %786 = vrot.lane.b32.xlu0 %v781, 64
  %v787 = vpop.permute.xlu0 %786
  %v789 = vmul.f32 %v783, %v787
  %791 = vrot.lane.b32.xlu0 %v789, 32
  %v792 = vpop.permute.xlu0 %791
  %v794 = vadd.f32 %v784, %v792
  %v795 = vtanh.pop %v794
  %797 = vrot.lane.b32.xlu0 %v795, 64
  %v798 = vpop.permute.xlu0 %797
  %v800 = vmul.f32 %v783, %v798
  %802 = vrot.lane.b32.xlu0 %v598, 32
  %v803 = vpop.permute.xlu0 %802
  %v804 = vsel %vm210, %v803, 0
  %806 = vmatprep.subr.mxu0 0.0
  %807 = vmatpush1.msra.mxu0 %v188
  %808 = vmatprep.subr.mxu0 0.0
  %809 = vmatpush1.msra.mxu0 %v189
  %810 = vmatprep.subr.mxu0 0.0
  %811 = vmatpush1.msra.mxu0 %v190
  %812 = vmatprep.subr.mxu0 0.0
  %813 = vmatpush1.msra.mxu0 %v191
  %814 = vmatprep.subr.mxu0 0.0
  %815 = vmatpush1.msra.mxu0 0.0
  %816 = vmatprep.subr.mxu0 0.0
  %817 = vmatpush1.msra.mxu0 0.0
  %818 = vmatprep.subr.mxu0 0.0
  %819 = vmatpush1.msra.mxu0 0.0
  %820 = vmatprep.subr.mxu0 0.0
  %821 = vmatpush1.msra.mxu0 0.0
  %822 = vmatprep.subr.mxu0 0.0
  %823 = vmatpush1.msra.mxu0 0.0
  %824 = vmatprep.subr.mxu0 0.0
  %825 = vmatpush1.msra.mxu0 0.0
  %826 = vmatprep.subr.mxu0 0.0
  %827 = vmatpush1.msra.mxu0 0.0
  %828 = vmatprep.subr.mxu0 0.0
  %829 = vmatpush1.msra.mxu0 0.0
  %830 = vmatprep.subr.mxu0 0.0
  %831 = vmatpush1.msra.mxu0 0.0
  %832 = vmatprep.subr.mxu0 0.0
  %833 = vmatpush1.msra.mxu0 0.0
  %834 = vmatprep.subr.mxu0 0.0
  %835 = vmatpush1.msra.mxu0 0.0
  %836 = vmatprep.subr.mxu0 0.0
  %837 = vmatpush1.msra.mxu0 0.0
  %838 = vmatprep.subr.mxu0 0.0
  %839 = vmatpush1.msra.mxu0 0.0
  %840 = vmatprep.subr.mxu0 0.0
  %841 = vmatpush1.msra.mxu0 0.0
  %842 = vmatprep.subr.mxu0 0.0
  %843 = vmatpush1.msra.mxu0 0.0
  %844 = vmatprep.subr.mxu0 0.0
  %845 = vmatpush1.msra.mxu0 0.0
  %846 = vmatprep.subr.mxu0 0.0
  %847 = vmatpush1.msra.mxu0 0.0
  %848 = vmatprep.subr.mxu0 0.0
  %849 = vmatpush1.msra.mxu0 0.0
  %850 = vmatprep.subr.mxu0 0.0
  %851 = vmatpush1.msra.mxu0 0.0
  %852 = vmatprep.subr.mxu0 0.0
  %853 = vmatpush1.msra.mxu0 0.0
  %854 = vmatprep.subr.mxu0 0.0
  %855 = vmatpush1.msra.mxu0 0.0
  %856 = vmatprep.subr.mxu0 0.0
  %857 = vmatpush1.msra.mxu0 0.0
  %858 = vmatprep.subr.mxu0 0.0
  %859 = vmatpush1.msra.mxu0 0.0
  %860 = vmatprep.subr.mxu0 0.0
  %861 = vmatpush1.msra.mxu0 0.0
  %862 = vmatprep.subr.mxu0 0.0
  %863 = vmatpush1.msra.mxu0 0.0
  %864 = vmatprep.subr.mxu0 0.0
  %865 = vmatpush1.msra.mxu0 0.0
  %866 = vmatprep.subr.mxu0 0.0
  %867 = vmatpush1.msra.mxu0 0.0
  %868 = vmatprep.subr.mxu0 0.0
  %869 = vmatpush1.msra.mxu0 0.0
  %870 = vmatprep.mubr.f32.mxu0 0.0
  %871 = vmatmul.mubr.f32.gmra.mrb[0].mxu0 %v804
  %v872 = vpop.f32.mrb[0].mxu0
  %v873 = vadd.f32 0.0, %v872
  %v874 = vpop.f32.mrb[0].mxu0
  %875 = vdwg.mxu0
  %v876 = vadd.f32 %v165, %v873
  %v877 = vtanh.pop %v876
  %v878 = vmul.f32 %v877, 0.5
  %v879 = vadd.f32 %v878, 0.5
  %v880 = vmul.f32 %v879, %v592
  %882 = vrot.lane.b32.xlu0 %v877, 64
  %v883 = vpop.permute.xlu0 %882
  %v885 = vmul.f32 %v879, %v883
  %887 = vrot.lane.b32.xlu0 %v885, 32
  %v888 = vpop.permute.xlu0 %887
  %v890 = vadd.f32 %v880, %v888
  %v891 = vtanh.pop %v890
  %893 = vrot.lane.b32.xlu0 %v891, 64
  %v894 = vpop.permute.xlu0 %893
  %v896 = vmul.f32 %v879, %v894
  %899 = vrot.lane.b32.xlu0 %v697, 64
  %v900 = vpop.permute.xlu0 %899
  %v902 = vsel %vm210, %v803, %v900
  %v904 = vsel %vm409, %v902, 0
  %906 = vmatprep.subr.mxu0 0.0
  %907 = vmatpush1.msra.mxu0 %v192
  %908 = vmatprep.subr.mxu0 0.0
  %909 = vmatpush1.msra.mxu0 %v193
  %910 = vmatprep.subr.mxu0 0.0
  %911 = vmatpush1.msra.mxu0 %v194
  %912 = vmatprep.subr.mxu0 0.0
  %913 = vmatpush1.msra.mxu0 %v195
  %914 = vmatprep.subr.mxu0 0.0
  %915 = vmatpush1.msra.mxu0 %v196
  %916 = vmatprep.subr.mxu0 0.0
  %917 = vmatpush1.msra.mxu0 %v197
  %918 = vmatprep.subr.mxu0 0.0
  %919 = vmatpush1.msra.mxu0 %v198
  %920 = vmatprep.subr.mxu0 0.0
  %921 = vmatpush1.msra.mxu0 %v199
  %922 = vmatprep.subr.mxu0 0.0
  %923 = vmatpush1.msra.mxu0 0.0
  %924 = vmatprep.subr.mxu0 0.0
  %925 = vmatpush1.msra.mxu0 0.0
  %926 = vmatprep.subr.mxu0 0.0
  %927 = vmatpush1.msra.mxu0 0.0
  %928 = vmatprep.subr.mxu0 0.0
  %929 = vmatpush1.msra.mxu0 0.0
  %930 = vmatprep.subr.mxu0 0.0
  %931 = vmatpush1.msra.mxu0 0.0
  %932 = vmatprep.subr.mxu0 0.0
  %933 = vmatpush1.msra.mxu0 0.0
  %934 = vmatprep.subr.mxu0 0.0
  %935 = vmatpush1.msra.mxu0 0.0
  %936 = vmatprep.subr.mxu0 0.0
  %937 = vmatpush1.msra.mxu0 0.0
  %938 = vmatprep.subr.mxu0 0.0
  %939 = vmatpush1.msra.mxu0 0.0
  %940 = vmatprep.subr.mxu0 0.0
  %941 = vmatpush1.msra.mxu0 0.0
  %942 = vmatprep.subr.mxu0 0.0
  %943 = vmatpush1.msra.mxu0 0.0
  %944 = vmatprep.subr.mxu0 0.0
  %945 = vmatpush1.msra.mxu0 0.0
  %946 = vmatprep.subr.mxu0 0.0
  %947 = vmatpush1.msra.mxu0 0.0
  %948 = vmatprep.subr.mxu0 0.0
  %949 = vmatpush1.msra.mxu0 0.0
  %950 = vmatprep.subr.mxu0 0.0
  %951 = vmatpush1.msra.mxu0 0.0
  %952 = vmatprep.subr.mxu0 0.0
  %953 = vmatpush1.msra.mxu0 0.0
  %954 = vmatprep.subr.mxu0 0.0
  %955 = vmatpush1.msra.mxu0 0.0
  %956 = vmatprep.subr.mxu0 0.0
  %957 = vmatpush1.msra.mxu0 0.0
  %958 = vmatprep.subr.mxu0 0.0
  %959 = vmatpush1.msra.mxu0 0.0
  %960 = vmatprep.subr.mxu0 0.0
  %961 = vmatpush1.msra.mxu0 0.0
  %962 = vmatprep.subr.mxu0 0.0
  %963 = vmatpush1.msra.mxu0 0.0
  %964 = vmatprep.subr.mxu0 0.0
  %965 = vmatpush1.msra.mxu0 0.0
  %966 = vmatprep.subr.mxu0 0.0
  %967 = vmatpush1.msra.mxu0 0.0
  %968 = vmatprep.subr.mxu0 0.0
  %969 = vmatpush1.msra.mxu0 0.0
  %970 = vmatprep.mubr.f32.mxu0 0.0
  %971 = vmatmul.mubr.f32.gmra.mrb[0].mxu0 %v904
  %v972 = vpop.f32.mrb[0].mxu0
  %v973 = vadd.f32 %v407, %v972
  %v974 = vpop.f32.mrb[0].mxu0
  %975 = vdwg.mxu0
  %v976 = vtanh.pop %v973
  %v977 = vmul.f32 %v976, 0.5
  %v978 = vadd.f32 %v977, 0.5
  %v979 = vmul.f32 %v978, %v691
  %981 = vrot.lane.b32.xlu0 %v976, 64
  %v982 = vpop.permute.xlu0 %981
  %v984 = vmul.f32 %v978, %v982
  %986 = vrot.lane.b32.xlu0 %v984, 32
  %v987 = vpop.permute.xlu0 %986
  %v989 = vadd.f32 %v979, %v987
  %v990 = vtanh.pop %v989
  %992 = vrot.lane.b32.xlu0 %v990, 64
  %v993 = vpop.permute.xlu0 %992
  %v995 = vmul.f32 %v978, %v993
  %996 = vrot.lane.b32.xlu0 %v697, 32
  %v997 = vpop.permute.xlu0 %996
  %1000 = vrot.lane.b32.xlu0 %v800, 64
  %v1001 = vpop.permute.xlu0 %1000
  %v1003 = vsel %vm210, %v997, %v1001
  %v1005 = vsel %vm409, %v1003, 0
  %1007 = vmatprep.subr.mxu0 0.0
  %1008 = vmatpush1.msra.mxu0 %v200
  %1009 = vmatprep.subr.mxu0 0.0
  %1010 = vmatpush1.msra.mxu0 %v201
  %1011 = vmatprep.subr.mxu0 0.0
  %1012 = vmatpush1.msra.mxu0 %v202
  %1013 = vmatprep.subr.mxu0 0.0
  %1014 = vmatpush1.msra.mxu0 %v203
  %1015 = vmatprep.subr.mxu0 0.0
  %1016 = vmatpush1.msra.mxu0 %v204
  %1017 = vmatprep.subr.mxu0 0.0
  %1018 = vmatpush1.msra.mxu0 %v205
  %1019 = vmatprep.subr.mxu0 0.0
  %1020 = vmatpush1.msra.mxu0 %v206
  %1021 = vmatprep.subr.mxu0 0.0
  %1022 = vmatpush1.msra.mxu0 %v207
  %1023 = vmatprep.subr.mxu0 0.0
  %1024 = vmatpush1.msra.mxu0 0.0
  %1025 = vmatprep.subr.mxu0 0.0
  %1026 = vmatpush1.msra.mxu0 0.0
  %1027 = vmatprep.subr.mxu0 0.0
  %1028 = vmatpush1.msra.mxu0 0.0
  %1029 = vmatprep.subr.mxu0 0.0
  %1030 = vmatpush1.msra.mxu0 0.0
  %1031 = vmatprep.subr.mxu0 0.0
  %1032 = vmatpush1.msra.mxu0 0.0
  %1033 = vmatprep.subr.mxu0 0.0
  %1034 = vmatpush1.msra.mxu0 0.0
  %1035 = vmatprep.subr.mxu0 0.0
  %1036 = vmatpush1.msra.mxu0 0.0
  %1037 = vmatprep.subr.mxu0 0.0
  %1038 = vmatpush1.msra.mxu0 0.0
  %1039 = vmatprep.subr.mxu0 0.0
  %1040 = vmatpush1.msra.mxu0 0.0
  %1041 = vmatprep.subr.mxu0 0.0
  %1042 = vmatpush1.msra.mxu0 0.0
  %1043 = vmatprep.subr.mxu0 0.0
  %1044 = vmatpush1.msra.mxu0 0.0
  %1045 = vmatprep.subr.mxu0 0.0
  %1046 = vmatpush1.msra.mxu0 0.0
  %1047 = vmatprep.subr.mxu0 0.0
  %1048 = vmatpush1.msra.mxu0 0.0
  %1049 = vmatprep.subr.mxu0 0.0
  %1050 = vmatpush1.msra.mxu0 0.0
  %1051 = vmatprep.subr.mxu0 0.0
  %1052 = vmatpush1.msra.mxu0 0.0
  %1053 = vmatprep.subr.mxu0 0.0
  %1054 = vmatpush1.msra.mxu0 0.0
  %1055 = vmatprep.subr.mxu0 0.0
  %1056 = vmatpush1.msra.mxu0 0.0
  %1057 = vmatprep.subr.mxu0 0.0
  %1058 = vmatpush1.msra.mxu0 0.0
  %1059 = vmatprep.subr.mxu0 0.0
  %1060 = vmatpush1.msra.mxu0 0.0
  %1061 = vmatprep.subr.mxu0 0.0
  %1062 = vmatpush1.msra.mxu0 0.0
  %1063 = vmatprep.subr.mxu0 0.0
  %1064 = vmatpush1.msra.mxu0 0.0
  %1065 = vmatprep.subr.mxu0 0.0
  %1066 = vmatpush1.msra.mxu0 0.0
  %1067 = vmatprep.subr.mxu0 0.0
  %1068 = vmatpush1.msra.mxu0 0.0
  %1069 = vmatprep.subr.mxu0 0.0
  %1070 = vmatpush1.msra.mxu0 0.0
  %1071 = vmatprep.mubr.f32.mxu0 0.0
  %1072 = vmatmul.mubr.f32.gmra.mrb[0].mxu0 %v1005
  %v1073 = vpop.f32.mrb[0].mxu0
  %v1074 = vadd.f32 %v706, %v1073
  %v1075 = vpop.f32.mrb[0].mxu0
  %1076 = vdwg.mxu0
  %v1077 = vtanh.pop %v1074
  %v1078 = vmul.f32 %v1077, 0.5
  %v1079 = vadd.f32 %v1078, 0.5
  %v1080 = vmul.f32 %v1079, %v794
  %1082 = vrot.lane.b32.xlu0 %v1077, 64
  %v1083 = vpop.permute.xlu0 %1082
  %v1085 = vmul.f32 %v1079, %v1083
  %1087 = vrot.lane.b32.xlu0 %v1085, 32
  %v1088 = vpop.permute.xlu0 %1087
  %v1090 = vadd.f32 %v1080, %v1088
  %v1091 = vtanh.pop %v1090
  %1093 = vrot.lane.b32.xlu0 %v1091, 64
  %v1094 = vpop.permute.xlu0 %1093
  %v1096 = vmul.f32 %v1079, %v1094
  %1098 = vrot.lane.b32.xlu0 %v896, 32
  %v1099 = vpop.permute.xlu0 %1098
  %v1100 = vsel %vm210, %v1099, 0
  %1102 = vmatprep.subr.mxu0 0.0
  %1103 = vmatpush1.msra.mxu0 %v188
  %1104 = vmatprep.subr.mxu0 0.0
  %1105 = vmatpush1.msra.mxu0 %v189
  %1106 = vmatprep.subr.mxu0 0.0
  %1107 = vmatpush1.msra.mxu0 %v190
  %1108 = vmatprep.subr.mxu0 0.0
  %1109 = vmatpush1.msra.mxu0 %v191
  %1110 = vmatprep.subr.mxu0 0.0
  %1111 = vmatpush1.msra.mxu0 0.0
  %1112 = vmatprep.subr.mxu0 0.0
  %1113 = vmatpush1.msra.mxu0 0.0
  %1114 = vmatprep.subr.mxu0 0.0
  %1115 = vmatpush1.msra.mxu0 0.0
  %1116 = vmatprep.subr.mxu0 0.0
  %1117 = vmatpush1.msra.mxu0 0.0
  %1118 = vmatprep.subr.mxu0 0.0
  %1119 = vmatpush1.msra.mxu0 0.0
  %1120 = vmatprep.subr.mxu0 0.0
  %1121 = vmatpush1.msra.mxu0 0.0
  %1122 = vmatprep.subr.mxu0 0.0
  %1123 = vmatpush1.msra.mxu0 0.0
  %1124 = vmatprep.subr.mxu0 0.0
  %1125 = vmatpush1.msra.mxu0 0.0
  %1126 = vmatprep.subr.mxu0 0.0
  %1127 = vmatpush1.msra.mxu0 0.0
  %1128 = vmatprep.subr.mxu0 0.0
  %1129 = vmatpush1.msra.mxu0 0.0
  %1130 = vmatprep.subr.mxu0 0.0
  %1131 = vmatpush1.msra.mxu0 0.0
  %1132 = vmatprep.subr.mxu0 0.0
  %1133 = vmatpush1.msra.mxu0 0.0
  %1134 = vmatprep.subr.mxu0 0.0
  %1135 = vmatpush1.msra.mxu0 0.0
  %1136 = vmatprep.subr.mxu0 0.0
  %1137 = vmatpush1.msra.mxu0 0.0
  %1138 = vmatprep.subr.mxu0 0.0
  %1139 = vmatpush1.msra.mxu0 0.0
  %1140 = vmatprep.subr.mxu0 0.0
  %1141 = vmatpush1.msra.mxu0 0.0
  %1142 = vmatprep.subr.mxu0 0.0
  %1143 = vmatpush1.msra.mxu0 0.0
  %1144 = vmatprep.subr.mxu0 0.0
  %1145 = vmatpush1.msra.mxu0 0.0
  %1146 = vmatprep.subr.mxu0 0.0
  %1147 = vmatpush1.msra.mxu0 0.0
  %1148 = vmatprep.subr.mxu0 0.0
  %1149 = vmatpush1.msra.mxu0 0.0
  %1150 = vmatprep.subr.mxu0 0.0
  %1151 = vmatpush1.msra.mxu0 0.0
  %1152 = vmatprep.subr.mxu0 0.0
  %1153 = vmatpush1.msra.mxu0 0.0
  %1154 = vmatprep.subr.mxu0 0.0
  %1155 = vmatpush1.msra.mxu0 0.0
  %1156 = vmatprep.subr.mxu0 0.0
  %1157 = vmatpush1.msra.mxu0 0.0
  %1158 = vmatprep.subr.mxu0 0.0
  %1159 = vmatpush1.msra.mxu0 0.0
  %1160 = vmatprep.subr.mxu0 0.0
  %1161 = vmatpush1.msra.mxu0 0.0
  %1162 = vmatprep.subr.mxu0 0.0
  %1163 = vmatpush1.msra.mxu0 0.0
  %1164 = vmatprep.subr.mxu0 0.0
  %1165 = vmatpush1.msra.mxu0 0.0
  %1166 = vmatprep.mubr.f32.mxu0 0.0
  %1167 = vmatmul.mubr.f32.gmra.mrb[0].mxu0 %v1100
  %v1168 = vpop.f32.mrb[0].mxu0
  %v1169 = vadd.f32 0.0, %v1168
  %v1170 = vpop.f32.mrb[0].mxu0
  %1171 = vdwg.mxu0
  %v1172 = vadd.f32 %v170, %v1169
  %v1173 = vtanh.pop %v1172
  %v1174 = vmul.f32 %v1173, 0.5
  %v1175 = vadd.f32 %v1174, 0.5
  %v1176 = vmul.f32 %v1175, %v890
  %1178 = vrot.lane.b32.xlu0 %v1173, 64
  %v1179 = vpop.permute.xlu0 %1178
  %v1181 = vmul.f32 %v1175, %v1179
  %1183 = vrot.lane.b32.xlu0 %v1181, 32
  %v1184 = vpop.permute.xlu0 %1183
  %v1186 = vadd.f32 %v1176, %v1184
  %v1187 = vtanh.pop %v1186
  %1189 = vrot.lane.b32.xlu0 %v1187, 64
  %v1190 = vpop.permute.xlu0 %1189
  %v1192 = vmul.f32 %v1175, %v1190
  %1195 = vrot.lane.b32.xlu0 %v995, 64
  %v1196 = vpop.permute.xlu0 %1195
  %v1198 = vsel %vm210, %v1099, %v1196
  %v1200 = vsel %vm409, %v1198, 0
  %1202 = vmatprep.subr.mxu0 0.0
  %1203 = vmatpush1.msra.mxu0 %v192
  %1204 = vmatprep.subr.mxu0 0.0
  %1205 = vmatpush1.msra.mxu0 %v193
  %1206 = vmatprep.subr.mxu0 0.0
  %1207 = vmatpush1.msra.mxu0 %v194
  %1208 = vmatprep.subr.mxu0 0.0
  %1209 = vmatpush1.msra.mxu0 %v195
  %1210 = vmatprep.subr.mxu0 0.0
  %1211 = vmatpush1.msra.mxu0 %v196
  %1212 = vmatprep.subr.mxu0 0.0
  %1213 = vmatpush1.msra.mxu0 %v197
  %1214 = vmatprep.subr.mxu0 0.0
  %1215 = vmatpush1.msra.mxu0 %v198
  %1216 = vmatprep.subr.mxu0 0.0
  %1217 = vmatpush1.msra.mxu0 %v199
  %1218 = vmatprep.subr.mxu0 0.0
  %1219 = vmatpush1.msra.mxu0 0.0
  %1220 = vmatprep.subr.mxu0 0.0
  %1221 = vmatpush1.msra.mxu0 0.0
  %1222 = vmatprep.subr.mxu0 0.0
  %1223 = vmatpush1.msra.mxu0 0.0
  %1224 = vmatprep.subr.mxu0 0.0
  %1225 = vmatpush1.msra.mxu0 0.0
  %1226 = vmatprep.subr.mxu0 0.0
  %1227 = vmatpush1.msra.mxu0 0.0
  %1228 = vmatprep.subr.mxu0 0.0
  %1229 = vmatpush1.msra.mxu0 0.0
  %1230 = vmatprep.subr.mxu0 0.0
  %1231 = vmatpush1.msra.mxu0 0.0
  %1232 = vmatprep.subr.mxu0 0.0
  %1233 = vmatpush1.msra.mxu0 0.0
  %1234 = vmatprep.subr.mxu0 0.0
  %1235 = vmatpush1.msra.mxu0 0.0
  %1236 = vmatprep.subr.mxu0 0.0
  %1237 = vmatpush1.msra.mxu0 0.0
  %1238 = vmatprep.subr.mxu0 0.0
  %1239 = vmatpush1.msra.mxu0 0.0
  %1240 = vmatprep.subr.mxu0 0.0
  %1241 = vmatpush1.msra.mxu0 0.0
  %1242 = vmatprep.subr.mxu0 0.0
  %1243 = vmatpush1.msra.mxu0 0.0
  %1244 = vmatprep.subr.mxu0 0.0
  %1245 = vmatpush1.msra.mxu0 0.0
  %1246 = vmatprep.subr.mxu0 0.0
  %1247 = vmatpush1.msra.mxu0 0.0
  %1248 = vmatprep.subr.mxu0 0.0
  %1249 = vmatpush1.msra.mxu0 0.0
  %1250 = vmatprep.subr.mxu0 0.0
  %1251 = vmatpush1.msra.mxu0 0.0
  %1252 = vmatprep.subr.mxu0 0.0
  %1253 = vmatpush1.msra.mxu0 0.0
  %1254 = vmatprep.subr.mxu0 0.0
  %1255 = vmatpush1.msra.mxu0 0.0
  %1256 = vmatprep.subr.mxu0 0.0
  %1257 = vmatpush1.msra.mxu0 0.0
  %1258 = vmatprep.subr.mxu0 0.0
  %1259 = vmatpush1.msra.mxu0 0.0
  %1260 = vmatprep.subr.mxu0 0.0
  %1261 = vmatpush1.msra.mxu0 0.0
  %1262 = vmatprep.subr.mxu0 0.0
  %1263 = vmatpush1.msra.mxu0 0.0
  %1264 = vmatprep.subr.mxu0 0.0
  %1265 = vmatpush1.msra.mxu0 0.0
  %1266 = vmatprep.mubr.f32.mxu0 0.0
  %1267 = vmatmul.mubr.f32.gmra.mrb[0].mxu0 %v1200
  %v1268 = vpop.f32.mrb[0].mxu0
  %v1269 = vadd.f32 %v407, %v1268
  %v1270 = vpop.f32.mrb[0].mxu0
  %1271 = vdwg.mxu0
  %v1272 = vtanh.pop %v1269
  %v1273 = vmul.f32 %v1272, 0.5
  %v1274 = vadd.f32 %v1273, 0.5
  %v1275 = vmul.f32 %v1274, %v989
  %1277 = vrot.lane.b32.xlu0 %v1272, 64
  %v1278 = vpop.permute.xlu0 %1277
  %v1280 = vmul.f32 %v1274, %v1278
  %1282 = vrot.lane.b32.xlu0 %v1280, 32
  %v1283 = vpop.permute.xlu0 %1282
  %v1285 = vadd.f32 %v1275, %v1283
  %v1286 = vtanh.pop %v1285
  %1288 = vrot.lane.b32.xlu0 %v1286, 64
  %v1289 = vpop.permute.xlu0 %1288
  %v1291 = vmul.f32 %v1274, %v1289
  %1292 = vrot.lane.b32.xlu0 %v995, 32
  %v1293 = vpop.permute.xlu0 %1292
  %1296 = vrot.lane.b32.xlu0 %v1096, 64
  %v1297 = vpop.permute.xlu0 %1296
  %v1299 = vsel %vm210, %v1293, %v1297
  %v1301 = vsel %vm409, %v1299, 0
  %1303 = vmatprep.subr.mxu0 0.0
  %1304 = vmatpush1.msra.mxu0 %v200
  %1305 = vmatprep.subr.mxu0 0.0
  %1306 = vmatpush1.msra.mxu0 %v201
  %1307 = vmatprep.subr.mxu0 0.0
  %1308 = vmatpush1.msra.mxu0 %v202
  %1309 = vmatprep.subr.mxu0 0.0
  %1310 = vmatpush1.msra.mxu0 %v203
  %1311 = vmatprep.subr.mxu0 0.0
  %1312 = vmatpush1.msra.mxu0 %v204
  %1313 = vmatprep.subr.mxu0 0.0
  %1314 = vmatpush1.msra.mxu0 %v205
  %1315 = vmatprep.subr.mxu0 0.0
  %1316 = vmatpush1.msra.mxu0 %v206
  %1317 = vmatprep.subr.mxu0 0.0
  %1318 = vmatpush1.msra.mxu0 %v207
  %1319 = vmatprep.subr.mxu0 0.0
  %1320 = vmatpush1.msra.mxu0 0.0
  %1321 = vmatprep.subr.mxu0 0.0
  %1322 = vmatpush1.msra.mxu0 0.0
  %1323 = vmatprep.subr.mxu0 0.0
  %1324 = vmatpush1.msra.mxu0 0.0
  %1325 = vmatprep.subr.mxu0 0.0
  %1326 = vmatpush1.msra.mxu0 0.0
  %1327 = vmatprep.subr.mxu0 0.0
  %1328 = vmatpush1.msra.mxu0 0.0
  %1329 = vmatprep.subr.mxu0 0.0
  %1330 = vmatpush1.msra.mxu0 0.0
  %1331 = vmatprep.subr.mxu0 0.0
  %1332 = vmatpush1.msra.mxu0 0.0
  %1333 = vmatprep.subr.mxu0 0.0
  %1334 = vmatpush1.msra.mxu0 0.0
  %1335 = vmatprep.subr.mxu0 0.0
  %1336 = vmatpush1.msra.mxu0 0.0
  %1337 = vmatprep.subr.mxu0 0.0
  %1338 = vmatpush1.msra.mxu0 0.0
  %1339 = vmatprep.subr.mxu0 0.0
  %1340 = vmatpush1.msra.mxu0 0.0
  %1341 = vmatprep.subr.mxu0 0.0
  %1342 = vmatpush1.msra.mxu0 0.0
  %1343 = vmatprep.subr.mxu0 0.0
  %1344 = vmatpush1.msra.mxu0 0.0
  %1345 = vmatprep.subr.mxu0 0.0
  %1346 = vmatpush1.msra.mxu0 0.0
  %1347 = vmatprep.subr.mxu0 0.0
  %1348 = vmatpush1.msra.mxu0 0.0
  %1349 = vmatprep.subr.mxu0 0.0
  %1350 = vmatpush1.msra.mxu0 0.0
  %1351 = vmatprep.subr.mxu0 0.0
  %1352 = vmatpush1.msra.mxu0 0.0
  %1353 = vmatprep.subr.mxu0 0.0
  %1354 = vmatpush1.msra.mxu0 0.0
  %1355 = vmatprep.subr.mxu0 0.0
  %1356 = vmatpush1.msra.mxu0 0.0
  %1357 = vmatprep.subr.mxu0 0.0
  %1358 = vmatpush1.msra.mxu0 0.0
  %1359 = vmatprep.subr.mxu0 0.0
  %1360 = vmatpush1.msra.mxu0 0.0
  %1361 = vmatprep.subr.mxu0 0.0
  %1362 = vmatpush1.msra.mxu0 0.0
  %1363 = vmatprep.subr.mxu0 0.0
  %1364 = vmatpush1.msra.mxu0 0.0
  %1365 = vmatprep.subr.mxu0 0.0
  %1366 = vmatpush1.msra.mxu0 0.0
  %1367 = vmatprep.mubr.f32.mxu0 0.0
  %1368 = vmatmul.mubr.f32.gmra.mrb[0].mxu0 %v1301
  %v1369 = vpop.f32.mrb[0].mxu0
  %v1370 = vadd.f32 %v706, %v1369
  %v1371 = vpop.f32.mrb[0].mxu0
  %1372 = vdwg.mxu0
  %v1373 = vtanh.pop %v1370
  %v1374 = vmul.f32 %v1373, 0.5
  %v1375 = vadd.f32 %v1374, 0.5
  %v1376 = vmul.f32 %v1375, %v1090
  %1378 = vrot.lane.b32.xlu0 %v1373, 64
  %v1379 = vpop.permute.xlu0 %1378
  %v1381 = vmul.f32 %v1375, %v1379
  %1383 = vrot.lane.b32.xlu0 %v1381, 32
  %v1384 = vpop.permute.xlu0 %1383
  %v1386 = vadd.f32 %v1376, %v1384
  %v1387 = vtanh.pop %v1386
  %1389 = vrot.lane.b32.xlu0 %v1387, 64
  %v1390 = vpop.permute.xlu0 %1389
  %v1392 = vmul.f32 %v1375, %v1390
  %1394 = vrot.lane.b32.xlu0 %v1192, 32
  %v1395 = vpop.permute.xlu0 %1394
  %v1396 = vsel %vm210, %v1395, 0
  %1398 = vmatprep.subr.mxu0 0.0
  %1399 = vmatpush1.msra.mxu0 %v188
  %1400 = vmatprep.subr.mxu0 0.0
  %1401 = vmatpush1.msra.mxu0 %v189
  %1402 = vmatprep.subr.mxu0 0.0
  %1403 = vmatpush1.msra.mxu0 %v190
  %1404 = vmatprep.subr.mxu0 0.0
  %1405 = vmatpush1.msra.mxu0 %v191
  %1406 = vmatprep.subr.mxu0 0.0
  %1407 = vmatpush1.msra.mxu0 0.0
  %1408 = vmatprep.subr.mxu0 0.0
  %1409 = vmatpush1.msra.mxu0 0.0
  %1410 = vmatprep.subr.mxu0 0.0
  %1411 = vmatpush1.msra.mxu0 0.0
  %1412 = vmatprep.subr.mxu0 0.0
  %1413 = vmatpush1.msra.mxu0 0.0
  %1414 = vmatprep.subr.mxu0 0.0
  %1415 = vmatpush1.msra.mxu0 0.0
  %1416 = vmatprep.subr.mxu0 0.0
  %1417 = vmatpush1.msra.mxu0 0.0
  %1418 = vmatprep.subr.mxu0 0.0
  %1419 = vmatpush1.msra.mxu0 0.0
  %1420 = vmatprep.subr.mxu0 0.0
  %1421 = vmatpush1.msra.mxu0 0.0
  %1422 = vmatprep.subr.mxu0 0.0
  %1423 = vmatpush1.msra.mxu0 0.0
  %1424 = vmatprep.subr.mxu0 0.0
  %1425 = vmatpush1.msra.mxu0 0.0
  %1426 = vmatprep.subr.mxu0 0.0
  %1427 = vmatpush1.msra.mxu0 0.0
  %1428 = vmatprep.subr.mxu0 0.0
  %1429 = vmatpush1.msra.mxu0 0.0
  %1430 = vmatprep.subr.mxu0 0.0
  %1431 = vmatpush1.msra.mxu0 0.0
  %1432 = vmatprep.subr.mxu0 0.0
  %1433 = vmatpush1.msra.mxu0 0.0
  %1434 = vmatprep.subr.mxu0 0.0
  %1435 = vmatpush1.msra.mxu0 0.0
  %1436 = vmatprep.subr.mxu0 0.0
  %1437 = vmatpush1.msra.mxu0 0.0
  %1438 = vmatprep.subr.mxu0 0.0
  %1439 = vmatpush1.msra.mxu0 0.0
  %1440 = vmatprep.subr.mxu0 0.0
  %1441 = vmatpush1.msra.mxu0 0.0
  %1442 = vmatprep.subr.mxu0 0.0
  %1443 = vmatpush1.msra.mxu0 0.0
  %1444 = vmatprep.subr.mxu0 0.0
  %1445 = vmatpush1.msra.mxu0 0.0
  %1446 = vmatprep.subr.mxu0 0.0
  %1447 = vmatpush1.msra.mxu0 0.0
  %1448 = vmatprep.subr.mxu0 0.0
  %1449 = vmatpush1.msra.mxu0 0.0
  %1450 = vmatprep.subr.mxu0 0.0
  %1451 = vmatpush1.msra.mxu0 0.0
  %1452 = vmatprep.subr.mxu0 0.0
  %1453 = vmatpush1.msra.mxu0 0.0
  %1454 = vmatprep.subr.mxu0 0.0
  %1455 = vmatpush1.msra.mxu0 0.0
  %1456 = vmatprep.subr.mxu0 0.0
  %1457 = vmatpush1.msra.mxu0 0.0
  %1458 = vmatprep.subr.mxu0 0.0
  %1459 = vmatpush1.msra.mxu0 0.0
  %1460 = vmatprep.subr.mxu0 0.0
  %1461 = vmatpush1.msra.mxu0 0.0
  %1462 = vmatprep.mubr.f32.mxu0 0.0
  %1463 = vmatmul.mubr.f32.gmra.mrb[0].mxu0 %v1396
  %v1464 = vpop.f32.mrb[0].mxu0
  %v1465 = vadd.f32 0.0, %v1464
  %v1466 = vpop.f32.mrb[0].mxu0
  %1467 = vdwg.mxu0
  %v1468 = vadd.f32 %v175, %v1465
  %v1469 = vtanh.pop %v1468
  %v1470 = vmul.f32 %v1469, 0.5
  %v1471 = vadd.f32 %v1470, 0.5
  %v1472 = vmul.f32 %v1471, %v1186
  %1474 = vrot.lane.b32.xlu0 %v1469, 64
  %v1475 = vpop.permute.xlu0 %1474
  %v1477 = vmul.f32 %v1471, %v1475
  %1479 = vrot.lane.b32.xlu0 %v1477, 32
  %v1480 = vpop.permute.xlu0 %1479
  %v1482 = vadd.f32 %v1472, %v1480
  %v1483 = vtanh.pop %v1482
  %1485 = vrot.lane.b32.xlu0 %v1483, 64
  %v1486 = vpop.permute.xlu0 %1485
  %v1488 = vmul.f32 %v1471, %v1486
  %1491 = vrot.lane.b32.xlu0 %v1291, 64
  %v1492 = vpop.permute.xlu0 %1491
  %v1494 = vsel %vm210, %v1395, %v1492
  %v1496 = vsel %vm409, %v1494, 0
  %1498 = vmatprep.subr.mxu0 0.0
  %1499 = vmatpush1.msra.mxu0 %v192
  %1500 = vmatprep.subr.mxu0 0.0
  %1501 = vmatpush1.msra.mxu0 %v193
  %1502 = vmatprep.subr.mxu0 0.0
  %1503 = vmatpush1.msra.mxu0 %v194
  %1504 = vmatprep.subr.mxu0 0.0
  %1505 = vmatpush1.msra.mxu0 %v195
  %1506 = vmatprep.subr.mxu0 0.0
  %1507 = vmatpush1.msra.mxu0 %v196
  %1508 = vmatprep.subr.mxu0 0.0
  %1509 = vmatpush1.msra.mxu0 %v197
  %1510 = vmatprep.subr.mxu0 0.0
  %1511 = vmatpush1.msra.mxu0 %v198
  %1512 = vmatprep.subr.mxu0 0.0
  %1513 = vmatpush1.msra.mxu0 %v199
  %1514 = vmatprep.subr.mxu0 0.0
  %1515 = vmatpush1.msra.mxu0 0.0
  %1516 = vmatprep.subr.mxu0 0.0
  %1517 = vmatpush1.msra.mxu0 0.0
  %1518 = vmatprep.subr.mxu0 0.0
  %1519 = vmatpush1.msra.mxu0 0.0
  %1520 = vmatprep.subr.mxu0 0.0
  %1521 = vmatpush1.msra.mxu0 0.0
  %1522 = vmatprep.subr.mxu0 0.0
  %1523 = vmatpush1.msra.mxu0 0.0
  %1524 = vmatprep.subr.mxu0 0.0
  %1525 = vmatpush1.msra.mxu0 0.0
  %1526 = vmatprep.subr.mxu0 0.0
  %1527 = vmatpush1.msra.mxu0 0.0
  %1528 = vmatprep.subr.mxu0 0.0
  %1529 = vmatpush1.msra.mxu0 0.0
  %1530 = vmatprep.subr.mxu0 0.0
  %1531 = vmatpush1.msra.mxu0 0.0
  %1532 = vmatprep.subr.mxu0 0.0
  %1533 = vmatpush1.msra.mxu0 0.0
  %1534 = vmatprep.subr.mxu0 0.0
  %1535 = vmatpush1.msra.mxu0 0.0
  %1536 = vmatprep.subr.mxu0 0.0
  %1537 = vmatpush1.msra.mxu0 0.0
  %1538 = vmatprep.subr.mxu0 0.0
  %1539 = vmatpush1.msra.mxu0 0.0
  %1540 = vmatprep.subr.mxu0 0.0
  %1541 = vmatpush1.msra.mxu0 0.0
  %1542 = vmatprep.subr.mxu0 0.0
  %1543 = vmatpush1.msra.mxu0 0.0
  %1544 = vmatprep.subr.mxu0 0.0
  %1545 = vmatpush1.msra.mxu0 0.0
  %1546 = vmatprep.subr.mxu0 0.0
  %1547 = vmatpush1.msra.mxu0 0.0
  %1548 = vmatprep.subr.mxu0 0.0
  %1549 = vmatpush1.msra.mxu0 0.0
  %1550 = vmatprep.subr.mxu0 0.0
  %1551 = vmatpush1.msra.mxu0 0.0
  %1552 = vmatprep.subr.mxu0 0.0
  %1553 = vmatpush1.msra.mxu0 0.0
  %1554 = vmatprep.subr.mxu0 0.0
  %1555 = vmatpush1.msra.mxu0 0.0
  %1556 = vmatprep.subr.mxu0 0.0
  %1557 = vmatpush1.msra.mxu0 0.0
  %1558 = vmatprep.subr.mxu0 0.0
  %1559 = vmatpush1.msra.mxu0 0.0
  %1560 = vmatprep.subr.mxu0 0.0
  %1561 = vmatpush1.msra.mxu0 0.0
  %1562 = vmatprep.mubr.f32.mxu0 0.0
  %1563 = vmatmul.mubr.f32.gmra.mrb[0].mxu0 %v1496
  %v1564 = vpop.f32.mrb[0].mxu0
  %v1565 = vadd.f32 %v407, %v1564
  %v1566 = vpop.f32.mrb[0].mxu0
  %1567 = vdwg.mxu0
  %v1568 = vtanh.pop %v1565
  %v1569 = vmul.f32 %v1568, 0.5
  %v1570 = vadd.f32 %v1569, 0.5
  %v1571 = vmul.f32 %v1570, %v1285
  %1573 = vrot.lane.b32.xlu0 %v1568, 64
  %v1574 = vpop.permute.xlu0 %1573
  %v1576 = vmul.f32 %v1570, %v1574
  %1578 = vrot.lane.b32.xlu0 %v1576, 32
  %v1579 = vpop.permute.xlu0 %1578
  %v1581 = vadd.f32 %v1571, %v1579
  %v1582 = vtanh.pop %v1581
  %1584 = vrot.lane.b32.xlu0 %v1582, 64
  %v1585 = vpop.permute.xlu0 %1584
  %v1587 = vmul.f32 %v1570, %v1585
  %1588 = vrot.lane.b32.xlu0 %v1291, 32
  %v1589 = vpop.permute.xlu0 %1588
  %1592 = vrot.lane.b32.xlu0 %v1392, 64
  %v1593 = vpop.permute.xlu0 %1592
  %v1595 = vsel %vm210, %v1589, %v1593
  %v1597 = vsel %vm409, %v1595, 0
  %1599 = vmatprep.subr.mxu0 0.0
  %1600 = vmatpush1.msra.mxu0 %v200
  %1601 = vmatprep.subr.mxu0 0.0
  %1602 = vmatpush1.msra.mxu0 %v201
  %1603 = vmatprep.subr.mxu0 0.0
  %1604 = vmatpush1.msra.mxu0 %v202
  %1605 = vmatprep.subr.mxu0 0.0
  %1606 = vmatpush1.msra.mxu0 %v203
  %1607 = vmatprep.subr.mxu0 0.0
  %1608 = vmatpush1.msra.mxu0 %v204
  %1609 = vmatprep.subr.mxu0 0.0
  %1610 = vmatpush1.msra.mxu0 %v205
  %1611 = vmatprep.subr.mxu0 0.0
  %1612 = vmatpush1.msra.mxu0 %v206
  %1613 = vmatprep.subr.mxu0 0.0
  %1614 = vmatpush1.msra.mxu0 %v207
  %1615 = vmatprep.subr.mxu0 0.0
  %1616 = vmatpush1.msra.mxu0 0.0
  %1617 = vmatprep.subr.mxu0 0.0
  %1618 = vmatpush1.msra.mxu0 0.0
  %1619 = vmatprep.subr.mxu0 0.0
  %1620 = vmatpush1.msra.mxu0 0.0
  %1621 = vmatprep.subr.mxu0 0.0
  %1622 = vmatpush1.msra.mxu0 0.0
  %1623 = vmatprep.subr.mxu0 0.0
  %1624 = vmatpush1.msra.mxu0 0.0
  %1625 = vmatprep.subr.mxu0 0.0
  %1626 = vmatpush1.msra.mxu0 0.0
  %1627 = vmatprep.subr.mxu0 0.0
  %1628 = vmatpush1.msra.mxu0 0.0
  %1629 = vmatprep.subr.mxu0 0.0
  %1630 = vmatpush1.msra.mxu0 0.0
  %1631 = vmatprep.subr.mxu0 0.0
  %1632 = vmatpush1.msra.mxu0 0.0
  %1633 = vmatprep.subr.mxu0 0.0
  %1634 = vmatpush1.msra.mxu0 0.0
  %1635 = vmatprep.subr.mxu0 0.0
  %1636 = vmatpush1.msra.mxu0 0.0
  %1637 = vmatprep.subr.mxu0 0.0
  %1638 = vmatpush1.msra.mxu0 0.0
  %1639 = vmatprep.subr.mxu0 0.0
  %1640 = vmatpush1.msra.mxu0 0.0
  %1641 = vmatprep.subr.mxu0 0.0
  %1642 = vmatpush1.msra.mxu0 0.0
  %1643 = vmatprep.subr.mxu0 0.0
  %1644 = vmatpush1.msra.mxu0 0.0
  %1645 = vmatprep.subr.mxu0 0.0
  %1646 = vmatpush1.msra.mxu0 0.0
  %1647 = vmatprep.subr.mxu0 0.0
  %1648 = vmatpush1.msra.mxu0 0.0
  %1649 = vmatprep.subr.mxu0 0.0
  %1650 = vmatpush1.msra.mxu0 0.0
  %1651 = vmatprep.subr.mxu0 0.0
  %1652 = vmatpush1.msra.mxu0 0.0
  %1653 = vmatprep.subr.mxu0 0.0
  %1654 = vmatpush1.msra.mxu0 0.0
  %1655 = vmatprep.subr.mxu0 0.0
  %1656 = vmatpush1.msra.mxu0 0.0
  %1657 = vmatprep.subr.mxu0 0.0
  %1658 = vmatpush1.msra.mxu0 0.0
  %1659 = vmatprep.subr.mxu0 0.0
  %1660 = vmatpush1.msra.mxu0 0.0
  %1661 = vmatprep.subr.mxu0 0.0
  %1662 = vmatpush1.msra.mxu0 0.0
  %1663 = vmatprep.mubr.f32.mxu0 0.0
  %1664 = vmatmul.mubr.f32.gmra.mrb[0].mxu0 %v1597
  %v1665 = vpop.f32.mrb[0].mxu0
  %v1666 = vadd.f32 %v706, %v1665
  %v1667 = vpop.f32.mrb[0].mxu0
  %1668 = vdwg.mxu0
  %v1669 = vtanh.pop %v1666
  %v1670 = vmul.f32 %v1669, 0.5
  %v1671 = vadd.f32 %v1670, 0.5
  %v1672 = vmul.f32 %v1671, %v1386
  %1674 = vrot.lane.b32.xlu0 %v1669, 64
  %v1675 = vpop.permute.xlu0 %1674
  %v1677 = vmul.f32 %v1671, %v1675
  %1679 = vrot.lane.b32.xlu0 %v1677, 32
  %v1680 = vpop.permute.xlu0 %1679
  %v1682 = vadd.f32 %v1672, %v1680
  %v1683 = vtanh.pop %v1682
  %1685 = vrot.lane.b32.xlu0 %v1683, 64
  %v1686 = vpop.permute.xlu0 %1685
  %v1688 = vmul.f32 %v1671, %v1686
  %1690 = vrot.lane.b32.xlu0 %v1488, 32
  %v1691 = vpop.permute.xlu0 %1690
  %v1692 = vsel %vm210, %v1691, 0
  %1694 = vmatprep.subr.mxu0 0.0
  %1695 = vmatpush1.msra.mxu0 %v188
  %1696 = vmatprep.subr.mxu0 0.0
  %1697 = vmatpush1.msra.mxu0 %v189
  %1698 = vmatprep.subr.mxu0 0.0
  %1699 = vmatpush1.msra.mxu0 %v190
  %1700 = vmatprep.subr.mxu0 0.0
  %1701 = vmatpush1.msra.mxu0 %v191
  %1702 = vmatprep.subr.mxu0 0.0
  %1703 = vmatpush1.msra.mxu0 0.0
  %1704 = vmatprep.subr.mxu0 0.0
  %1705 = vmatpush1.msra.mxu0 0.0
  %1706 = vmatprep.subr.mxu0 0.0
  %1707 = vmatpush1.msra.mxu0 0.0
  %1708 = vmatprep.subr.mxu0 0.0
  %1709 = vmatpush1.msra.mxu0 0.0
  %1710 = vmatprep.subr.mxu0 0.0
  %1711 = vmatpush1.msra.mxu0 0.0
  %1712 = vmatprep.subr.mxu0 0.0
  %1713 = vmatpush1.msra.mxu0 0.0
  %1714 = vmatprep.subr.mxu0 0.0
  %1715 = vmatpush1.msra.mxu0 0.0
  %1716 = vmatprep.subr.mxu0 0.0
  %1717 = vmatpush1.msra.mxu0 0.0
  %1718 = vmatprep.subr.mxu0 0.0
  %1719 = vmatpush1.msra.mxu0 0.0
  %1720 = vmatprep.subr.mxu0 0.0
  %1721 = vmatpush1.msra.mxu0 0.0
  %1722 = vmatprep.subr.mxu0 0.0
  %1723 = vmatpush1.msra.mxu0 0.0
  %1724 = vmatprep.subr.mxu0 0.0
  %1725 = vmatpush1.msra.mxu0 0.0
  %1726 = vmatprep.subr.mxu0 0.0
  %1727 = vmatpush1.msra.mxu0 0.0
  %1728 = vmatprep.subr.mxu0 0.0
  %1729 = vmatpush1.msra.mxu0 0.0
  %1730 = vmatprep.subr.mxu0 0.0
  %1731 = vmatpush1.msra.mxu0 0.0
  %1732 = vmatprep.subr.mxu0 0.0
  %1733 = vmatpush1.msra.mxu0 0.0
  %1734 = vmatprep.subr.mxu0 0.0
  %1735 = vmatpush1.msra.mxu0 0.0
  %1736 = vmatprep.subr.mxu0 0.0
  %1737 = vmatpush1.msra.mxu0 0.0
  %1738 = vmatprep.subr.mxu0 0.0
  %1739 = vmatpush1.msra.mxu0 0.0
  %1740 = vmatprep.subr.mxu0 0.0
  %1741 = vmatpush1.msra.mxu0 0.0
  %1742 = vmatprep.subr.mxu0 0.0
  %1743 = vmatpush1.msra.mxu0 0.0
  %1744 = vmatprep.subr.mxu0 0.0
  %1745 = vmatpush1.msra.mxu0 0.0
  %1746 = vmatprep.subr.mxu0 0.0
  %1747 = vmatpush1.msra.mxu0 0.0
  %1748 = vmatprep.subr.mxu0 0.0
  %1749 = vmatpush1.msra.mxu0 0.0
  %1750 = vmatprep.subr.mxu0 0.0
  %1751 = vmatpush1.msra.mxu0 0.0
  %1752 = vmatprep.subr.mxu0 0.0
  %1753 = vmatpush1.msra.mxu0 0.0
  %1754 = vmatprep.subr.mxu0 0.0
  %1755 = vmatpush1.msra.mxu0 0.0
  %1756 = vmatprep.subr.mxu0 0.0
  %1757 = vmatpush1.msra.mxu0 0.0
  %1758 = vmatprep.mubr.f32.mxu0 0.0
  %1759 = vmatmul.mubr.f32.gmra.mrb[0].mxu0 %v1692
  %v1760 = vpop.f32.mrb[0].mxu0
  %v1761 = vadd.f32 0.0, %v1760
  %v1762 = vpop.f32.mrb[0].mxu0
  %1763 = vdwg.mxu0
  %v1764 = vadd.f32 %v180, %v1761
  %v1765 = vtanh.pop %v1764
  %v1766 = vmul.f32 %v1765, 0.5
  %v1767 = vadd.f32 %v1766, 0.5
  %v1768 = vmul.f32 %v1767, %v1482
  %1770 = vrot.lane.b32.xlu0 %v1765, 64
  %v1771 = vpop.permute.xlu0 %1770
  %v1773 = vmul.f32 %v1767, %v1771
  %1775 = vrot.lane.b32.xlu0 %v1773, 32
  %v1776 = vpop.permute.xlu0 %1775
  %v1778 = vadd.f32 %v1768, %v1776
  %v1779 = vtanh.pop %v1778
  %1781 = vrot.lane.b32.xlu0 %v1779, 64
  %v1782 = vpop.permute.xlu0 %1781
  %v1784 = vmul.f32 %v1767, %v1782
  %1787 = vrot.lane.b32.xlu0 %v1587, 64
  %v1788 = vpop.permute.xlu0 %1787
  %v1790 = vsel %vm210, %v1691, %v1788
  %v1792 = vsel %vm409, %v1790, 0
  %1794 = vmatprep.subr.mxu0 0.0
  %1795 = vmatpush1.msra.mxu0 %v192
  %1796 = vmatprep.subr.mxu0 0.0
  %1797 = vmatpush1.msra.mxu0 %v193
  %1798 = vmatprep.subr.mxu0 0.0
  %1799 = vmatpush1.msra.mxu0 %v194
  %1800 = vmatprep.subr.mxu0 0.0
  %1801 = vmatpush1.msra.mxu0 %v195
  %1802 = vmatprep.subr.mxu0 0.0
  %1803 = vmatpush1.msra.mxu0 %v196
  %1804 = vmatprep.subr.mxu0 0.0
  %1805 = vmatpush1.msra.mxu0 %v197
  %1806 = vmatprep.subr.mxu0 0.0
  %1807 = vmatpush1.msra.mxu0 %v198
  %1808 = vmatprep.subr.mxu0 0.0
  %1809 = vmatpush1.msra.mxu0 %v199
  %1810 = vmatprep.subr.mxu0 0.0
  %1811 = vmatpush1.msra.mxu0 0.0
  %1812 = vmatprep.subr.mxu0 0.0
  %1813 = vmatpush1.msra.mxu0 0.0
  %1814 = vmatprep.subr.mxu0 0.0
  %1815 = vmatpush1.msra.mxu0 0.0
  %1816 = vmatprep.subr.mxu0 0.0
  %1817 = vmatpush1.msra.mxu0 0.0
  %1818 = vmatprep.subr.mxu0 0.0
  %1819 = vmatpush1.msra.mxu0 0.0
  %1820 = vmatprep.subr.mxu0 0.0
  %1821 = vmatpush1.msra.mxu0 0.0
  %1822 = vmatprep.subr.mxu0 0.0
  %1823 = vmatpush1.msra.mxu0 0.0
  %1824 = vmatprep.subr.mxu0 0.0
  %1825 = vmatpush1.msra.mxu0 0.0
  %1826 = vmatprep.subr.mxu0 0.0
  %1827 = vmatpush1.msra.mxu0 0.0
  %1828 = vmatprep.subr.mxu0 0.0
  %1829 = vmatpush1.msra.mxu0 0.0
  %1830 = vmatprep.subr.mxu0 0.0
  %1831 = vmatpush1.msra.mxu0 0.0
  %1832 = vmatprep.subr.mxu0 0.0
  %1833 = vmatpush1.msra.mxu0 0.0
  %1834 = vmatprep.subr.mxu0 0.0
  %1835 = vmatpush1.msra.mxu0 0.0
  %1836 = vmatprep.subr.mxu0 0.0
  %1837 = vmatpush1.msra.mxu0 0.0
  %1838 = vmatprep.subr.mxu0 0.0
  %1839 = vmatpush1.msra.mxu0 0.0
  %1840 = vmatprep.subr.mxu0 0.0
  %1841 = vmatpush1.msra.mxu0 0.0
  %1842 = vmatprep.subr.mxu0 0.0
  %1843 = vmatpush1.msra.mxu0 0.0
  %1844 = vmatprep.subr.mxu0 0.0
  %1845 = vmatpush1.msra.mxu0 0.0
  %1846 = vmatprep.subr.mxu0 0.0
  %1847 = vmatpush1.msra.mxu0 0.0
  %1848 = vmatprep.subr.mxu0 0.0
  %1849 = vmatpush1.msra.mxu0 0.0
  %1850 = vmatprep.subr.mxu0 0.0
  %1851 = vmatpush1.msra.mxu0 0.0
  %1852 = vmatprep.subr.mxu0 0.0
  %1853 = vmatpush1.msra.mxu0 0.0
  %1854 = vmatprep.subr.mxu0 0.0
  %1855 = vmatpush1.msra.mxu0 0.0
  %1856 = vmatprep.subr.mxu0 0.0
  %1857 = vmatpush1.msra.mxu0 0.0
  %1858 = vmatprep.mubr.f32.mxu0 0.0
  %1859 = vmatmul.mubr.f32.gmra.mrb[0].mxu0 %v1792
  %v1860 = vpop.f32.mrb[0].mxu0
  %v1861 = vadd.f32 %v407, %v1860
  %v1862 = vpop.f32.mrb[0].mxu0
  %1863 = vdwg.mxu0
  %v1864 = vtanh.pop %v1861
  %v1865 = vmul.f32 %v1864, 0.5
  %v1866 = vadd.f32 %v1865, 0.5
  %v1867 = vmul.f32 %v1866, %v1581
  %1869 = vrot.lane.b32.xlu0 %v1864, 64
  %v1870 = vpop.permute.xlu0 %1869
  %v1872 = vmul.f32 %v1866, %v1870
  %1874 = vrot.lane.b32.xlu0 %v1872, 32
  %v1875 = vpop.permute.xlu0 %1874
  %v1877 = vadd.f32 %v1867, %v1875
  %v1878 = vtanh.pop %v1877
  %1880 = vrot.lane.b32.xlu0 %v1878, 64
  %v1881 = vpop.permute.xlu0 %1880
  %v1883 = vmul.f32 %v1866, %v1881
  %1884 = vrot.lane.b32.xlu0 %v1587, 32
  %v1885 = vpop.permute.xlu0 %1884
  %1888 = vrot.lane.b32.xlu0 %v1688, 64
  %v1889 = vpop.permute.xlu0 %1888
  %v1891 = vsel %vm210, %v1885, %v1889
  %v1893 = vsel %vm409, %v1891, 0
  %1895 = vmatprep.subr.mxu0 0.0
  %1896 = vmatpush1.msra.mxu0 %v200
  %1897 = vmatprep.subr.mxu0 0.0
  %1898 = vmatpush1.msra.mxu0 %v201
  %1899 = vmatprep.subr.mxu0 0.0
  %1900 = vmatpush1.msra.mxu0 %v202
  %1901 = vmatprep.subr.mxu0 0.0
  %1902 = vmatpush1.msra.mxu0 %v203
  %1903 = vmatprep.subr.mxu0 0.0
  %1904 = vmatpush1.msra.mxu0 %v204
  %1905 = vmatprep.subr.mxu0 0.0
  %1906 = vmatpush1.msra.mxu0 %v205
  %1907 = vmatprep.subr.mxu0 0.0
  %1908 = vmatpush1.msra.mxu0 %v206
  %1909 = vmatprep.subr.mxu0 0.0
  %1910 = vmatpush1.msra.mxu0 %v207
  %1911 = vmatprep.subr.mxu0 0.0
  %1912 = vmatpush1.msra.mxu0 0.0
  %1913 = vmatprep.subr.mxu0 0.0
  %1914 = vmatpush1.msra.mxu0 0.0
  %1915 = vmatprep.subr.mxu0 0.0
  %1916 = vmatpush1.msra.mxu0 0.0
  %1917 = vmatprep.subr.mxu0 0.0
  %1918 = vmatpush1.msra.mxu0 0.0
  %1919 = vmatprep.subr.mxu0 0.0
  %1920 = vmatpush1.msra.mxu0 0.0
  %1921 = vmatprep.subr.mxu0 0.0
  %1922 = vmatpush1.msra.mxu0 0.0
  %1923 = vmatprep.subr.mxu0 0.0
  %1924 = vmatpush1.msra.mxu0 0.0
  %1925 = vmatprep.subr.mxu0 0.0
  %1926 = vmatpush1.msra.mxu0 0.0
  %1927 = vmatprep.subr.mxu0 0.0
  %1928 = vmatpush1.msra.mxu0 0.0
  %1929 = vmatprep.subr.mxu0 0.0
  %1930 = vmatpush1.msra.mxu0 0.0
  %1931 = vmatprep.subr.mxu0 0.0
  %1932 = vmatpush1.msra.mxu0 0.0
  %1933 = vmatprep.subr.mxu0 0.0
  %1934 = vmatpush1.msra.mxu0 0.0
  %1935 = vmatprep.subr.mxu0 0.0
  %1936 = vmatpush1.msra.mxu0 0.0
  %1937 = vmatprep.subr.mxu0 0.0
  %1938 = vmatpush1.msra.mxu0 0.0
  %1939 = vmatprep.subr.mxu0 0.0
  %1940 = vmatpush1.msra.mxu0 0.0
  %1941 = vmatprep.subr.mxu0 0.0
  %1942 = vmatpush1.msra.mxu0 0.0
  %1943 = vmatprep.subr.mxu0 0.0
  %1944 = vmatpush1.msra.mxu0 0.0
  %1945 = vmatprep.subr.mxu0 0.0
  %1946 = vmatpush1.msra.mxu0 0.0
  %1947 = vmatprep.subr.mxu0 0.0
  %1948 = vmatpush1.msra.mxu0 0.0
  %1949 = vmatprep.subr.mxu0 0.0
  %1950 = vmatpush1.msra.mxu0 0.0
  %1951 = vmatprep.subr.mxu0 0.0
  %1952 = vmatpush1.msra.mxu0 0.0
  %1953 = vmatprep.subr.mxu0 0.0
  %1954 = vmatpush1.msra.mxu0 0.0
  %1955 = vmatprep.subr.mxu0 0.0
  %1956 = vmatpush1.msra.mxu0 0.0
  %1957 = vmatprep.subr.mxu0 0.0
  %1958 = vmatpush1.msra.mxu0 0.0
  %1959 = vmatprep.mubr.f32.mxu0 0.0
  %1960 = vmatmul.mubr.f32.gmra.mrb[0].mxu0 %v1893
  %v1961 = vpop.f32.mrb[0].mxu0
  %v1962 = vadd.f32 %v706, %v1961
  %v1963 = vpop.f32.mrb[0].mxu0
  %1964 = vdwg.mxu0
  %v1965 = vtanh.pop %v1962
  %v1966 = vmul.f32 %v1965, 0.5
  %v1967 = vadd.f32 %v1966, 0.5
  %v1968 = vmul.f32 %v1967, %v1682
  %1970 = vrot.lane.b32.xlu0 %v1965, 64
  %v1971 = vpop.permute.xlu0 %1970
  %v1973 = vmul.f32 %v1967, %v1971
  %1975 = vrot.lane.b32.xlu0 %v1973, 32
  %v1976 = vpop.permute.xlu0 %1975
  %v1978 = vadd.f32 %v1968, %v1976
  %v1979 = vtanh.pop %v1978
  %1981 = vrot.lane.b32.xlu0 %v1979, 64
  %v1982 = vpop.permute.xlu0 %1981
  %v1984 = vmul.f32 %v1967, %v1982
  %1986 = vrot.lane.b32.xlu0 %v1784, 32
  %v1987 = vpop.permute.xlu0 %1986
  %v1988 = vsel %vm210, %v1987, 0
  %1990 = vmatprep.subr.mxu0 0.0
  %1991 = vmatpush1.msra.mxu0 %v188
  %1992 = vmatprep.subr.mxu0 0.0
  %1993 = vmatpush1.msra.mxu0 %v189
  %1994 = vmatprep.subr.mxu0 0.0
  %1995 = vmatpush1.msra.mxu0 %v190
  %1996 = vmatprep.subr.mxu0 0.0
  %1997 = vmatpush1.msra.mxu0 %v191
  %1998 = vmatprep.subr.mxu0 0.0
  %1999 = vmatpush1.msra.mxu0 0.0
  %2000 = vmatprep.subr.mxu0 0.0
  %2001 = vmatpush1.msra.mxu0 0.0
  %2002 = vmatprep.subr.mxu0 0.0
  %2003 = vmatpush1.msra.mxu0 0.0
  %2004 = vmatprep.subr.mxu0 0.0
  %2005 = vmatpush1.msra.mxu0 0.0
  %2006 = vmatprep.subr.mxu0 0.0
  %2007 = vmatpush1.msra.mxu0 0.0
  %2008 = vmatprep.subr.mxu0 0.0
  %2009 = vmatpush1.msra.mxu0 0.0
  %2010 = vmatprep.subr.mxu0 0.0
  %2011 = vmatpush1.msra.mxu0 0.0
  %2012 = vmatprep.subr.mxu0 0.0
  %2013 = vmatpush1.msra.mxu0 0.0
  %2014 = vmatprep.subr.mxu0 0.0
  %2015 = vmatpush1.msra.mxu0 0.0
  %2016 = vmatprep.subr.mxu0 0.0
  %2017 = vmatpush1.msra.mxu0 0.0
  %2018 = vmatprep.subr.mxu0 0.0
  %2019 = vmatpush1.msra.mxu0 0.0
  %2020 = vmatprep.subr.mxu0 0.0
  %2021 = vmatpush1.msra.mxu0 0.0
  %2022 = vmatprep.subr.mxu0 0.0
  %2023 = vmatpush1.msra.mxu0 0.0
  %2024 = vmatprep.subr.mxu0 0.0
  %2025 = vmatpush1.msra.mxu0 0.0
  %2026 = vmatprep.subr.mxu0 0.0
  %2027 = vmatpush1.msra.mxu0 0.0
  %2028 = vmatprep.subr.mxu0 0.0
  %2029 = vmatpush1.msra.mxu0 0.0
  %2030 = vmatprep.subr.mxu0 0.0
  %2031 = vmatpush1.msra.mxu0 0.0
  %2032 = vmatprep.subr.mxu0 0.0
  %2033 = vmatpush1.msra.mxu0 0.0
  %2034 = vmatprep.subr.mxu0 0.0
  %2035 = vmatpush1.msra.mxu0 0.0
  %2036 = vmatprep.subr.mxu0 0.0
  %2037 = vmatpush1.msra.mxu0 0.0
  %2038 = vmatprep.subr.mxu0 0.0
  %2039 = vmatpush1.msra.mxu0 0.0
  %2040 = vmatprep.subr.mxu0 0.0
  %2041 = vmatpush1.msra.mxu0 0.0
  %2042 = vmatprep.subr.mxu0 0.0
  %2043 = vmatpush1.msra.mxu0 0.0
  %2044 = vmatprep.subr.mxu0 0.0
  %2045 = vmatpush1.msra.mxu0 0.0
  %2046 = vmatprep.subr.mxu0 0.0
  %2047 = vmatpush1.msra.mxu0 0.0
  %2048 = vmatprep.subr.mxu0 0.0
  %2049 = vmatpush1.msra.mxu0 0.0
  %2050 = vmatprep.subr.mxu0 0.0
  %2051 = vmatpush1.msra.mxu0 0.0
  %2052 = vmatprep.subr.mxu0 0.0
  %2053 = vmatpush1.msra.mxu0 0.0
  %2054 = vmatprep.mubr.f32.mxu0 0.0
  %2055 = vmatmul.mubr.f32.gmra.mrb[0].mxu0 %v1988
  %v2056 = vpop.f32.mrb[0].mxu0
  %v2057 = vadd.f32 0.0, %v2056
  %v2058 = vpop.f32.mrb[0].mxu0
  %2059 = vdwg.mxu0
  %v2060 = vadd.f32 %v185, %v2057
  %v2061 = vtanh.pop %v2060
  %v2062 = vmul.f32 %v2061, 0.5
  %v2063 = vadd.f32 %v2062, 0.5
  %v2064 = vmul.f32 %v2063, %v1778
  %2066 = vrot.lane.b32.xlu0 %v2061, 64
  %v2067 = vpop.permute.xlu0 %2066
  %v2069 = vmul.f32 %v2063, %v2067
  %2071 = vrot.lane.b32.xlu0 %v2069, 32
  %v2072 = vpop.permute.xlu0 %2071
  %v2074 = vadd.f32 %v2064, %v2072
  %v2075 = vtanh.pop %v2074
  %2077 = vrot.lane.b32.xlu0 %v2075, 64
  %v2078 = vpop.permute.xlu0 %2077
  %v2080 = vmul.f32 %v2063, %v2078
  %2083 = vrot.lane.b32.xlu0 %v1883, 64
  %v2084 = vpop.permute.xlu0 %2083
  %v2086 = vsel %vm210, %v1987, %v2084
  %v2088 = vsel %vm409, %v2086, 0
  %2090 = vmatprep.subr.mxu0 0.0
  %2091 = vmatpush1.msra.mxu0 %v192
  %2092 = vmatprep.subr.mxu0 0.0
  %2093 = vmatpush1.msra.mxu0 %v193
  %2094 = vmatprep.subr.mxu0 0.0
  %2095 = vmatpush1.msra.mxu0 %v194
  %2096 = vmatprep.subr.mxu0 0.0
  %2097 = vmatpush1.msra.mxu0 %v195
  %2098 = vmatprep.subr.mxu0 0.0
  %2099 = vmatpush1.msra.mxu0 %v196
  %2100 = vmatprep.subr.mxu0 0.0
  %2101 = vmatpush1.msra.mxu0 %v197
  %2102 = vmatprep.subr.mxu0 0.0
  %2103 = vmatpush1.msra.mxu0 %v198
  %2104 = vmatprep.subr.mxu0 0.0
  %2105 = vmatpush1.msra.mxu0 %v199
  %2106 = vmatprep.subr.mxu0 0.0
  %2107 = vmatpush1.msra.mxu0 0.0
  %2108 = vmatprep.subr.mxu0 0.0
  %2109 = vmatpush1.msra.mxu0 0.0
  %2110 = vmatprep.subr.mxu0 0.0
  %2111 = vmatpush1.msra.mxu0 0.0
  %2112 = vmatprep.subr.mxu0 0.0
  %2113 = vmatpush1.msra.mxu0 0.0
  %2114 = vmatprep.subr.mxu0 0.0
  %2115 = vmatpush1.msra.mxu0 0.0
  %2116 = vmatprep.subr.mxu0 0.0
  %2117 = vmatpush1.msra.mxu0 0.0
  %2118 = vmatprep.subr.mxu0 0.0
  %2119 = vmatpush1.msra.mxu0 0.0
  %2120 = vmatprep.subr.mxu0 0.0
  %2121 = vmatpush1.msra.mxu0 0.0
  %2122 = vmatprep.subr.mxu0 0.0
  %2123 = vmatpush1.msra.mxu0 0.0
  %2124 = vmatprep.subr.mxu0 0.0
  %2125 = vmatpush1.msra.mxu0 0.0
  %2126 = vmatprep.subr.mxu0 0.0
  %2127 = vmatpush1.msra.mxu0 0.0
  %2128 = vmatprep.subr.mxu0 0.0
  %2129 = vmatpush1.msra.mxu0 0.0
  %2130 = vmatprep.subr.mxu0 0.0
  %2131 = vmatpush1.msra.mxu0 0.0
  %2132 = vmatprep.subr.mxu0 0.0
  %2133 = vmatpush1.msra.mxu0 0.0
  %2134 = vmatprep.subr.mxu0 0.0
  %2135 = vmatpush1.msra.mxu0 0.0
  %2136 = vmatprep.subr.mxu0 0.0
  %2137 = vmatpush1.msra.mxu0 0.0
  %2138 = vmatprep.subr.mxu0 0.0
  %2139 = vmatpush1.msra.mxu0 0.0
  %2140 = vmatprep.subr.mxu0 0.0
  %2141 = vmatpush1.msra.mxu0 0.0
  %2142 = vmatprep.subr.mxu0 0.0
  %2143 = vmatpush1.msra.mxu0 0.0
  %2144 = vmatprep.subr.mxu0 0.0
  %2145 = vmatpush1.msra.mxu0 0.0
  %2146 = vmatprep.subr.mxu0 0.0
  %2147 = vmatpush1.msra.mxu0 0.0
  %2148 = vmatprep.subr.mxu0 0.0
  %2149 = vmatpush1.msra.mxu0 0.0
  %2150 = vmatprep.subr.mxu0 0.0
  %2151 = vmatpush1.msra.mxu0 0.0
  %2152 = vmatprep.subr.mxu0 0.0
  %2153 = vmatpush1.msra.mxu0 0.0
  %2154 = vmatprep.mubr.f32.mxu0 0.0
  %2155 = vmatmul.mubr.f32.gmra.mrb[0].mxu0 %v2088
  %v2156 = vpop.f32.mrb[0].mxu0
  %v2157 = vadd.f32 %v407, %v2156
  %v2158 = vpop.f32.mrb[0].mxu0
  %2159 = vdwg.mxu0
  %v2160 = vtanh.pop %v2157
  %v2161 = vmul.f32 %v2160, 0.5
  %v2162 = vadd.f32 %v2161, 0.5
  %v2163 = vmul.f32 %v2162, %v1877
  %2165 = vrot.lane.b32.xlu0 %v2160, 64
  %v2166 = vpop.permute.xlu0 %2165
  %v2168 = vmul.f32 %v2162, %v2166
  %2170 = vrot.lane.b32.xlu0 %v2168, 32
  %v2171 = vpop.permute.xlu0 %2170
  %v2173 = vadd.f32 %v2163, %v2171
  %v2174 = vtanh.pop %v2173
  %2176 = vrot.lane.b32.xlu0 %v2174, 64
  %v2177 = vpop.permute.xlu0 %2176
  %v2179 = vmul.f32 %v2162, %v2177
  %2180 = vrot.lane.b32.xlu0 %v1883, 32
  %v2181 = vpop.permute.xlu0 %2180
  %2184 = vrot.lane.b32.xlu0 %v1984, 64
  %v2185 = vpop.permute.xlu0 %2184
  %v2187 = vsel %vm210, %v2181, %v2185
  %v2189 = vsel %vm409, %v2187, 0
  %2191 = vmatprep.subr.mxu0 0.0
  %2192 = vmatpush1.msra.mxu0 %v200
  %2193 = vmatprep.subr.mxu0 0.0
  %2194 = vmatpush1.msra.mxu0 %v201
  %2195 = vmatprep.subr.mxu0 0.0
  %2196 = vmatpush1.msra.mxu0 %v202
  %2197 = vmatprep.subr.mxu0 0.0
  %2198 = vmatpush1.msra.mxu0 %v203
  %2199 = vmatprep.subr.mxu0 0.0
  %2200 = vmatpush1.msra.mxu0 %v204
  %2201 = vmatprep.subr.mxu0 0.0
  %2202 = vmatpush1.msra.mxu0 %v205
  %2203 = vmatprep.subr.mxu0 0.0
  %2204 = vmatpush1.msra.mxu0 %v206
  %2205 = vmatprep.subr.mxu0 0.0
  %2206 = vmatpush1.msra.mxu0 %v207
  %2207 = vmatprep.subr.mxu0 0.0
  %2208 = vmatpush1.msra.mxu0 0.0
  %2209 = vmatprep.subr.mxu0 0.0
  %2210 = vmatpush1.msra.mxu0 0.0
  %2211 = vmatprep.subr.mxu0 0.0
  %2212 = vmatpush1.msra.mxu0 0.0
  %2213 = vmatprep.subr.mxu0 0.0
  %2214 = vmatpush1.msra.mxu0 0.0
  %2215 = vmatprep.subr.mxu0 0.0
  %2216 = vmatpush1.msra.mxu0 0.0
  %2217 = vmatprep.subr.mxu0 0.0
  %2218 = vmatpush1.msra.mxu0 0.0
  %2219 = vmatprep.subr.mxu0 0.0
  %2220 = vmatpush1.msra.mxu0 0.0
  %2221 = vmatprep.subr.mxu0 0.0
  %2222 = vmatpush1.msra.mxu0 0.0
  %2223 = vmatprep.subr.mxu0 0.0
  %2224 = vmatpush1.msra.mxu0 0.0
  %2225 = vmatprep.subr.mxu0 0.0
  %2226 = vmatpush1.msra.mxu0 0.0
  %2227 = vmatprep.subr.mxu0 0.0
  %2228 = vmatpush1.msra.mxu0 0.0
  %2229 = vmatprep.subr.mxu0 0.0
  %2230 = vmatpush1.msra.mxu0 0.0
  %2231 = vmatprep.subr.mxu0 0.0
  %2232 = vmatpush1.msra.mxu0 0.0
  %2233 = vmatprep.subr.mxu0 0.0
  %2234 = vmatpush1.msra.mxu0 0.0
  %2235 = vmatprep.subr.mxu0 0.0
  %2236 = vmatpush1.msra.mxu0 0.0
  %2237 = vmatprep.subr.mxu0 0.0
  %2238 = vmatpush1.msra.mxu0 0.0
  %2239 = vmatprep.subr.mxu0 0.0
  %2240 = vmatpush1.msra.mxu0 0.0
  %2241 = vmatprep.subr.mxu0 0.0
  %2242 = vmatpush1.msra.mxu0 0.0
  %2243 = vmatprep.subr.mxu0 0.0
  %2244 = vmatpush1.msra.mxu0 0.0
  %2245 = vmatprep.subr.mxu0 0.0
  %2246 = vmatpush1.msra.mxu0 0.0
  %2247 = vmatprep.subr.mxu0 0.0
  %2248 = vmatpush1.msra.mxu0 0.0
  %2249 = vmatprep.subr.mxu0 0.0
  %2250 = vmatpush1.msra.mxu0 0.0
  %2251 = vmatprep.subr.mxu0 0.0
  %2252 = vmatpush1.msra.mxu0 0.0
  %2253 = vmatprep.subr.mxu0 0.0
  %2254 = vmatpush1.msra.mxu0 0.0
  %2255 = vmatprep.mubr.f32.mxu0 0.0
  %2256 = vmatmul.mubr.f32.gmra.mrb[0].mxu0 %v2189
  %v2257 = vpop.f32.mrb[0].mxu0
  %v2258 = vadd.f32 %v706, %v2257
  %v2259 = vpop.f32.mrb[0].mxu0
  %2260 = vdwg.mxu0
  %v2261 = vtanh.pop %v2258
  %v2262 = vmul.f32 %v2261, 0.5
  %v2263 = vadd.f32 %v2262, 0.5
  %v2264 = vmul.f32 %v2263, %v1978
  %2266 = vrot.lane.b32.xlu0 %v2261, 64
  %v2267 = vpop.permute.xlu0 %2266
  %v2269 = vmul.f32 %v2263, %v2267
  %2271 = vrot.lane.b32.xlu0 %v2269, 32
  %v2272 = vpop.permute.xlu0 %2271
  %v2274 = vadd.f32 %v2264, %v2272
  %v2275 = vtanh.pop %v2274
  %2277 = vrot.lane.b32.xlu0 %v2275, 64
  %v2278 = vpop.permute.xlu0 %2277
  %v2280 = vmul.f32 %v2263, %v2278
  %2282 = vrot.lane.b32.xlu0 %v2080, 32
  %v2283 = vpop.permute.xlu0 %2282
  %2286 = vrot.lane.b32.xlu0 %v2179, 64
  %v2287 = vpop.permute.xlu0 %2286
  %v2289 = vsel %vm210, %v2283, %v2287
  %v2291 = vsel %vm409, %v2289, 0
  %2293 = vmatprep.subr.mxu0 0.0
  %2294 = vmatpush1.msra.mxu0 %v192
  %2295 = vmatprep.subr.mxu0 0.0
  %2296 = vmatpush1.msra.mxu0 %v193
  %2297 = vmatprep.subr.mxu0 0.0
  %2298 = vmatpush1.msra.mxu0 %v194
  %2299 = vmatprep.subr.mxu0 0.0
  %2300 = vmatpush1.msra.mxu0 %v195
  %2301 = vmatprep.subr.mxu0 0.0
  %2302 = vmatpush1.msra.mxu0 %v196
  %2303 = vmatprep.subr.mxu0 0.0
  %2304 = vmatpush1.msra.mxu0 %v197
  %2305 = vmatprep.subr.mxu0 0.0
  %2306 = vmatpush1.msra.mxu0 %v198
  %2307 = vmatprep.subr.mxu0 0.0
  %2308 = vmatpush1.msra.mxu0 %v199
  %2309 = vmatprep.subr.mxu0 0.0
  %2310 = vmatpush1.msra.mxu0 0.0
  %2311 = vmatprep.subr.mxu0 0.0
  %2312 = vmatpush1.msra.mxu0 0.0
  %2313 = vmatprep.subr.mxu0 0.0
  %2314 = vmatpush1.msra.mxu0 0.0
  %2315 = vmatprep.subr.mxu0 0.0
  %2316 = vmatpush1.msra.mxu0 0.0
  %2317 = vmatprep.subr.mxu0 0.0
  %2318 = vmatpush1.msra.mxu0 0.0
  %2319 = vmatprep.subr.mxu0 0.0
  %2320 = vmatpush1.msra.mxu0 0.0
  %2321 = vmatprep.subr.mxu0 0.0
  %2322 = vmatpush1.msra.mxu0 0.0
  %2323 = vmatprep.subr.mxu0 0.0
  %2324 = vmatpush1.msra.mxu0 0.0
  %2325 = vmatprep.subr.mxu0 0.0
  %2326 = vmatpush1.msra.mxu0 0.0
  %2327 = vmatprep.subr.mxu0 0.0
  %2328 = vmatpush1.msra.mxu0 0.0
  %2329 = vmatprep.subr.mxu0 0.0
  %2330 = vmatpush1.msra.mxu0 0.0
  %2331 = vmatprep.subr.mxu0 0.0
  %2332 = vmatpush1.msra.mxu0 0.0
  %2333 = vmatprep.subr.mxu0 0.0
  %2334 = vmatpush1.msra.mxu0 0.0
  %2335 = vmatprep.subr.mxu0 0.0
  %2336 = vmatpush1.msra.mxu0 0.0
  %2337 = vmatprep.subr.mxu0 0.0
  %2338 = vmatpush1.msra.mxu0 0.0
  %2339 = vmatprep.subr.mxu0 0.0
  %2340 = vmatpush1.msra.mxu0 0.0
  %2341 = vmatprep.subr.mxu0 0.0
  %2342 = vmatpush1.msra.mxu0 0.0
  %2343 = vmatprep.subr.mxu0 0.0
  %2344 = vmatpush1.msra.mxu0 0.0
  %2345 = vmatprep.subr.mxu0 0.0
  %2346 = vmatpush1.msra.mxu0 0.0
  %2347 = vmatprep.subr.mxu0 0.0
  %2348 = vmatpush1.msra.mxu0 0.0
  %2349 = vmatprep.subr.mxu0 0.0
  %2350 = vmatpush1.msra.mxu0 0.0
  %2351 = vmatprep.subr.mxu0 0.0
  %2352 = vmatpush1.msra.mxu0 0.0
  %2353 = vmatprep.subr.mxu0 0.0
  %2354 = vmatpush1.msra.mxu0 0.0
  %2355 = vmatprep.subr.mxu0 0.0
  %2356 = vmatpush1.msra.mxu0 0.0
  %2357 = vmatprep.mubr.f32.mxu0 0.0
  %2358 = vmatmul.mubr.f32.gmra.mrb[0].mxu0 %v2291
  %v2359 = vpop.f32.mrb[0].mxu0
  %v2360 = vadd.f32 %v407, %v2359
  %v2361 = vpop.f32.mrb[0].mxu0
  %2362 = vdwg.mxu0
  %v2363 = vtanh.pop %v2360
  %v2364 = vmul.f32 %v2363, 0.5
  %v2365 = vadd.f32 %v2364, 0.5
  %v2366 = vmul.f32 %v2365, %v2173
  %2368 = vrot.lane.b32.xlu0 %v2363, 64
  %v2369 = vpop.permute.xlu0 %2368
  %v2371 = vmul.f32 %v2365, %v2369
  %2373 = vrot.lane.b32.xlu0 %v2371, 32
  %v2374 = vpop.permute.xlu0 %2373
  %v2376 = vadd.f32 %v2366, %v2374
  %v2377 = vtanh.pop %v2376
  %2379 = vrot.lane.b32.xlu0 %v2377, 64
  %v2380 = vpop.permute.xlu0 %2379
  %v2382 = vmul.f32 %v2365, %v2380
  %2383 = vrot.lane.b32.xlu0 %v2179, 32
  %v2384 = vpop.permute.xlu0 %2383
  %2387 = vrot.lane.b32.xlu0 %v2280, 64
  %v2388 = vpop.permute.xlu0 %2387
  %v2390 = vsel %vm210, %v2384, %v2388
  %v2392 = vsel %vm409, %v2390, 0
  %2394 = vmatprep.subr.mxu0 0.0
  %2395 = vmatpush1.msra.mxu0 %v200
  %2396 = vmatprep.subr.mxu0 0.0
  %2397 = vmatpush1.msra.mxu0 %v201
  %2398 = vmatprep.subr.mxu0 0.0
  %2399 = vmatpush1.msra.mxu0 %v202
  %2400 = vmatprep.subr.mxu0 0.0
  %2401 = vmatpush1.msra.mxu0 %v203
  %2402 = vmatprep.subr.mxu0 0.0
  %2403 = vmatpush1.msra.mxu0 %v204
  %2404 = vmatprep.subr.mxu0 0.0
  %2405 = vmatpush1.msra.mxu0 %v205
  %2406 = vmatprep.subr.mxu0 0.0
  %2407 = vmatpush1.msra.mxu0 %v206
  %2408 = vmatprep.subr.mxu0 0.0
  %2409 = vmatpush1.msra.mxu0 %v207
  %2410 = vmatprep.subr.mxu0 0.0
  %2411 = vmatpush1.msra.mxu0 0.0
  %2412 = vmatprep.subr.mxu0 0.0
  %2413 = vmatpush1.msra.mxu0 0.0
  %2414 = vmatprep.subr.mxu0 0.0
  %2415 = vmatpush1.msra.mxu0 0.0
  %2416 = vmatprep.subr.mxu0 0.0
  %2417 = vmatpush1.msra.mxu0 0.0
  %2418 = vmatprep.subr.mxu0 0.0
  %2419 = vmatpush1.msra.mxu0 0.0
  %2420 = vmatprep.subr.mxu0 0.0
  %2421 = vmatpush1.msra.mxu0 0.0
  %2422 = vmatprep.subr.mxu0 0.0
  %2423 = vmatpush1.msra.mxu0 0.0
  %2424 = vmatprep.subr.mxu0 0.0
  %2425 = vmatpush1.msra.mxu0 0.0
  %2426 = vmatprep.subr.mxu0 0.0
  %2427 = vmatpush1.msra.mxu0 0.0
  %2428 = vmatprep.subr.mxu0 0.0
  %2429 = vmatpush1.msra.mxu0 0.0
  %2430 = vmatprep.subr.mxu0 0.0
  %2431 = vmatpush1.msra.mxu0 0.0
  %2432 = vmatprep.subr.mxu0 0.0
  %2433 = vmatpush1.msra.mxu0 0.0
  %2434 = vmatprep.subr.mxu0 0.0
  %2435 = vmatpush1.msra.mxu0 0.0
  %2436 = vmatprep.subr.mxu0 0.0
  %2437 = vmatpush1.msra.mxu0 0.0
  %2438 = vmatprep.subr.mxu0 0.0
  %2439 = vmatpush1.msra.mxu0 0.0
  %2440 = vmatprep.subr.mxu0 0.0
  %2441 = vmatpush1.msra.mxu0 0.0
  %2442 = vmatprep.subr.mxu0 0.0
  %2443 = vmatpush1.msra.mxu0 0.0
  %2444 = vmatprep.subr.mxu0 0.0
  %2445 = vmatpush1.msra.mxu0 0.0
  %2446 = vmatprep.subr.mxu0 0.0
  %2447 = vmatpush1.msra.mxu0 0.0
  %2448 = vmatprep.subr.mxu0 0.0
  %2449 = vmatpush1.msra.mxu0 0.0
  %2450 = vmatprep.subr.mxu0 0.0
  %2451 = vmatpush1.msra.mxu0 0.0
  %2452 = vmatprep.subr.mxu0 0.0
  %2453 = vmatpush1.msra.mxu0 0.0
  %2454 = vmatprep.subr.mxu0 0.0
  %2455 = vmatpush1.msra.mxu0 0.0
  %2456 = vmatprep.subr.mxu0 0.0
  %2457 = vmatpush1.msra.mxu0 0.0
  %2458 = vmatprep.mubr.f32.mxu0 0.0
  %2459 = vmatmul.mubr.f32.gmra.mrb[0].mxu0 %v2392
  %v2460 = vpop.f32.mrb[0].mxu0
  %v2461 = vadd.f32 %v706, %v2460
  %v2462 = vpop.f32.mrb[0].mxu0
  %2463 = vdwg.mxu0
  %v2464 = vtanh.pop %v2461
  %v2465 = vmul.f32 %v2464, 0.5
  %v2466 = vadd.f32 %v2465, 0.5
  %v2467 = vmul.f32 %v2466, %v2274
  %2469 = vrot.lane.b32.xlu0 %v2464, 64
  %v2470 = vpop.permute.xlu0 %2469
  %v2472 = vmul.f32 %v2466, %v2470
  %2474 = vrot.lane.b32.xlu0 %v2472, 32
  %v2475 = vpop.permute.xlu0 %2474
  %v2477 = vadd.f32 %v2467, %v2475
  %v2478 = vtanh.pop %v2477
  %2480 = vrot.lane.b32.xlu0 %v2478, 64
  %v2481 = vpop.permute.xlu0 %2480
  %v2483 = vmul.f32 %v2466, %v2481
  %2485 = vrot.lane.b32.xlu0 %v2382, 32
  %v2486 = vpop.permute.xlu0 %2485
  %2489 = vrot.lane.b32.xlu0 %v2483, 64
  %v2490 = vpop.permute.xlu0 %2489
  %v2492 = vsel %vm210, %v2486, %v2490
  %v2494 = vsel %vm409, %v2492, 0
  %2496 = vmatprep.subr.mxu0 0.0
  %2497 = vmatpush1.msra.mxu0 %v200
  %2498 = vmatprep.subr.mxu0 0.0
  %2499 = vmatpush1.msra.mxu0 %v201
  %2500 = vmatprep.subr.mxu0 0.0
  %2501 = vmatpush1.msra.mxu0 %v202
  %2502 = vmatprep.subr.mxu0 0.0
  %2503 = vmatpush1.msra.mxu0 %v203
  %2504 = vmatprep.subr.mxu0 0.0
  %2505 = vmatpush1.msra.mxu0 %v204
  %2506 = vmatprep.subr.mxu0 0.0
  %2507 = vmatpush1.msra.mxu0 %v205
  %2508 = vmatprep.subr.mxu0 0.0
  %2509 = vmatpush1.msra.mxu0 %v206
  %2510 = vmatprep.subr.mxu0 0.0
  %2511 = vmatpush1.msra.mxu0 %v207
  %2512 = vmatprep.subr.mxu0 0.0
  %2513 = vmatpush1.msra.mxu0 0.0
  %2514 = vmatprep.subr.mxu0 0.0
  %2515 = vmatpush1.msra.mxu0 0.0
  %2516 = vmatprep.subr.mxu0 0.0
  %2517 = vmatpush1.msra.mxu0 0.0
  %2518 = vmatprep.subr.mxu0 0.0
  %2519 = vmatpush1.msra.mxu0 0.0
  %2520 = vmatprep.subr.mxu0 0.0
  %2521 = vmatpush1.msra.mxu0 0.0
  %2522 = vmatprep.subr.mxu0 0.0
  %2523 = vmatpush1.msra.mxu0 0.0
  %2524 = vmatprep.subr.mxu0 0.0
  %2525 = vmatpush1.msra.mxu0 0.0
  %2526 = vmatprep.subr.mxu0 0.0
  %2527 = vmatpush1.msra.mxu0 0.0
  %2528 = vmatprep.subr.mxu0 0.0
  %2529 = vmatpush1.msra.mxu0 0.0
  %2530 = vmatprep.subr.mxu0 0.0
  %2531 = vmatpush1.msra.mxu0 0.0
  %2532 = vmatprep.subr.mxu0 0.0
  %2533 = vmatpush1.msra.mxu0 0.0
  %2534 = vmatprep.subr.mxu0 0.0
  %2535 = vmatpush1.msra.mxu0 0.0
  %2536 = vmatprep.subr.mxu0 0.0
  %2537 = vmatpush1.msra.mxu0 0.0
  %2538 = vmatprep.subr.mxu0 0.0
  %2539 = vmatpush1.msra.mxu0 0.0
  %2540 = vmatprep.subr.mxu0 0.0
  %2541 = vmatpush1.msra.mxu0 0.0
  %2542 = vmatprep.subr.mxu0 0.0
  %2543 = vmatpush1.msra.mxu0 0.0
  %2544 = vmatprep.subr.mxu0 0.0
  %2545 = vmatpush1.msra.mxu0 0.0
  %2546 = vmatprep.subr.mxu0 0.0
  %2547 = vmatpush1.msra.mxu0 0.0
  %2548 = vmatprep.subr.mxu0 0.0
  %2549 = vmatpush1.msra.mxu0 0.0
  %2550 = vmatprep.subr.mxu0 0.0
  %2551 = vmatpush1.msra.mxu0 0.0
  %2552 = vmatprep.subr.mxu0 0.0
  %2553 = vmatpush1.msra.mxu0 0.0
  %2554 = vmatprep.subr.mxu0 0.0
  %2555 = vmatpush1.msra.mxu0 0.0
  %2556 = vmatprep.subr.mxu0 0.0
  %2557 = vmatpush1.msra.mxu0 0.0
  %2558 = vmatprep.subr.mxu0 0.0
  %2559 = vmatpush1.msra.mxu0 0.0
  %2560 = vmatprep.mubr.f32.mxu0 0.0
  %2561 = vmatmul.mubr.f32.gmra.mrb[0].mxu0 %v2494
  %v2562 = vpop.f32.mrb[0].mxu0
  %v2563 = vadd.f32 %v706, %v2562
  %v2564 = vpop.f32.mrb[0].mxu0
  %2565 = vdwg.mxu0
  %v2566 = vtanh.pop %v2563
  %v2567 = vmul.f32 %v2566, 0.5
  %v2568 = vadd.f32 %v2567, 0.5
  %v2569 = vmul.f32 %v2568, %v2477
  %2571 = vrot.lane.b32.xlu0 %v2566, 64
  %v2572 = vpop.permute.xlu0 %2571
  %v2574 = vmul.f32 %v2568, %v2572
  %2576 = vrot.lane.b32.xlu0 %v2574, 32
  %v2577 = vpop.permute.xlu0 %2576
  %v2579 = vadd.f32 %v2569, %v2577
  %v2580 = vtanh.pop %v2579
  %2582 = vrot.lane.b32.xlu0 %v2580, 64
  %v2583 = vpop.permute.xlu0 %2582
  %v2585 = vmul.f32 %v2568, %v2583
  %v2586 = vld [vmem:[%s8] sm:$0xff]
  %v2587 = vld [vmem:[%s8 + $0x8] sm:$0xff]
  %v2588 = vld [vmem:[%s8 + $0x10] sm:$0xff]
  %v2589 = vld [vmem:[%s8 + $0x18] sm:$0xff]
  %v2590 = vld [vmem:[%s9] sm:$0x1]
  %v2592 = vlaneseq
  %v2593 = vshrl.u32 %v2592, 7
  %v2594 = vsub.s32 0, %v2593
  %v2595 = vrot.slane %v2590, %v2594
  %2598 = vrot.lane.b32.xlu0 %v2585, 32
  %v2599 = vpop.permute.xlu0 %2598
  %v2600 = vsel %vm210, %v2599, 0
  %2602 = vmatprep.subr.mxu0 0.0
  %2603 = vmatpush1.msra.mxu0 %v2586
  %2604 = vmatprep.subr.mxu0 0.0
  %2605 = vmatpush1.msra.mxu0 %v2587
  %2606 = vmatprep.subr.mxu0 0.0
  %2607 = vmatpush1.msra.mxu0 %v2588
  %2608 = vmatprep.subr.mxu0 0.0
  %2609 = vmatpush1.msra.mxu0 %v2589
  %2610 = vmatprep.subr.mxu0 0.0
  %2611 = vmatpush1.msra.mxu0 0.0
  %2612 = vmatprep.subr.mxu0 0.0
  %2613 = vmatpush1.msra.mxu0 0.0
  %2614 = vmatprep.subr.mxu0 0.0
  %2615 = vmatpush1.msra.mxu0 0.0
  %2616 = vmatprep.subr.mxu0 0.0
  %2617 = vmatpush1.msra.mxu0 0.0
  %2618 = vmatprep.subr.mxu0 0.0
  %2619 = vmatpush1.msra.mxu0 0.0
  %2620 = vmatprep.subr.mxu0 0.0
  %2621 = vmatpush1.msra.mxu0 0.0
  %2622 = vmatprep.subr.mxu0 0.0
  %2623 = vmatpush1.msra.mxu0 0.0
  %2624 = vmatprep.subr.mxu0 0.0
  %2625 = vmatpush1.msra.mxu0 0.0
  %2626 = vmatprep.subr.mxu0 0.0
  %2627 = vmatpush1.msra.mxu0 0.0
  %2628 = vmatprep.subr.mxu0 0.0
  %2629 = vmatpush1.msra.mxu0 0.0
  %2630 = vmatprep.subr.mxu0 0.0
  %2631 = vmatpush1.msra.mxu0 0.0
  %2632 = vmatprep.subr.mxu0 0.0
  %2633 = vmatpush1.msra.mxu0 0.0
  %2634 = vmatprep.subr.mxu0 0.0
  %2635 = vmatpush1.msra.mxu0 0.0
  %2636 = vmatprep.subr.mxu0 0.0
  %2637 = vmatpush1.msra.mxu0 0.0
  %2638 = vmatprep.subr.mxu0 0.0
  %2639 = vmatpush1.msra.mxu0 0.0
  %2640 = vmatprep.subr.mxu0 0.0
  %2641 = vmatpush1.msra.mxu0 0.0
  %2642 = vmatprep.subr.mxu0 0.0
  %2643 = vmatpush1.msra.mxu0 0.0
  %2644 = vmatprep.subr.mxu0 0.0
  %2645 = vmatpush1.msra.mxu0 0.0
  %2646 = vmatprep.subr.mxu0 0.0
  %2647 = vmatpush1.msra.mxu0 0.0
  %2648 = vmatprep.subr.mxu0 0.0
  %2649 = vmatpush1.msra.mxu0 0.0
  %2650 = vmatprep.subr.mxu0 0.0
  %2651 = vmatpush1.msra.mxu0 0.0
  %2652 = vmatprep.subr.mxu0 0.0
  %2653 = vmatpush1.msra.mxu0 0.0
  %2654 = vmatprep.subr.mxu0 0.0
  %2655 = vmatpush1.msra.mxu0 0.0
  %2656 = vmatprep.subr.mxu0 0.0
  %2657 = vmatpush1.msra.mxu0 0.0
  %2658 = vmatprep.subr.mxu0 0.0
  %2659 = vmatpush1.msra.mxu0 0.0
  %2660 = vmatprep.subr.mxu0 0.0
  %2661 = vmatpush1.msra.mxu0 0.0
  %2662 = vmatprep.subr.mxu0 0.0
  %2663 = vmatpush1.msra.mxu0 0.0
  %2664 = vmatprep.subr.mxu0 0.0
  %2665 = vmatpush1.msra.mxu0 0.0
  %2666 = vmatprep.mubr.f32.mxu0 0.0
  %2667 = vmatmul.mubr.f32.gmra.mrb[0].mxu0 %v2600
  %v2668 = vpop.f32.mrb[0].mxu0
  %v2669 = vadd.f32 %v2595, %v2668
  %v2670 = vpop.f32.mrb[0].mxu0
  %2671 = vdwg.mxu0
  %v2672 = vmax.f32 %v2669, 0.0
  %v2673 = vld [vmem:[%s10] sm:$0xff]
  %v2674 = vld [vmem:[%s10 + $0x8] sm:$0xff]
  %v2675 = vld [vmem:[%s11] sm:$0x1]
  %v2677 = vlaneseq
  %v2678 = vshrl.u32 %v2677, 7
  %v2679 = vsub.s32 0, %v2678
  %v2680 = vrot.slane %v2675, %v2679
  %v2683 = vsel %vm58, %v2672, 0
  %2685 = vmatprep.subr.mxu0 0.0
  %2686 = vmatpush1.msra.mxu0 %v2673
  %2687 = vmatprep.subr.mxu0 0.0
  %2688 = vmatpush1.msra.mxu0 %v2674
  %2689 = vmatprep.subr.mxu0 0.0
  %2690 = vmatpush1.msra.mxu0 0.0
  %2691 = vmatprep.subr.mxu0 0.0
  %2692 = vmatpush1.msra.mxu0 0.0
  %2693 = vmatprep.subr.mxu0 0.0
  %2694 = vmatpush1.msra.mxu0 0.0
  %2695 = vmatprep.subr.mxu0 0.0
  %2696 = vmatpush1.msra.mxu0 0.0
  %2697 = vmatprep.subr.mxu0 0.0
  %2698 = vmatpush1.msra.mxu0 0.0
  %2699 = vmatprep.subr.mxu0 0.0
  %2700 = vmatpush1.msra.mxu0 0.0
  %2701 = vmatprep.subr.mxu0 0.0
  %2702 = vmatpush1.msra.mxu0 0.0
  %2703 = vmatprep.subr.mxu0 0.0
  %2704 = vmatpush1.msra.mxu0 0.0
  %2705 = vmatprep.subr.mxu0 0.0
  %2706 = vmatpush1.msra.mxu0 0.0
  %2707 = vmatprep.subr.mxu0 0.0
  %2708 = vmatpush1.msra.mxu0 0.0
  %2709 = vmatprep.subr.mxu0 0.0
  %2710 = vmatpush1.msra.mxu0 0.0
  %2711 = vmatprep.subr.mxu0 0.0
  %2712 = vmatpush1.msra.mxu0 0.0
  %2713 = vmatprep.subr.mxu0 0.0
  %2714 = vmatpush1.msra.mxu0 0.0
  %2715 = vmatprep.subr.mxu0 0.0
  %2716 = vmatpush1.msra.mxu0 0.0
  %2717 = vmatprep.subr.mxu0 0.0
  %2718 = vmatpush1.msra.mxu0 0.0
  %2719 = vmatprep.subr.mxu0 0.0
  %2720 = vmatpush1.msra.mxu0 0.0
  %2721 = vmatprep.subr.mxu0 0.0
  %2722 = vmatpush1.msra.mxu0 0.0
  %2723 = vmatprep.subr.mxu0 0.0
  %2724 = vmatpush1.msra.mxu0 0.0
  %2725 = vmatprep.subr.mxu0 0.0
  %2726 = vmatpush1.msra.mxu0 0.0
  %2727 = vmatprep.subr.mxu0 0.0
  %2728 = vmatpush1.msra.mxu0 0.0
  %2729 = vmatprep.subr.mxu0 0.0
  %2730 = vmatpush1.msra.mxu0 0.0
  %2731 = vmatprep.subr.mxu0 0.0
  %2732 = vmatpush1.msra.mxu0 0.0
  %2733 = vmatprep.subr.mxu0 0.0
  %2734 = vmatpush1.msra.mxu0 0.0
  %2735 = vmatprep.subr.mxu0 0.0
  %2736 = vmatpush1.msra.mxu0 0.0
  %2737 = vmatprep.subr.mxu0 0.0
  %2738 = vmatpush1.msra.mxu0 0.0
  %2739 = vmatprep.subr.mxu0 0.0
  %2740 = vmatpush1.msra.mxu0 0.0
  %2741 = vmatprep.subr.mxu0 0.0
  %2742 = vmatpush1.msra.mxu0 0.0
  %2743 = vmatprep.subr.mxu0 0.0
  %2744 = vmatpush1.msra.mxu0 0.0
  %2745 = vmatprep.subr.mxu0 0.0
  %2746 = vmatpush1.msra.mxu0 0.0
  %2747 = vmatprep.subr.mxu0 0.0
  %2748 = vmatpush1.msra.mxu0 0.0
  %2749 = vmatprep.mubr.f32.mxu0 0.0
  %2750 = vmatmul.mubr.f32.gmra.mrb[0].mxu0 %v2683
  %v2751 = vpop.f32.mrb[0].mxu0
  %v2752 = vadd.f32 %v2680, %v2751
  %v2753 = vpop.f32.mrb[0].mxu0
  %2754 = vdwg.mxu0
  %vm2755 = vcmask 39936
  %2756 = vst.msk [vmem:[%s12] sm:$0xff] %vm2755, %v2752
  // Predicated region
  $region50: #{lstm_model_forward.1} parent=0 // pred_check
    _
  $region51: #{lstm_model_forward.1} parent=0 // pred_check_branch
    %2758 = sbr.rel (0) target = $region53
  $region52: #{lstm_model_forward.1} parent=0 // pred_region
    _
  $region53: #{lstm_model_forward.1} parent=0 // pred_fallthru
    _
  // Predicated region
  $region54: #{lstm_model_forward.1} parent=0 // pred_check
    _
  $region55: #{lstm_model_forward.1} parent=0 // pred_check_branch
    %2760 = sbr.rel (0) target = $region57
  $region56: #{lstm_model_forward.1} parent=0 // pred_region
    _
  $region57: #{lstm_model_forward.1} parent=0 // pred_fallthru
    _

</llo_original>
